<compile_context>
chip_gen: v7x
topology: tpu7x:2x2x1
jax: 0.10.0
libtpu: 0.0.40
codegen_flags: <defaults>
</compile_context>

<pallas_src>
import jax
import jax.numpy as jnp
from jax.experimental import pallas as pl
from jax.experimental.pallas import tpu as pltpu

LAYERS = (256, 512, 768, 512, 256, 128, 64)
LANE = 128
SUBLANE = 8
TM_MAX = 256          # batch tile for large M


def _round_up(a, b):
    return ((a + b - 1) // b) * b


# ---------------------------------------------------------------------------
# Fused whole-network kernel.
#   refs = (w0, b0, w1, b1, ..., w7, b7, o_ref)
#   w_i : [K_i_pad, N_i_pad] bf16 (BN scale folded in), b_i : [1, N_i_pad] f32
# ---------------------------------------------------------------------------
def _net_kernel(x_ref, *refs):
    o_ref = refs[-1]
    wb = refs[:-1]
    n_layers = len(wb) // 2

    h = x_ref[...].astype(jnp.bfloat16)
    for i in range(n_layers):                       # static unroll (8 layers)
        w_ref = wb[2 * i]
        b_ref = wb[2 * i + 1]
        y = jnp.dot(h, w_ref[...], preferred_element_type=jnp.float32)
        y = y + b_ref[...]
        if i < n_layers - 1:
            y = jnp.maximum(y, 0.1 * y)             # LeakyReLU(0.1)
            h = y.astype(jnp.bfloat16)
        else:
            h = y                                   # final Linear: no BN/act
    o_ref[...] = h.astype(o_ref.dtype)


def net_forward(x, params, output_dim):
    """Fused forward pass. x:[M, input_dim] f32. Returns [M, output_dim] f32."""
    M, K0 = x.shape
    k0_pad = params[0][0].shape[0]                  # input dim padded to 128
    n_out_pad = params[-1][0].shape[1]              # output dim padded to 128

    # Lane-dense input: pad feature dim to the padded weight K.
    if k0_pad != K0:
        x = jnp.pad(x, ((0, 0), (0, k0_pad - K0)))

    # Pad batch so the block shape satisfies the (8,128) tiling rule and,
    # for large batches, shard M across the grid (parallel -> both TCs).
    if M <= TM_MAX:
        m_pad = _round_up(M, SUBLANE)
        tm = m_pad
    else:
        m_pad = _round_up(M, TM_MAX)
        tm = TM_MAX
    if m_pad != M:
        x = jnp.pad(x, ((0, m_pad - M), (0, 0)))
    grid = (m_pad // tm,)

    in_specs = [pl.BlockSpec((tm, k0_pad), lambda i: (i, 0))]
    flat_params = []
    for (w, b) in params:
        # Full-extent, grid-invariant blocks: weights stay resident in VMEM.
        in_specs.append(pl.BlockSpec(w.shape, lambda i: (0, 0)))
        in_specs.append(pl.BlockSpec(b.shape, lambda i: (0, 0)))
        flat_params.append(w)
        flat_params.append(b)

    out = pl.pallas_call(
        _net_kernel,
        out_shape=jax.ShapeDtypeStruct((m_pad, n_out_pad), jnp.float32),
        grid_spec=pltpu.PrefetchScalarGridSpec(
            num_scalar_prefetch=0,
            grid=grid,
            in_specs=in_specs,
            out_specs=pl.BlockSpec((tm, n_out_pad), lambda i: (i, 0)),
        ),
        compiler_params=pltpu.CompilerParams(
            dimension_semantics=("parallel",),
            vmem_limit_bytes=64 << 20),
    )(x, *flat_params)

    return out[:M, :output_dim]


# ---------------------------------------------------------------------------
# Parameter construction (deterministic, mirrors Net.__init__ / _weight_init).
# Returns a list of (w [K_pad, N_pad] bf16, b [1, N_pad] f32); BN folded,
# all dims padded to lane multiples (zero padding => exact no-op numerically).
# ---------------------------------------------------------------------------
def init_net_params(key, input_dim, output_dim, layers=LAYERS):
    dims = [input_dim] + list(layers) + [output_dim]
    a = 0.1
    gain = (2.0 / (1.0 + a * a)) ** 0.5             # kaiming gain, leaky_relu
    eps = 1e-5
    bn_scale = 1.0 / ((1.0 + eps) ** 0.5)           # gamma/sqrt(running_var+eps)

    params = []
    n_layers = len(dims) - 1
    for li in range(n_layers):
        fan_in, fan_out = dims[li], dims[li + 1]
        k_pad = _round_up(fan_in, LANE)
        n_pad = _round_up(fan_out, LANE)

        key, wk, bk = jax.random.split(key, 3)
        std = gain / (fan_in ** 0.5)                # kaiming_normal_, fan_in
        w = (jax.random.normal(wk, (fan_out, fan_in), jnp.float32) * std).T
        bound = 1.0 / (fan_in ** 0.5)               # default nn.Linear bias init
        b = jax.random.uniform(bk, (fan_out,), jnp.float32, -bound, bound)

        if li < n_layers - 1:                       # hidden block: fold BN
            w = w * bn_scale
            b = b * bn_scale

        w_p = jnp.zeros((k_pad, n_pad), jnp.float32).at[:fan_in, :fan_out].set(w)
        b_p = jnp.zeros((1, n_pad), jnp.float32).at[0, :fan_out].set(b)
        params.append((w_p.astype(jnp.bfloat16), b_p))
    return params


# ---------------------------------------------------------------------------
# Pure-JAX reference with identical bf16 quantization and padding.
# ---------------------------------------------------------------------------
def net_forward_ref(x, params, output_dim):
    M, K0 = x.shape
    k0_pad = params[0][0].shape[0]
    if k0_pad != K0:
        x = jnp.pad(x, ((0, 0), (0, k0_pad - K0)))
    h = x
    n = len(params)
    for i, (w, b) in enumerate(params):
        y = jnp.dot(h.astype(jnp.bfloat16), w,
                    preferred_element_type=jnp.float32) + b
        if i < n - 1:
            y = jnp.maximum(y, 0.1 * y)
        h = y
    return h[:, :output_dim]


if __name__ == "__main__":
    batch, input_dim, output_dim = 8, 16, 1
    key = jax.random.PRNGKey(0)
    pkey, xkey = jax.random.split(key)

    params = init_net_params(pkey, input_dim, output_dim)
    x = jax.random.normal(xkey, (batch, input_dim), jnp.float32)

    out = net_forward(x, params, output_dim)
    out = jax.block_until_ready(out)

    ref = net_forward_ref(x, params, output_dim)
    assert out.shape == (batch, output_dim)
    assert jnp.allclose(out, ref, atol=2e-2, rtol=2e-2)

    print("KERNEL_OK")
</pallas_src>

<mosaic_0001>
module attributes {stable_mosaic.version = 11 : i64} {
  func.func @_net_kernel(%arg0: i32, %arg1: memref<8x128xf32, #tpu.memory_space<vmem>>, %arg2: memref<128x256xbf16, #tpu.memory_space<vmem>>, %arg3: memref<1x256xf32, #tpu.memory_space<vmem>>, %arg4: memref<256x512xbf16, #tpu.memory_space<vmem>>, %arg5: memref<1x512xf32, #tpu.memory_space<vmem>>, %arg6: memref<512x768xbf16, #tpu.memory_space<vmem>>, %arg7: memref<1x768xf32, #tpu.memory_space<vmem>>, %arg8: memref<768x512xbf16, #tpu.memory_space<vmem>>, %arg9: memref<1x512xf32, #tpu.memory_space<vmem>>, %arg10: memref<512x256xbf16, #tpu.memory_space<vmem>>, %arg11: memref<1x256xf32, #tpu.memory_space<vmem>>, %arg12: memref<256x128xbf16, #tpu.memory_space<vmem>>, %arg13: memref<1x128xf32, #tpu.memory_space<vmem>>, %arg14: memref<128x128xbf16, #tpu.memory_space<vmem>>, %arg15: memref<1x128xf32, #tpu.memory_space<vmem>>, %arg16: memref<128x128xbf16, #tpu.memory_space<vmem>>, %arg17: memref<1x128xf32, #tpu.memory_space<vmem>>, %arg18: memref<8x128xf32, #tpu.memory_space<vmem>>) attributes {dimension_semantics = [#tpu.dimension_semantics<parallel>], iteration_bounds = array<i64: 1>, scalar_prefetch = 0 : i64, scratch_operands = 0 : i64, tpu.core_type = #tpu.core_type<tc>, window_params = [{transform_indices = @transform_0, window_bounds = array<i64: 8, 128>}, {pipeline_mode = #tpu.pipeline_mode<synchronous>, transform_indices = @transform_1, window_bounds = array<i64: 128, 256>}, {pipeline_mode = #tpu.pipeline_mode<synchronous>, transform_indices = @transform_2, window_bounds = array<i64: 1, 256>}, {pipeline_mode = #tpu.pipeline_mode<synchronous>, transform_indices = @transform_3, window_bounds = array<i64: 256, 512>}, {pipeline_mode = #tpu.pipeline_mode<synchronous>, transform_indices = @transform_4, window_bounds = array<i64: 1, 512>}, {pipeline_mode = #tpu.pipeline_mode<synchronous>, transform_indices = @transform_5, window_bounds = array<i64: 512, 768>}, {pipeline_mode = #tpu.pipeline_mode<synchronous>, transform_indices = @transform_6, window_bounds = array<i64: 1, 768>}, {pipeline_mode = #tpu.pipeline_mode<synchronous>, transform_indices = @transform_7, window_bounds = array<i64: 768, 512>}, {pipeline_mode = #tpu.pipeline_mode<synchronous>, transform_indices = @transform_8, window_bounds = array<i64: 1, 512>}, {pipeline_mode = #tpu.pipeline_mode<synchronous>, transform_indices = @transform_9, window_bounds = array<i64: 512, 256>}, {pipeline_mode = #tpu.pipeline_mode<synchronous>, transform_indices = @transform_10, window_bounds = array<i64: 1, 256>}, {pipeline_mode = #tpu.pipeline_mode<synchronous>, transform_indices = @transform_11, window_bounds = array<i64: 256, 128>}, {pipeline_mode = #tpu.pipeline_mode<synchronous>, transform_indices = @transform_12, window_bounds = array<i64: 1, 128>}, {pipeline_mode = #tpu.pipeline_mode<synchronous>, transform_indices = @transform_13, window_bounds = array<i64: 128, 128>}, {pipeline_mode = #tpu.pipeline_mode<synchronous>, transform_indices = @transform_14, window_bounds = array<i64: 1, 128>}, {pipeline_mode = #tpu.pipeline_mode<synchronous>, transform_indices = @transform_15, window_bounds = array<i64: 128, 128>}, {pipeline_mode = #tpu.pipeline_mode<synchronous>, transform_indices = @transform_16, window_bounds = array<i64: 1, 128>}, {transform_indices = @transform_17, window_bounds = array<i64: 8, 128>}]} {
    %c0 = arith.constant 0 : index
    %c0_0 = arith.constant 0 : index
    %0 = vector.load %arg1[%c0, %c0_0] : memref<8x128xf32, #tpu.memory_space<vmem>>, vector<8x128xf32>
    %1 = arith.truncf %0 : vector<8x128xf32> to vector<8x128xbf16>
    %c0_1 = arith.constant 0 : index
    %c0_2 = arith.constant 0 : index
    %2 = vector.load %arg2[%c0_1, %c0_2] : memref<128x256xbf16, #tpu.memory_space<vmem>>, vector<128x256xbf16>
    %cst = arith.constant dense<0.000000e+00> : vector<8x256xf32>
    %3 = tpu.matmul %1, %2, %cst {dimension_numbers = #tpu.dot_dimension_numbers<[1], [0], [0], [1], [0, 0, 1, 1], [], []>} : vector<8x128xbf16>, vector<128x256xbf16>, vector<8x256xf32> -> vector<8x256xf32>
    %c0_3 = arith.constant 0 : index
    %c0_4 = arith.constant 0 : index
    %4 = vector.load %arg3[%c0_3, %c0_4] : memref<1x256xf32, #tpu.memory_space<vmem>>, vector<1x256xf32>
    %5 = vector.broadcast %4 : vector<1x256xf32> to vector<8x256xf32>
    %6 = arith.addf %3, %5 : vector<8x256xf32>
    %cst_5 = arith.constant 1.000000e-01 : f32
    %7 = vector.broadcast %cst_5 : f32 to vector<8x256xf32>
    %8 = arith.mulf %7, %6 : vector<8x256xf32>
    %9 = arith.maximumf %6, %8 : vector<8x256xf32>
    %10 = arith.truncf %9 : vector<8x256xf32> to vector<8x256xbf16>
    %c0_6 = arith.constant 0 : index
    %c0_7 = arith.constant 0 : index
    %11 = vector.load %arg4[%c0_6, %c0_7] : memref<256x512xbf16, #tpu.memory_space<vmem>>, vector<256x512xbf16>
    %cst_8 = arith.constant dense<0.000000e+00> : vector<8x512xf32>
    %12 = tpu.matmul %10, %11, %cst_8 {dimension_numbers = #tpu.dot_dimension_numbers<[1], [0], [0], [1], [0, 0, 1, 1], [], []>} : vector<8x256xbf16>, vector<256x512xbf16>, vector<8x512xf32> -> vector<8x512xf32>
    %c0_9 = arith.constant 0 : index
    %c0_10 = arith.constant 0 : index
    %13 = vector.load %arg5[%c0_9, %c0_10] : memref<1x512xf32, #tpu.memory_space<vmem>>, vector<1x512xf32>
    %14 = vector.broadcast %13 : vector<1x512xf32> to vector<8x512xf32>
    %15 = arith.addf %12, %14 : vector<8x512xf32>
    %cst_11 = arith.constant 1.000000e-01 : f32
    %16 = vector.broadcast %cst_11 : f32 to vector<8x512xf32>
    %17 = arith.mulf %16, %15 : vector<8x512xf32>
    %18 = arith.maximumf %15, %17 : vector<8x512xf32>
    %19 = arith.truncf %18 : vector<8x512xf32> to vector<8x512xbf16>
    %c0_12 = arith.constant 0 : index
    %c0_13 = arith.constant 0 : index
    %20 = vector.load %arg6[%c0_12, %c0_13] : memref<512x768xbf16, #tpu.memory_space<vmem>>, vector<512x768xbf16>
    %cst_14 = arith.constant dense<0.000000e+00> : vector<8x768xf32>
    %21 = tpu.matmul %19, %20, %cst_14 {dimension_numbers = #tpu.dot_dimension_numbers<[1], [0], [0], [1], [0, 0, 1, 1], [], []>} : vector<8x512xbf16>, vector<512x768xbf16>, vector<8x768xf32> -> vector<8x768xf32>
    %c0_15 = arith.constant 0 : index
    %c0_16 = arith.constant 0 : index
    %22 = vector.load %arg7[%c0_15, %c0_16] : memref<1x768xf32, #tpu.memory_space<vmem>>, vector<1x768xf32>
    %23 = vector.broadcast %22 : vector<1x768xf32> to vector<8x768xf32>
    %24 = arith.addf %21, %23 : vector<8x768xf32>
    %cst_17 = arith.constant 1.000000e-01 : f32
    %25 = vector.broadcast %cst_17 : f32 to vector<8x768xf32>
    %26 = arith.mulf %25, %24 : vector<8x768xf32>
    %27 = arith.maximumf %24, %26 : vector<8x768xf32>
    %28 = arith.truncf %27 : vector<8x768xf32> to vector<8x768xbf16>
    %c0_18 = arith.constant 0 : index
    %c0_19 = arith.constant 0 : index
    %29 = vector.load %arg8[%c0_18, %c0_19] : memref<768x512xbf16, #tpu.memory_space<vmem>>, vector<768x512xbf16>
    %cst_20 = arith.constant dense<0.000000e+00> : vector<8x512xf32>
    %30 = tpu.matmul %28, %29, %cst_20 {dimension_numbers = #tpu.dot_dimension_numbers<[1], [0], [0], [1], [0, 0, 1, 1], [], []>} : vector<8x768xbf16>, vector<768x512xbf16>, vector<8x512xf32> -> vector<8x512xf32>
    %c0_21 = arith.constant 0 : index
    %c0_22 = arith.constant 0 : index
    %31 = vector.load %arg9[%c0_21, %c0_22] : memref<1x512xf32, #tpu.memory_space<vmem>>, vector<1x512xf32>
    %32 = vector.broadcast %31 : vector<1x512xf32> to vector<8x512xf32>
    %33 = arith.addf %30, %32 : vector<8x512xf32>
    %cst_23 = arith.constant 1.000000e-01 : f32
    %34 = vector.broadcast %cst_23 : f32 to vector<8x512xf32>
    %35 = arith.mulf %34, %33 : vector<8x512xf32>
    %36 = arith.maximumf %33, %35 : vector<8x512xf32>
    %37 = arith.truncf %36 : vector<8x512xf32> to vector<8x512xbf16>
    %c0_24 = arith.constant 0 : index
    %c0_25 = arith.constant 0 : index
    %38 = vector.load %arg10[%c0_24, %c0_25] : memref<512x256xbf16, #tpu.memory_space<vmem>>, vector<512x256xbf16>
    %cst_26 = arith.constant dense<0.000000e+00> : vector<8x256xf32>
    %39 = tpu.matmul %37, %38, %cst_26 {dimension_numbers = #tpu.dot_dimension_numbers<[1], [0], [0], [1], [0, 0, 1, 1], [], []>} : vector<8x512xbf16>, vector<512x256xbf16>, vector<8x256xf32> -> vector<8x256xf32>
    %c0_27 = arith.constant 0 : index
    %c0_28 = arith.constant 0 : index
    %40 = vector.load %arg11[%c0_27, %c0_28] : memref<1x256xf32, #tpu.memory_space<vmem>>, vector<1x256xf32>
    %41 = vector.broadcast %40 : vector<1x256xf32> to vector<8x256xf32>
    %42 = arith.addf %39, %41 : vector<8x256xf32>
    %cst_29 = arith.constant 1.000000e-01 : f32
    %43 = vector.broadcast %cst_29 : f32 to vector<8x256xf32>
    %44 = arith.mulf %43, %42 : vector<8x256xf32>
    %45 = arith.maximumf %42, %44 : vector<8x256xf32>
    %46 = arith.truncf %45 : vector<8x256xf32> to vector<8x256xbf16>
    %c0_30 = arith.constant 0 : index
    %c0_31 = arith.constant 0 : index
    %47 = vector.load %arg12[%c0_30, %c0_31] : memref<256x128xbf16, #tpu.memory_space<vmem>>, vector<256x128xbf16>
    %cst_32 = arith.constant dense<0.000000e+00> : vector<8x128xf32>
    %48 = tpu.matmul %46, %47, %cst_32 {dimension_numbers = #tpu.dot_dimension_numbers<[1], [0], [0], [1], [0, 0, 1, 1], [], []>} : vector<8x256xbf16>, vector<256x128xbf16>, vector<8x128xf32> -> vector<8x128xf32>
    %c0_33 = arith.constant 0 : index
    %c0_34 = arith.constant 0 : index
    %49 = vector.load %arg13[%c0_33, %c0_34] : memref<1x128xf32, #tpu.memory_space<vmem>>, vector<1x128xf32>
    %50 = vector.broadcast %49 : vector<1x128xf32> to vector<8x128xf32>
    %51 = arith.addf %48, %50 : vector<8x128xf32>
    %cst_35 = arith.constant 1.000000e-01 : f32
    %52 = vector.broadcast %cst_35 : f32 to vector<8x128xf32>
    %53 = arith.mulf %52, %51 : vector<8x128xf32>
    %54 = arith.maximumf %51, %53 : vector<8x128xf32>
    %55 = arith.truncf %54 : vector<8x128xf32> to vector<8x128xbf16>
    %c0_36 = arith.constant 0 : index
    %c0_37 = arith.constant 0 : index
    %56 = vector.load %arg14[%c0_36, %c0_37] : memref<128x128xbf16, #tpu.memory_space<vmem>>, vector<128x128xbf16>
    %cst_38 = arith.constant dense<0.000000e+00> : vector<8x128xf32>
    %57 = tpu.matmul %55, %56, %cst_38 {dimension_numbers = #tpu.dot_dimension_numbers<[1], [0], [0], [1], [0, 0, 1, 1], [], []>} : vector<8x128xbf16>, vector<128x128xbf16>, vector<8x128xf32> -> vector<8x128xf32>
    %c0_39 = arith.constant 0 : index
    %c0_40 = arith.constant 0 : index
    %58 = vector.load %arg15[%c0_39, %c0_40] : memref<1x128xf32, #tpu.memory_space<vmem>>, vector<1x128xf32>
    %59 = vector.broadcast %58 : vector<1x128xf32> to vector<8x128xf32>
    %60 = arith.addf %57, %59 : vector<8x128xf32>
    %cst_41 = arith.constant 1.000000e-01 : f32
    %61 = vector.broadcast %cst_41 : f32 to vector<8x128xf32>
    %62 = arith.mulf %61, %60 : vector<8x128xf32>
    %63 = arith.maximumf %60, %62 : vector<8x128xf32>
    %64 = arith.truncf %63 : vector<8x128xf32> to vector<8x128xbf16>
    %c0_42 = arith.constant 0 : index
    %c0_43 = arith.constant 0 : index
    %65 = vector.load %arg16[%c0_42, %c0_43] : memref<128x128xbf16, #tpu.memory_space<vmem>>, vector<128x128xbf16>
    %cst_44 = arith.constant dense<0.000000e+00> : vector<8x128xf32>
    %66 = tpu.matmul %64, %65, %cst_44 {dimension_numbers = #tpu.dot_dimension_numbers<[1], [0], [0], [1], [0, 0, 1, 1], [], []>} : vector<8x128xbf16>, vector<128x128xbf16>, vector<8x128xf32> -> vector<8x128xf32>
    %c0_45 = arith.constant 0 : index
    %c0_46 = arith.constant 0 : index
    %67 = vector.load %arg17[%c0_45, %c0_46] : memref<1x128xf32, #tpu.memory_space<vmem>>, vector<1x128xf32>
    %68 = vector.broadcast %67 : vector<1x128xf32> to vector<8x128xf32>
    %69 = arith.addf %66, %68 : vector<8x128xf32>
    %c0_47 = arith.constant 0 : index
    %c0_48 = arith.constant 0 : index
    %70 = vector.load %arg18[%c0_47, %c0_48] : memref<8x128xf32, #tpu.memory_space<vmem>>, vector<8x128xf32>
    tpu.vector_store %arg18[%c0_47, %c0_48], %69 {strides = array<i32>} : memref<8x128xf32, #tpu.memory_space<vmem>>, vector<8x128xf32>,
    return
  }
  func.func @transform_0(%arg0: i32) -> (i32, i32) {
    %c0_i32 = arith.constant 0 : i32
    %c0_i32_0 = arith.constant 0 : i32
    return %arg0, %c0_i32 : i32, i32
  }
  func.func @transform_1(%arg0: i32) -> (i32, i32) {
    %c0_i32 = arith.constant 0 : i32
    %c0_i32_0 = arith.constant 0 : i32
    %c0_i32_1 = arith.constant 0 : i32
    return %c0_i32, %c0_i32_0 : i32, i32
  }
  func.func @transform_2(%arg0: i32) -> (i32, i32) {
    %c0_i32 = arith.constant 0 : i32
    %c0_i32_0 = arith.constant 0 : i32
    %c0_i32_1 = arith.constant 0 : i32
    return %c0_i32, %c0_i32_0 : i32, i32
  }
  func.func @transform_3(%arg0: i32) -> (i32, i32) {
    %c0_i32 = arith.constant 0 : i32
    %c0_i32_0 = arith.constant 0 : i32
    %c0_i32_1 = arith.constant 0 : i32
    return %c0_i32, %c0_i32_0 : i32, i32
  }
  func.func @transform_4(%arg0: i32) -> (i32, i32) {
    %c0_i32 = arith.constant 0 : i32
    %c0_i32_0 = arith.constant 0 : i32
    %c0_i32_1 = arith.constant 0 : i32
    return %c0_i32, %c0_i32_0 : i32, i32
  }
  func.func @transform_5(%arg0: i32) -> (i32, i32) {
    %c0_i32 = arith.constant 0 : i32
    %c0_i32_0 = arith.constant 0 : i32
    %c0_i32_1 = arith.constant 0 : i32
    return %c0_i32, %c0_i32_0 : i32, i32
  }
  func.func @transform_6(%arg0: i32) -> (i32, i32) {
    %c0_i32 = arith.constant 0 : i32
    %c0_i32_0 = arith.constant 0 : i32
    %c0_i32_1 = arith.constant 0 : i32
    return %c0_i32, %c0_i32_0 : i32, i32
  }
  func.func @transform_7(%arg0: i32) -> (i32, i32) {
    %c0_i32 = arith.constant 0 : i32
    %c0_i32_0 = arith.constant 0 : i32
    %c0_i32_1 = arith.constant 0 : i32
    return %c0_i32, %c0_i32_0 : i32, i32
  }
  func.func @transform_8(%arg0: i32) -> (i32, i32) {
    %c0_i32 = arith.constant 0 : i32
    %c0_i32_0 = arith.constant 0 : i32
    %c0_i32_1 = arith.constant 0 : i32
    return %c0_i32, %c0_i32_0 : i32, i32
  }
  func.func @transform_9(%arg0: i32) -> (i32, i32) {
    %c0_i32 = arith.constant 0 : i32
    %c0_i32_0 = arith.constant 0 : i32
    %c0_i32_1 = arith.constant 0 : i32
    return %c0_i32, %c0_i32_0 : i32, i32
  }
  func.func @transform_10(%arg0: i32) -> (i32, i32) {
    %c0_i32 = arith.constant 0 : i32
    %c0_i32_0 = arith.constant 0 : i32
    %c0_i32_1 = arith.constant 0 : i32
    return %c0_i32, %c0_i32_0 : i32, i32
  }
  func.func @transform_11(%arg0: i32) -> (i32, i32) {
    %c0_i32 = arith.constant 0 : i32
    %c0_i32_0 = arith.constant 0 : i32
    %c0_i32_1 = arith.constant 0 : i32
    return %c0_i32, %c0_i32_0 : i32, i32
  }
  func.func @transform_12(%arg0: i32) -> (i32, i32) {
    %c0_i32 = arith.constant 0 : i32
    %c0_i32_0 = arith.constant 0 : i32
    %c0_i32_1 = arith.constant 0 : i32
    return %c0_i32, %c0_i32_0 : i32, i32
  }
  func.func @transform_13(%arg0: i32) -> (i32, i32) {
    %c0_i32 = arith.constant 0 : i32
    %c0_i32_0 = arith.constant 0 : i32
    %c0_i32_1 = arith.constant 0 : i32
    return %c0_i32, %c0_i32_0 : i32, i32
  }
  func.func @transform_14(%arg0: i32) -> (i32, i32) {
    %c0_i32 = arith.constant 0 : i32
    %c0_i32_0 = arith.constant 0 : i32
    %c0_i32_1 = arith.constant 0 : i32
    return %c0_i32, %c0_i32_0 : i32, i32
  }
  func.func @transform_15(%arg0: i32) -> (i32, i32) {
    %c0_i32 = arith.constant 0 : i32
    %c0_i32_0 = arith.constant 0 : i32
    %c0_i32_1 = arith.constant 0 : i32
    return %c0_i32, %c0_i32_0 : i32, i32
  }
  func.func @transform_16(%arg0: i32) -> (i32, i32) {
    %c0_i32 = arith.constant 0 : i32
    %c0_i32_0 = arith.constant 0 : i32
    %c0_i32_1 = arith.constant 0 : i32
    return %c0_i32, %c0_i32_0 : i32, i32
  }
  func.func @transform_17(%arg0: i32) -> (i32, i32) {
    %c0_i32 = arith.constant 0 : i32
    %c0_i32_0 = arith.constant 0 : i32
    return %arg0, %c0_i32 : i32, i32
  }
}

</mosaic_0001>

<llo_original>
// kernel: tpu_custom_call.1
$region0: #{tpu_custom_call.1}
  #allocation0 [shape = 'u32[]', space=smem, size = 0x4, offset = 0x4, fixed_abs, tag = 'smem constant byte address 0x4 - core index']
  #allocation1 [shape = 'u32[144,128]{1,0:T(1,128)}', space=vmem, size = 0x12000, scoped, tag = 'internal scratch']
  %s0 = inlined_call_operand.hbm [shape: f32[8,128], index: 0, kind: input, shape index: {}]
  %s1 = inlined_call_operand.hbm [shape: bf16[128,256], index: 1, kind: input, shape index: {}]
  %s2 = inlined_call_operand.hbm [shape: f32[1,256], index: 2, kind: input, shape index: {}]
  %s3 = inlined_call_operand.hbm [shape: bf16[256,512], index: 3, kind: input, shape index: {}]
  %s4 = inlined_call_operand.hbm [shape: f32[1,512], index: 4, kind: input, shape index: {}]
  %s5 = inlined_call_operand.hbm [shape: bf16[512,768], index: 5, kind: input, shape index: {}]
  %s6 = inlined_call_operand.hbm [shape: f32[1,768], index: 6, kind: input, shape index: {}]
  %s7 = inlined_call_operand.hbm [shape: bf16[768,512], index: 7, kind: input, shape index: {}]
  %s8 = inlined_call_operand.hbm [shape: f32[1,512], index: 8, kind: input, shape index: {}]
  %s9 = inlined_call_operand.hbm [shape: bf16[512,256], index: 9, kind: input, shape index: {}]
  %s10 = inlined_call_operand.hbm [shape: f32[1,256], index: 10, kind: input, shape index: {}]
  %s11 = inlined_call_operand.hbm [shape: bf16[256,128], index: 11, kind: input, shape index: {}]
  %s12 = inlined_call_operand.hbm [shape: f32[1,128], index: 12, kind: input, shape index: {}]
  %s13 = inlined_call_operand.hbm [shape: bf16[128,128], index: 13, kind: input, shape index: {}]
  %s14 = inlined_call_operand.hbm [shape: f32[1,128], index: 14, kind: input, shape index: {}]
  %s15 = inlined_call_operand.hbm [shape: bf16[128,128], index: 15, kind: input, shape index: {}]
  %s16 = inlined_call_operand.hbm [shape: f32[1,128], index: 16, kind: input, shape index: {}]
  %s17 = inlined_call_operand.hbm [shape: f32[8,128], index: 17, kind: output, shape index: {}]
  %s18 = sld [smem:[#allocation0]]
  $region146: #{tpu_custom_call.1} parent=0
    _
  %s20 = ssub.s32 1, %s18
  %s21 = scalar_select 0, %s20, %s18
  $region1: #{tpu_custom_call.1} parent=0
    #allocation2 [shape = 'u8[4096]{0}', space=vmem, size = 0x1000, scoped, tag = 'input window, operand 0, single buffered']
    #allocation3 [shape = 's32[1]{0}', space=sflag, size = 0x4, scoped, tag = 'scoped memory for tpu_custom_call.1']
    #allocation4 [shape = 's32[1]{0}', space=sflag, size = 0x4, scoped, tag = 'scoped memory for tpu_custom_call.1']
    #allocation5 [shape = 'u8[65536]{0}', space=vmem, size = 0x10000, scoped, tag = 'input window, operand 1, single buffered']
    #allocation6 [shape = 's32[1]{0}', space=sflag, size = 0x4, scoped, tag = 'scoped memory for tpu_custom_call.1']
    #allocation7 [shape = 'u8[1024]{0}', space=vmem, size = 0x400, scoped, tag = 'input window, operand 2, single buffered']
    #allocation8 [shape = 'u8[262144]{0}', space=vmem, size = 0x40000, scoped, tag = 'input window, operand 3, single buffered']
    #allocation9 [shape = 's32[1]{0}', space=sflag, size = 0x4, scoped, tag = 'scoped memory for tpu_custom_call.1']
    #allocation10 [shape = 'u8[2048]{0}', space=vmem, size = 0x800, scoped, tag = 'input window, operand 4, single buffered']
    #allocation11 [shape = 'u8[786432]{0}', space=vmem, size = 0xc0000, scoped, tag = 'input window, operand 5, single buffered']
    #allocation12 [shape = 's32[1]{0}', space=sflag, size = 0x4, scoped, tag = 'scoped memory for tpu_custom_call.1']
    #allocation13 [shape = 'u8[3072]{0}', space=vmem, size = 0xc00, scoped, tag = 'input window, operand 6, single buffered']
    #allocation14 [shape = 'u8[786432]{0}', space=vmem, size = 0xc0000, scoped, tag = 'input window, operand 7, single buffered']
    #allocation15 [shape = 's32[1]{0}', space=sflag, size = 0x4, scoped, tag = 'scoped memory for tpu_custom_call.1']
    #allocation16 [shape = 'u8[2048]{0}', space=vmem, size = 0x800, scoped, tag = 'input window, operand 8, single buffered']
    #allocation17 [shape = 'u8[262144]{0}', space=vmem, size = 0x40000, scoped, tag = 'input window, operand 9, single buffered']
    #allocation18 [shape = 's32[1]{0}', space=sflag, size = 0x4, scoped, tag = 'scoped memory for tpu_custom_call.1']
    #allocation19 [shape = 'u8[1024]{0}', space=vmem, size = 0x400, scoped, tag = 'input window, operand 10, single buffered']
    #allocation20 [shape = 'u8[65536]{0}', space=vmem, size = 0x10000, scoped, tag = 'input window, operand 11, single buffered']
    #allocation21 [shape = 's32[1]{0}', space=sflag, size = 0x4, scoped, tag = 'scoped memory for tpu_custom_call.1']
    #allocation22 [shape = 'u8[512]{0}', space=vmem, size = 0x400, scoped, tag = 'input window, operand 12, single buffered']
    #allocation23 [shape = 'u8[32768]{0}', space=vmem, size = 0x8000, scoped, tag = 'input window, operand 13, single buffered']
    #allocation24 [shape = 's32[1]{0}', space=sflag, size = 0x4, scoped, tag = 'scoped memory for tpu_custom_call.1']
    #allocation25 [shape = 'u8[512]{0}', space=vmem, size = 0x400, scoped, tag = 'input window, operand 14, single buffered']
    #allocation26 [shape = 'u8[32768]{0}', space=vmem, size = 0x8000, scoped, tag = 'input window, operand 15, single buffered']
    #allocation27 [shape = 's32[1]{0}', space=sflag, size = 0x4, scoped, tag = 'scoped memory for tpu_custom_call.1']
    #allocation28 [shape = 'u8[512]{0}', space=vmem, size = 0x400, scoped, tag = 'input window, operand 16, single buffered']
    #allocation29 [shape = 'u8[4096]{0}', space=vmem, size = 0x1000, scoped, tag = 'output window, operand 0, single buffered']
    %22 = vsyncpa [#allocation3], 0
    %23 = vsyncpa [#allocation6], 0
    %24 = vsyncpa [#allocation9], 0
    %25 = vsyncpa [#allocation12], 0
    %26 = vsyncpa [#allocation15], 0
    %27 = vsyncpa [#allocation18], 0
    %28 = vsyncpa [#allocation21], 0
    %29 = vsyncpa [#allocation24], 0
    %30 = vsyncpa [#allocation27], 0
    %31 = vsyncpa [#allocation4], 0
    // Predicated region
    $region2: #{tpu_custom_call.1} parent=1 // pred_check
      _
    $region3: #{tpu_custom_call.1} parent=1 // pred_check_branch
      %33 = sbr.rel (0) target = $region5
    $region4: #{tpu_custom_call.1} parent=1 // pred_region
      %s35 = ssub.s32 128, 128
      %36 = vsyncadd [#allocation3], %s35
      %s38 = sshll.u32 [#allocation2], 4
      %s39 = int_to_ptr.vmem [resolvable:$true] %s38
      %41 = dma.hbm_to_vmem [thread:$0]  %s0, 128, %s39, [#allocation3]
    $region5: #{tpu_custom_call.1} parent=1 // pred_fallthru
      _
    // Predicated region
    $region6: #{tpu_custom_call.1} parent=1 // pred_check
      _
    $region7: #{tpu_custom_call.1} parent=1 // pred_check_branch
      %43 = sbr.rel (0) target = $region9
    $region8: #{tpu_custom_call.1} parent=1 // pred_region
      %s45 = ssub.s32 2048, 2048
      %46 = vsyncadd [#allocation6], %s45
      %s47 = sshll.u32 [#allocation5], 4
      %s48 = int_to_ptr.vmem [resolvable:$true] %s47
      %53 = dma.hbm_to_vmem [thread:$0]  %s1, 2048, %s48, [#allocation6], 128, 128, 8
    $region9: #{tpu_custom_call.1} parent=1 // pred_fallthru
      _
    // Predicated region
    $region10: #{tpu_custom_call.1} parent=1 // pred_check
      _
    $region11: #{tpu_custom_call.1} parent=1 // pred_check_branch
      %55 = sbr.rel (0) target = $region13
    $region12: #{tpu_custom_call.1} parent=1 // pred_region
      %s57 = ssub.s32 32, 32
      %58 = vsyncadd [#allocation6], %s57
      %s60 = sshll.u32 [#allocation7], 4
      %s61 = int_to_ptr.vmem [resolvable:$true] %s60
      %63 = dma.hbm_to_vmem [thread:$0]  %s2, 32, %s61, [#allocation6]
    $region13: #{tpu_custom_call.1} parent=1 // pred_fallthru
      _
    // Predicated region
    $region14: #{tpu_custom_call.1} parent=1 // pred_check
      _
    $region15: #{tpu_custom_call.1} parent=1 // pred_check_branch
      %65 = sbr.rel (0) target = $region17
    $region16: #{tpu_custom_call.1} parent=1 // pred_region
      %s67 = ssub.s32 8192, 8192
      %68 = vsyncadd [#allocation9], %s67
      %s69 = sshll.u32 [#allocation8], 4
      %s70 = int_to_ptr.vmem [resolvable:$true] %s69
      %75 = dma.hbm_to_vmem [thread:$0]  %s3, 8192, %s70, [#allocation9], 256, 256, 16
    $region17: #{tpu_custom_call.1} parent=1 // pred_fallthru
      _
    // Predicated region
    $region18: #{tpu_custom_call.1} parent=1 // pred_check
      _
    $region19: #{tpu_custom_call.1} parent=1 // pred_check_branch
      %77 = sbr.rel (0) target = $region21
    $region20: #{tpu_custom_call.1} parent=1 // pred_region
      %s79 = ssub.s32 64, 64
      %80 = vsyncadd [#allocation9], %s79
      %s82 = sshll.u32 [#allocation10], 4
      %s83 = int_to_ptr.vmem [resolvable:$true] %s82
      %85 = dma.hbm_to_vmem [thread:$0]  %s4, 64, %s83, [#allocation9]
    $region21: #{tpu_custom_call.1} parent=1 // pred_fallthru
      _
    // Predicated region
    $region22: #{tpu_custom_call.1} parent=1 // pred_check
      _
    $region23: #{tpu_custom_call.1} parent=1 // pred_check_branch
      %87 = sbr.rel (0) target = $region25
    $region24: #{tpu_custom_call.1} parent=1 // pred_region
      %s89 = ssub.s32 24576, 24576
      %90 = vsyncadd [#allocation12], %s89
      %s91 = sshll.u32 [#allocation11], 4
      %s92 = int_to_ptr.vmem [resolvable:$true] %s91
      %97 = dma.hbm_to_vmem [thread:$0]  %s5, 24576, %s92, [#allocation12], 384, 384, 24
    $region25: #{tpu_custom_call.1} parent=1 // pred_fallthru
      _
    // Predicated region
    $region26: #{tpu_custom_call.1} parent=1 // pred_check
      _
    $region27: #{tpu_custom_call.1} parent=1 // pred_check_branch
      %99 = sbr.rel (0) target = $region29
    $region28: #{tpu_custom_call.1} parent=1 // pred_region
      %s101 = ssub.s32 96, 96
      %102 = vsyncadd [#allocation12], %s101
      %s104 = sshll.u32 [#allocation13], 4
      %s105 = int_to_ptr.vmem [resolvable:$true] %s104
      %107 = dma.hbm_to_vmem [thread:$0]  %s6, 96, %s105, [#allocation12]
    $region29: #{tpu_custom_call.1} parent=1 // pred_fallthru
      _
    // Predicated region
    $region30: #{tpu_custom_call.1} parent=1 // pred_check
      _
    $region31: #{tpu_custom_call.1} parent=1 // pred_check_branch
      %109 = sbr.rel (0) target = $region33
    $region32: #{tpu_custom_call.1} parent=1 // pred_region
      %s111 = ssub.s32 24576, 24576
      %112 = vsyncadd [#allocation15], %s111
      %s113 = sshll.u32 [#allocation14], 4
      %s114 = int_to_ptr.vmem [resolvable:$true] %s113
      %119 = dma.hbm_to_vmem [thread:$0]  %s7, 24576, %s114, [#allocation15], 256, 256, 16
    $region33: #{tpu_custom_call.1} parent=1 // pred_fallthru
      _
    // Predicated region
    $region34: #{tpu_custom_call.1} parent=1 // pred_check
      _
    $region35: #{tpu_custom_call.1} parent=1 // pred_check_branch
      %121 = sbr.rel (0) target = $region37
    $region36: #{tpu_custom_call.1} parent=1 // pred_region
      %s123 = ssub.s32 64, 64
      %124 = vsyncadd [#allocation15], %s123
      %s126 = sshll.u32 [#allocation16], 4
      %s127 = int_to_ptr.vmem [resolvable:$true] %s126
      %129 = dma.hbm_to_vmem [thread:$0]  %s8, 64, %s127, [#allocation15]
    $region37: #{tpu_custom_call.1} parent=1 // pred_fallthru
      _
    // Predicated region
    $region38: #{tpu_custom_call.1} parent=1 // pred_check
      _
    $region39: #{tpu_custom_call.1} parent=1 // pred_check_branch
      %131 = sbr.rel (0) target = $region41
    $region40: #{tpu_custom_call.1} parent=1 // pred_region
      %s133 = ssub.s32 8192, 8192
      %134 = vsyncadd [#allocation18], %s133
      %s135 = sshll.u32 [#allocation17], 4
      %s136 = int_to_ptr.vmem [resolvable:$true] %s135
      %141 = dma.hbm_to_vmem [thread:$0]  %s9, 8192, %s136, [#allocation18], 128, 128, 8
    $region41: #{tpu_custom_call.1} parent=1 // pred_fallthru
      _
    // Predicated region
    $region42: #{tpu_custom_call.1} parent=1 // pred_check
      _
    $region43: #{tpu_custom_call.1} parent=1 // pred_check_branch
      %143 = sbr.rel (0) target = $region45
    $region44: #{tpu_custom_call.1} parent=1 // pred_region
      %s145 = ssub.s32 32, 32
      %146 = vsyncadd [#allocation18], %s145
      %s148 = sshll.u32 [#allocation19], 4
      %s149 = int_to_ptr.vmem [resolvable:$true] %s148
      %151 = dma.hbm_to_vmem [thread:$0]  %s10, 32, %s149, [#allocation18]
    $region45: #{tpu_custom_call.1} parent=1 // pred_fallthru
      _
    // Predicated region
    $region46: #{tpu_custom_call.1} parent=1 // pred_check
      _
    $region47: #{tpu_custom_call.1} parent=1 // pred_check_branch
      %153 = sbr.rel (0) target = $region49
    $region48: #{tpu_custom_call.1} parent=1 // pred_region
      %s155 = ssub.s32 2048, 2048
      %156 = vsyncadd [#allocation21], %s155
      %s157 = sshll.u32 [#allocation20], 4
      %s158 = int_to_ptr.vmem [resolvable:$true] %s157
      %163 = dma.hbm_to_vmem [thread:$0]  %s11, 2048, %s158, [#allocation21], 64, 64, 4
    $region49: #{tpu_custom_call.1} parent=1 // pred_fallthru
      _
    // Predicated region
    $region50: #{tpu_custom_call.1} parent=1 // pred_check
      _
    $region51: #{tpu_custom_call.1} parent=1 // pred_check_branch
      %165 = sbr.rel (0) target = $region53
    $region52: #{tpu_custom_call.1} parent=1 // pred_region
      %s167 = ssub.s32 16, 16
      %168 = vsyncadd [#allocation21], %s167
      %s170 = sshll.u32 [#allocation22], 4
      %s171 = int_to_ptr.vmem [resolvable:$true] %s170
      %173 = dma.hbm_to_vmem [thread:$0]  %s12, 16, %s171, [#allocation21]
    $region53: #{tpu_custom_call.1} parent=1 // pred_fallthru
      _
    // Predicated region
    $region54: #{tpu_custom_call.1} parent=1 // pred_check
      _
    $region55: #{tpu_custom_call.1} parent=1 // pred_check_branch
      %175 = sbr.rel (0) target = $region57
    $region56: #{tpu_custom_call.1} parent=1 // pred_region
      %s177 = ssub.s32 1024, 1024
      %178 = vsyncadd [#allocation24], %s177
      %s179 = sshll.u32 [#allocation23], 4
      %s180 = int_to_ptr.vmem [resolvable:$true] %s179
      %185 = dma.hbm_to_vmem [thread:$0]  %s13, 1024, %s180, [#allocation24], 64, 64, 4
    $region57: #{tpu_custom_call.1} parent=1 // pred_fallthru
      _
    // Predicated region
    $region58: #{tpu_custom_call.1} parent=1 // pred_check
      _
    $region59: #{tpu_custom_call.1} parent=1 // pred_check_branch
      %187 = sbr.rel (0) target = $region61
    $region60: #{tpu_custom_call.1} parent=1 // pred_region
      %s189 = ssub.s32 16, 16
      %190 = vsyncadd [#allocation24], %s189
      %s192 = sshll.u32 [#allocation25], 4
      %s193 = int_to_ptr.vmem [resolvable:$true] %s192
      %195 = dma.hbm_to_vmem [thread:$0]  %s14, 16, %s193, [#allocation24]
    $region61: #{tpu_custom_call.1} parent=1 // pred_fallthru
      _
    // Predicated region
    $region62: #{tpu_custom_call.1} parent=1 // pred_check
      _
    $region63: #{tpu_custom_call.1} parent=1 // pred_check_branch
      %197 = sbr.rel (0) target = $region65
    $region64: #{tpu_custom_call.1} parent=1 // pred_region
      %s199 = ssub.s32 1024, 1024
      %200 = vsyncadd [#allocation27], %s199
      %s201 = sshll.u32 [#allocation26], 4
      %s202 = int_to_ptr.vmem [resolvable:$true] %s201
      %207 = dma.hbm_to_vmem [thread:$0]  %s15, 1024, %s202, [#allocation27], 64, 64, 4
    $region65: #{tpu_custom_call.1} parent=1 // pred_fallthru
      _
    // Predicated region
    $region66: #{tpu_custom_call.1} parent=1 // pred_check
      _
    $region67: #{tpu_custom_call.1} parent=1 // pred_check_branch
      %209 = sbr.rel (0) target = $region69
    $region68: #{tpu_custom_call.1} parent=1 // pred_region
      %s211 = ssub.s32 16, 16
      %212 = vsyncadd [#allocation27], %s211
      %s214 = sshll.u32 [#allocation28], 4
      %s215 = int_to_ptr.vmem [resolvable:$true] %s214
      %217 = dma.hbm_to_vmem [thread:$0]  %s16, 16, %s215, [#allocation27]
    $region69: #{tpu_custom_call.1} parent=1 // pred_fallthru
      _
    // Predicated region
    $region70: #{tpu_custom_call.1} parent=1 // pred_check
      _
    $region71: #{tpu_custom_call.1} parent=1 // pred_check_branch
      %219 = sbr.rel (0) target = $region73
    $region72: #{tpu_custom_call.1} parent=1 // pred_region
      %220 = dma.done [#allocation3], 128
    $region73: #{tpu_custom_call.1} parent=1 // pred_fallthru
      _
    // Predicated region
    $region74: #{tpu_custom_call.1} parent=1 // pred_check
      _
    $region75: #{tpu_custom_call.1} parent=1 // pred_check_branch
      %222 = sbr.rel (0) target = $region77
    $region76: #{tpu_custom_call.1} parent=1 // pred_region
      %223 = dma.done [#allocation6], 2048
    $region77: #{tpu_custom_call.1} parent=1 // pred_fallthru
      _
    // Predicated region
    $region78: #{tpu_custom_call.1} parent=1 // pred_check
      _
    $region79: #{tpu_custom_call.1} parent=1 // pred_check_branch
      %225 = sbr.rel (0) target = $region81
    $region80: #{tpu_custom_call.1} parent=1 // pred_region
      %226 = dma.done [#allocation6], 32
    $region81: #{tpu_custom_call.1} parent=1 // pred_fallthru
      _
    // Predicated region
    $region82: #{tpu_custom_call.1} parent=1 // pred_check
      _
    $region83: #{tpu_custom_call.1} parent=1 // pred_check_branch
      %228 = sbr.rel (0) target = $region85
    $region84: #{tpu_custom_call.1} parent=1 // pred_region
      %229 = dma.done [#allocation9], 8192
    $region85: #{tpu_custom_call.1} parent=1 // pred_fallthru
      _
    // Predicated region
    $region86: #{tpu_custom_call.1} parent=1 // pred_check
      _
    $region87: #{tpu_custom_call.1} parent=1 // pred_check_branch
      %231 = sbr.rel (0) target = $region89
    $region88: #{tpu_custom_call.1} parent=1 // pred_region
      %232 = dma.done [#allocation9], 64
    $region89: #{tpu_custom_call.1} parent=1 // pred_fallthru
      _
    // Predicated region
    $region90: #{tpu_custom_call.1} parent=1 // pred_check
      _
    $region91: #{tpu_custom_call.1} parent=1 // pred_check_branch
      %234 = sbr.rel (0) target = $region93
    $region92: #{tpu_custom_call.1} parent=1 // pred_region
      %235 = dma.done [#allocation12], 24576
    $region93: #{tpu_custom_call.1} parent=1 // pred_fallthru
      _
    // Predicated region
    $region94: #{tpu_custom_call.1} parent=1 // pred_check
      _
    $region95: #{tpu_custom_call.1} parent=1 // pred_check_branch
      %237 = sbr.rel (0) target = $region97
    $region96: #{tpu_custom_call.1} parent=1 // pred_region
      %238 = dma.done [#allocation12], 96
    $region97: #{tpu_custom_call.1} parent=1 // pred_fallthru
      _
    // Predicated region
    $region98: #{tpu_custom_call.1} parent=1 // pred_check
      _
    $region99: #{tpu_custom_call.1} parent=1 // pred_check_branch
      %240 = sbr.rel (0) target = $region101
    $region100: #{tpu_custom_call.1} parent=1 // pred_region
      %241 = dma.done [#allocation15], 24576
    $region101: #{tpu_custom_call.1} parent=1 // pred_fallthru
      _
    // Predicated region
    $region102: #{tpu_custom_call.1} parent=1 // pred_check
      _
    $region103: #{tpu_custom_call.1} parent=1 // pred_check_branch
      %243 = sbr.rel (0) target = $region105
    $region104: #{tpu_custom_call.1} parent=1 // pred_region
      %244 = dma.done [#allocation15], 64
    $region105: #{tpu_custom_call.1} parent=1 // pred_fallthru
      _
    // Predicated region
    $region106: #{tpu_custom_call.1} parent=1 // pred_check
      _
    $region107: #{tpu_custom_call.1} parent=1 // pred_check_branch
      %246 = sbr.rel (0) target = $region109
    $region108: #{tpu_custom_call.1} parent=1 // pred_region
      %247 = dma.done [#allocation18], 8192
    $region109: #{tpu_custom_call.1} parent=1 // pred_fallthru
      _
    // Predicated region
    $region110: #{tpu_custom_call.1} parent=1 // pred_check
      _
    $region111: #{tpu_custom_call.1} parent=1 // pred_check_branch
      %249 = sbr.rel (0) target = $region113
    $region112: #{tpu_custom_call.1} parent=1 // pred_region
      %250 = dma.done [#allocation18], 32
    $region113: #{tpu_custom_call.1} parent=1 // pred_fallthru
      _
    // Predicated region
    $region114: #{tpu_custom_call.1} parent=1 // pred_check
      _
    $region115: #{tpu_custom_call.1} parent=1 // pred_check_branch
      %252 = sbr.rel (0) target = $region117
    $region116: #{tpu_custom_call.1} parent=1 // pred_region
      %253 = dma.done [#allocation21], 2048
    $region117: #{tpu_custom_call.1} parent=1 // pred_fallthru
      _
    // Predicated region
    $region118: #{tpu_custom_call.1} parent=1 // pred_check
      _
    $region119: #{tpu_custom_call.1} parent=1 // pred_check_branch
      %255 = sbr.rel (0) target = $region121
    $region120: #{tpu_custom_call.1} parent=1 // pred_region
      %256 = dma.done [#allocation21], 16
    $region121: #{tpu_custom_call.1} parent=1 // pred_fallthru
      _
    // Predicated region
    $region122: #{tpu_custom_call.1} parent=1 // pred_check
      _
    $region123: #{tpu_custom_call.1} parent=1 // pred_check_branch
      %258 = sbr.rel (0) target = $region125
    $region124: #{tpu_custom_call.1} parent=1 // pred_region
      %259 = dma.done [#allocation24], 1024
    $region125: #{tpu_custom_call.1} parent=1 // pred_fallthru
      _
    // Predicated region
    $region126: #{tpu_custom_call.1} parent=1 // pred_check
      _
    $region127: #{tpu_custom_call.1} parent=1 // pred_check_branch
      %261 = sbr.rel (0) target = $region129
    $region128: #{tpu_custom_call.1} parent=1 // pred_region
      %262 = dma.done [#allocation24], 16
    $region129: #{tpu_custom_call.1} parent=1 // pred_fallthru
      _
    // Predicated region
    $region130: #{tpu_custom_call.1} parent=1 // pred_check
      _
    $region131: #{tpu_custom_call.1} parent=1 // pred_check_branch
      %264 = sbr.rel (0) target = $region133
    $region132: #{tpu_custom_call.1} parent=1 // pred_region
      %265 = dma.done [#allocation27], 1024
    $region133: #{tpu_custom_call.1} parent=1 // pred_fallthru
      _
    // Predicated region
    $region134: #{tpu_custom_call.1} parent=1 // pred_check
      _
    $region135: #{tpu_custom_call.1} parent=1 // pred_check_branch
      %267 = sbr.rel (0) target = $region137
    $region136: #{tpu_custom_call.1} parent=1 // pred_region
      %268 = dma.done [#allocation27], 16
    $region137: #{tpu_custom_call.1} parent=1 // pred_fallthru
      _
    %v270 = vld [vmem:[#allocation2] sm:$0xff]
    %v271 = vpack.c.bf16 %v270, %v270
    %v272 = vld [vmem:[#allocation5] sm:$0xff]
    %v273 = vld [vmem:[#allocation5 + $0x8] sm:$0xff]
    %v274 = vld [vmem:[#allocation5 + $0x10] sm:$0xff]
    %v275 = vld [vmem:[#allocation5 + $0x18] sm:$0xff]
    %v276 = vld [vmem:[#allocation5 + $0x20] sm:$0xff]
    %v277 = vld [vmem:[#allocation5 + $0x28] sm:$0xff]
    %v278 = vld [vmem:[#allocation5 + $0x30] sm:$0xff]
    %v279 = vld [vmem:[#allocation5 + $0x38] sm:$0xff]
    %v280 = vld [vmem:[#allocation5 + $0x40] sm:$0xff]
    %v281 = vld [vmem:[#allocation5 + $0x48] sm:$0xff]
    %v282 = vld [vmem:[#allocation5 + $0x50] sm:$0xff]
    %v283 = vld [vmem:[#allocation5 + $0x58] sm:$0xff]
    %v284 = vld [vmem:[#allocation5 + $0x60] sm:$0xff]
    %v285 = vld [vmem:[#allocation5 + $0x68] sm:$0xff]
    %v286 = vld [vmem:[#allocation5 + $0x70] sm:$0xff]
    %v287 = vld [vmem:[#allocation5 + $0x78] sm:$0xff]
    %v288 = vld [vmem:[#allocation7] sm:$0x3]
    %v290 = vlaneseq
    %v291 = vshrl.u32 %v290, 7
    %v292 = vsub.s32 0, %v291
    %v293 = vrot.slane %v288, %v292
    %v294 = vlaneseq
    %v295 = vshrl.u32 %v294, 7
    %v296 = vsub.s32 1, %v295
    %v297 = vrot.slane %v288, %v296
    %v316 = vunpack.c.l.b16 %v272
    %v317 = vunpack.c.h.b16 %v272
    %v318 = vunpack.c.l.b16 %v273
    %v319 = vunpack.c.h.b16 %v273
    %v320 = vunpack.c.l.b16 %v274
    %v321 = vunpack.c.h.b16 %v274
    %v322 = vunpack.c.l.b16 %v275
    %v323 = vunpack.c.h.b16 %v275
    %v324 = vunpack.c.l.b16 %v276
    %v325 = vunpack.c.h.b16 %v276
    %v326 = vunpack.c.l.b16 %v277
    %v327 = vunpack.c.h.b16 %v277
    %v328 = vunpack.c.l.b16 %v278
    %v329 = vunpack.c.h.b16 %v278
    %v330 = vunpack.c.l.b16 %v279
    %v331 = vunpack.c.h.b16 %v279
    %v332 = vunpack.c.l.b16 %v280
    %v333 = vunpack.c.h.b16 %v280
    %v334 = vunpack.c.l.b16 %v281
    %v335 = vunpack.c.h.b16 %v281
    %v336 = vunpack.c.l.b16 %v282
    %v337 = vunpack.c.h.b16 %v282
    %v338 = vunpack.c.l.b16 %v283
    %v339 = vunpack.c.h.b16 %v283
    %v340 = vunpack.c.l.b16 %v284
    %v341 = vunpack.c.h.b16 %v284
    %v342 = vunpack.c.l.b16 %v285
    %v343 = vunpack.c.h.b16 %v285
    %v344 = vunpack.c.l.b16 %v286
    %v345 = vunpack.c.h.b16 %v286
    %v346 = vunpack.c.l.b16 %v287
    %v347 = vunpack.c.h.b16 %v287
    %v348 = vpack.c.b16 %v318, %v316
    %v349 = vpack.c.b16 %v319, %v317
    %v350 = vpack.c.b16 %v322, %v320
    %v351 = vpack.c.b16 %v323, %v321
    %v352 = vpack.c.b16 %v326, %v324
    %v353 = vpack.c.b16 %v327, %v325
    %v354 = vpack.c.b16 %v330, %v328
    %v355 = vpack.c.b16 %v331, %v329
    %v356 = vpack.c.b16 %v334, %v332
    %v357 = vpack.c.b16 %v335, %v333
    %v358 = vpack.c.b16 %v338, %v336
    %v359 = vpack.c.b16 %v339, %v337
    %v360 = vpack.c.b16 %v342, %v340
    %v361 = vpack.c.b16 %v343, %v341
    %v362 = vpack.c.b16 %v346, %v344
    %v363 = vpack.c.b16 %v347, %v345
    %380 = vmatprep.subr.bf16.mxu0 %v349
    %381 = vmatpush1.bf16.msra.mxu0 %v348
    %382 = vmatprep.subr.bf16.mxu0 %v351
    %383 = vmatpush1.bf16.msra.mxu0 %v350
    %384 = vmatprep.subr.bf16.mxu0 %v353
    %385 = vmatpush1.bf16.msra.mxu0 %v352
    %386 = vmatprep.subr.bf16.mxu0 %v355
    %387 = vmatpush1.bf16.msra.mxu0 %v354
    %388 = vmatprep.subr.bf16.mxu0 %v357
    %389 = vmatpush1.bf16.msra.mxu0 %v356
    %390 = vmatprep.subr.bf16.mxu0 %v359
    %391 = vmatpush1.bf16.msra.mxu0 %v358
    %392 = vmatprep.subr.bf16.mxu0 %v361
    %393 = vmatpush1.bf16.msra.mxu0 %v360
    %394 = vmatprep.subr.bf16.mxu0 %v363
    %395 = vmatpush1.bf16.msra.mxu0 %v362
    %396 = vmatprep.subr.bf16.mxu0 0
    %397 = vmatpush1.bf16.msra.mxu0 0
    %398 = vmatprep.subr.bf16.mxu0 0
    %399 = vmatpush1.bf16.msra.mxu0 0
    %400 = vmatprep.subr.bf16.mxu0 0
    %401 = vmatpush1.bf16.msra.mxu0 0
    %402 = vmatprep.subr.bf16.mxu0 0
    %403 = vmatpush1.bf16.msra.mxu0 0
    %404 = vmatprep.subr.bf16.mxu0 0
    %405 = vmatpush1.bf16.msra.mxu0 0
    %406 = vmatprep.subr.bf16.mxu0 0
    %407 = vmatpush1.bf16.msra.mxu0 0
    %408 = vmatprep.subr.bf16.mxu0 0
    %409 = vmatpush1.bf16.msra.mxu0 0
    %410 = vmatprep.subr.bf16.mxu0 0
    %411 = vmatpush1.bf16.msra.mxu0 0
    %412 = vmatprep.mubr.bf16.mxu0 0
    %413 = vmatmul.mubr.bf16.gmra.mrb[0].mxu0 %v271
    %v414 = vpop.f32.mrb[0].mxu0
    %v415 = vadd.f32 %v293, %v414
    %v416 = vpop.f32.mrb[0].mxu0
    %v417 = vadd.f32 %v297, %v416
    %v418 = vpop.f32.mrb[0].mxu0
    %v419 = vpop.f32.mrb[0].mxu0
    %420 = vdwg.mxu0
    %v421 = vmul.f32 %v415, 0.1
    %v422 = vmul.f32 %v417, 0.1
    %v423 = vmax.f32 %v415, %v421
    %v424 = vmax.f32 %v417, %v422
    %v425 = vpack.c.bf16 %v423, %v423
    %v426 = vpack.c.bf16 %v424, %v424
    %v427 = vld [vmem:[#allocation8] sm:$0xff]
    %v428 = vld [vmem:[#allocation8 + $0x8] sm:$0xff]
    %v429 = vld [vmem:[#allocation8 + $0x10] sm:$0xff]
    %v430 = vld [vmem:[#allocation8 + $0x18] sm:$0xff]
    %v431 = vld [vmem:[#allocation8 + $0x20] sm:$0xff]
    %v432 = vld [vmem:[#allocation8 + $0x28] sm:$0xff]
    %v433 = vld [vmem:[#allocation8 + $0x30] sm:$0xff]
    %v434 = vld [vmem:[#allocation8 + $0x38] sm:$0xff]
    %v435 = vld [vmem:[#allocation8 + $0x40] sm:$0xff]
    %v436 = vld [vmem:[#allocation8 + $0x48] sm:$0xff]
    %v437 = vld [vmem:[#allocation8 + $0x50] sm:$0xff]
    %v438 = vld [vmem:[#allocation8 + $0x58] sm:$0xff]
    %v439 = vld [vmem:[#allocation8 + $0x60] sm:$0xff]
    %v440 = vld [vmem:[#allocation8 + $0x68] sm:$0xff]
    %v441 = vld [vmem:[#allocation8 + $0x70] sm:$0xff]
    %v442 = vld [vmem:[#allocation8 + $0x78] sm:$0xff]
    %v443 = vld [vmem:[#allocation8 + $0x80] sm:$0xff]
    %v444 = vld [vmem:[#allocation8 + $0x88] sm:$0xff]
    %v445 = vld [vmem:[#allocation8 + $0x90] sm:$0xff]
    %v446 = vld [vmem:[#allocation8 + $0x98] sm:$0xff]
    %v447 = vld [vmem:[#allocation8 + $0xa0] sm:$0xff]
    %v448 = vld [vmem:[#allocation8 + $0xa8] sm:$0xff]
    %v449 = vld [vmem:[#allocation8 + $0xb0] sm:$0xff]
    %v450 = vld [vmem:[#allocation8 + $0xb8] sm:$0xff]
    %v451 = vld [vmem:[#allocation8 + $0xc0] sm:$0xff]
    %v452 = vld [vmem:[#allocation8 + $0xc8] sm:$0xff]
    %v453 = vld [vmem:[#allocation8 + $0xd0] sm:$0xff]
    %v454 = vld [vmem:[#allocation8 + $0xd8] sm:$0xff]
    %v455 = vld [vmem:[#allocation8 + $0xe0] sm:$0xff]
    %v456 = vld [vmem:[#allocation8 + $0xe8] sm:$0xff]
    %v457 = vld [vmem:[#allocation8 + $0xf0] sm:$0xff]
    %v458 = vld [vmem:[#allocation8 + $0xf8] sm:$0xff]
    %v459 = vld [vmem:[#allocation8 + $0x100] sm:$0xff]
    %v460 = vld [vmem:[#allocation8 + $0x108] sm:$0xff]
    %v461 = vld [vmem:[#allocation8 + $0x110] sm:$0xff]
    %v462 = vld [vmem:[#allocation8 + $0x118] sm:$0xff]
    %v463 = vld [vmem:[#allocation8 + $0x120] sm:$0xff]
    %v464 = vld [vmem:[#allocation8 + $0x128] sm:$0xff]
    %v465 = vld [vmem:[#allocation8 + $0x130] sm:$0xff]
    %v466 = vld [vmem:[#allocation8 + $0x138] sm:$0xff]
    %v467 = vld [vmem:[#allocation8 + $0x140] sm:$0xff]
    %v468 = vld [vmem:[#allocation8 + $0x148] sm:$0xff]
    %v469 = vld [vmem:[#allocation8 + $0x150] sm:$0xff]
    %v470 = vld [vmem:[#allocation8 + $0x158] sm:$0xff]
    %v471 = vld [vmem:[#allocation8 + $0x160] sm:$0xff]
    %v472 = vld [vmem:[#allocation8 + $0x168] sm:$0xff]
    %v473 = vld [vmem:[#allocation8 + $0x170] sm:$0xff]
    %v474 = vld [vmem:[#allocation8 + $0x178] sm:$0xff]
    %v475 = vld [vmem:[#allocation8 + $0x180] sm:$0xff]
    %v476 = vld [vmem:[#allocation8 + $0x188] sm:$0xff]
    %v477 = vld [vmem:[#allocation8 + $0x190] sm:$0xff]
    %v478 = vld [vmem:[#allocation8 + $0x198] sm:$0xff]
    %v479 = vld [vmem:[#allocation8 + $0x1a0] sm:$0xff]
    %v480 = vld [vmem:[#allocation8 + $0x1a8] sm:$0xff]
    %v481 = vld [vmem:[#allocation8 + $0x1b0] sm:$0xff]
    %v482 = vld [vmem:[#allocation8 + $0x1b8] sm:$0xff]
    %v483 = vld [vmem:[#allocation8 + $0x1c0] sm:$0xff]
    %v484 = vld [vmem:[#allocation8 + $0x1c8] sm:$0xff]
    %v485 = vld [vmem:[#allocation8 + $0x1d0] sm:$0xff]
    %v486 = vld [vmem:[#allocation8 + $0x1d8] sm:$0xff]
    %v487 = vld [vmem:[#allocation8 + $0x1e0] sm:$0xff]
    %v488 = vld [vmem:[#allocation8 + $0x1e8] sm:$0xff]
    %v489 = vld [vmem:[#allocation8 + $0x1f0] sm:$0xff]
    %v490 = vld [vmem:[#allocation8 + $0x1f8] sm:$0xff]
    %v491 = vld [vmem:[#allocation10] sm:$0xf]
    %v493 = vlaneseq
    %v494 = vshrl.u32 %v493, 7
    %v495 = vsub.s32 0, %v494
    %v496 = vrot.slane %v491, %v495
    %v497 = vlaneseq
    %v498 = vshrl.u32 %v497, 7
    %v499 = vsub.s32 1, %v498
    %v500 = vrot.slane %v491, %v499
    %v501 = vlaneseq
    %v502 = vshrl.u32 %v501, 7
    %v503 = vsub.s32 2, %v502
    %v504 = vrot.slane %v491, %v503
    %v505 = vlaneseq
    %v506 = vshrl.u32 %v505, 7
    %v507 = vsub.s32 3, %v506
    %v508 = vrot.slane %v491, %v507
    %v577 = vunpack.c.l.b16 %v427
    %v578 = vunpack.c.h.b16 %v427
    %v579 = vunpack.c.l.b16 %v428
    %v580 = vunpack.c.h.b16 %v428
    %v581 = vunpack.c.l.b16 %v429
    %v582 = vunpack.c.h.b16 %v429
    %v583 = vunpack.c.l.b16 %v430
    %v584 = vunpack.c.h.b16 %v430
    %v585 = vunpack.c.l.b16 %v431
    %v586 = vunpack.c.h.b16 %v431
    %v587 = vunpack.c.l.b16 %v432
    %v588 = vunpack.c.h.b16 %v432
    %v589 = vunpack.c.l.b16 %v433
    %v590 = vunpack.c.h.b16 %v433
    %v591 = vunpack.c.l.b16 %v434
    %v592 = vunpack.c.h.b16 %v434
    %v593 = vunpack.c.l.b16 %v435
    %v594 = vunpack.c.h.b16 %v435
    %v595 = vunpack.c.l.b16 %v436
    %v596 = vunpack.c.h.b16 %v436
    %v597 = vunpack.c.l.b16 %v437
    %v598 = vunpack.c.h.b16 %v437
    %v599 = vunpack.c.l.b16 %v438
    %v600 = vunpack.c.h.b16 %v438
    %v601 = vunpack.c.l.b16 %v439
    %v602 = vunpack.c.h.b16 %v439
    %v603 = vunpack.c.l.b16 %v440
    %v604 = vunpack.c.h.b16 %v440
    %v605 = vunpack.c.l.b16 %v441
    %v606 = vunpack.c.h.b16 %v441
    %v607 = vunpack.c.l.b16 %v442
    %v608 = vunpack.c.h.b16 %v442
    %v609 = vunpack.c.l.b16 %v443
    %v610 = vunpack.c.h.b16 %v443
    %v611 = vunpack.c.l.b16 %v444
    %v612 = vunpack.c.h.b16 %v444
    %v613 = vunpack.c.l.b16 %v445
    %v614 = vunpack.c.h.b16 %v445
    %v615 = vunpack.c.l.b16 %v446
    %v616 = vunpack.c.h.b16 %v446
    %v617 = vunpack.c.l.b16 %v447
    %v618 = vunpack.c.h.b16 %v447
    %v619 = vunpack.c.l.b16 %v448
    %v620 = vunpack.c.h.b16 %v448
    %v621 = vunpack.c.l.b16 %v449
    %v622 = vunpack.c.h.b16 %v449
    %v623 = vunpack.c.l.b16 %v450
    %v624 = vunpack.c.h.b16 %v450
    %v625 = vunpack.c.l.b16 %v451
    %v626 = vunpack.c.h.b16 %v451
    %v627 = vunpack.c.l.b16 %v452
    %v628 = vunpack.c.h.b16 %v452
    %v629 = vunpack.c.l.b16 %v453
    %v630 = vunpack.c.h.b16 %v453
    %v631 = vunpack.c.l.b16 %v454
    %v632 = vunpack.c.h.b16 %v454
    %v633 = vunpack.c.l.b16 %v455
    %v634 = vunpack.c.h.b16 %v455
    %v635 = vunpack.c.l.b16 %v456
    %v636 = vunpack.c.h.b16 %v456
    %v637 = vunpack.c.l.b16 %v457
    %v638 = vunpack.c.h.b16 %v457
    %v639 = vunpack.c.l.b16 %v458
    %v640 = vunpack.c.h.b16 %v458
    %v641 = vunpack.c.l.b16 %v459
    %v642 = vunpack.c.h.b16 %v459
    %v643 = vunpack.c.l.b16 %v460
    %v644 = vunpack.c.h.b16 %v460
    %v645 = vunpack.c.l.b16 %v461
    %v646 = vunpack.c.h.b16 %v461
    %v647 = vunpack.c.l.b16 %v462
    %v648 = vunpack.c.h.b16 %v462
    %v649 = vunpack.c.l.b16 %v463
    %v650 = vunpack.c.h.b16 %v463
    %v651 = vunpack.c.l.b16 %v464
    %v652 = vunpack.c.h.b16 %v464
    %v653 = vunpack.c.l.b16 %v465
    %v654 = vunpack.c.h.b16 %v465
    %v655 = vunpack.c.l.b16 %v466
    %v656 = vunpack.c.h.b16 %v466
    %v657 = vunpack.c.l.b16 %v467
    %v658 = vunpack.c.h.b16 %v467
    %v659 = vunpack.c.l.b16 %v468
    %v660 = vunpack.c.h.b16 %v468
    %v661 = vunpack.c.l.b16 %v469
    %v662 = vunpack.c.h.b16 %v469
    %v663 = vunpack.c.l.b16 %v470
    %v664 = vunpack.c.h.b16 %v470
    %v665 = vunpack.c.l.b16 %v471
    %v666 = vunpack.c.h.b16 %v471
    %v667 = vunpack.c.l.b16 %v472
    %v668 = vunpack.c.h.b16 %v472
    %v669 = vunpack.c.l.b16 %v473
    %v670 = vunpack.c.h.b16 %v473
    %v671 = vunpack.c.l.b16 %v474
    %v672 = vunpack.c.h.b16 %v474
    %v673 = vunpack.c.l.b16 %v475
    %v674 = vunpack.c.h.b16 %v475
    %v675 = vunpack.c.l.b16 %v476
    %v676 = vunpack.c.h.b16 %v476
    %v677 = vunpack.c.l.b16 %v477
    %v678 = vunpack.c.h.b16 %v477
    %v679 = vunpack.c.l.b16 %v478
    %v680 = vunpack.c.h.b16 %v478
    %v681 = vunpack.c.l.b16 %v479
    %v682 = vunpack.c.h.b16 %v479
    %v683 = vunpack.c.l.b16 %v480
    %v684 = vunpack.c.h.b16 %v480
    %v685 = vunpack.c.l.b16 %v481
    %v686 = vunpack.c.h.b16 %v481
    %v687 = vunpack.c.l.b16 %v482
    %v688 = vunpack.c.h.b16 %v482
    %v689 = vunpack.c.l.b16 %v483
    %v690 = vunpack.c.h.b16 %v483
    %v691 = vunpack.c.l.b16 %v484
    %v692 = vunpack.c.h.b16 %v484
    %v693 = vunpack.c.l.b16 %v485
    %v694 = vunpack.c.h.b16 %v485
    %v695 = vunpack.c.l.b16 %v486
    %v696 = vunpack.c.h.b16 %v486
    %v697 = vunpack.c.l.b16 %v487
    %v698 = vunpack.c.h.b16 %v487
    %v699 = vunpack.c.l.b16 %v488
    %v700 = vunpack.c.h.b16 %v488
    %v701 = vunpack.c.l.b16 %v489
    %v702 = vunpack.c.h.b16 %v489
    %v703 = vunpack.c.l.b16 %v490
    %v704 = vunpack.c.h.b16 %v490
    %v705 = vpack.c.b16 %v581, %v577
    %v706 = vpack.c.b16 %v582, %v578
    %v707 = vpack.c.b16 %v583, %v579
    %v708 = vpack.c.b16 %v584, %v580
    %v709 = vpack.c.b16 %v589, %v585
    %v710 = vpack.c.b16 %v590, %v586
    %v711 = vpack.c.b16 %v591, %v587
    %v712 = vpack.c.b16 %v592, %v588
    %v713 = vpack.c.b16 %v597, %v593
    %v714 = vpack.c.b16 %v598, %v594
    %v715 = vpack.c.b16 %v599, %v595
    %v716 = vpack.c.b16 %v600, %v596
    %v717 = vpack.c.b16 %v605, %v601
    %v718 = vpack.c.b16 %v606, %v602
    %v719 = vpack.c.b16 %v607, %v603
    %v720 = vpack.c.b16 %v608, %v604
    %v721 = vpack.c.b16 %v613, %v609
    %v722 = vpack.c.b16 %v614, %v610
    %v723 = vpack.c.b16 %v615, %v611
    %v724 = vpack.c.b16 %v616, %v612
    %v725 = vpack.c.b16 %v621, %v617
    %v726 = vpack.c.b16 %v622, %v618
    %v727 = vpack.c.b16 %v623, %v619
    %v728 = vpack.c.b16 %v624, %v620
    %v729 = vpack.c.b16 %v629, %v625
    %v730 = vpack.c.b16 %v630, %v626
    %v731 = vpack.c.b16 %v631, %v627
    %v732 = vpack.c.b16 %v632, %v628
    %v733 = vpack.c.b16 %v637, %v633
    %v734 = vpack.c.b16 %v638, %v634
    %v735 = vpack.c.b16 %v639, %v635
    %v736 = vpack.c.b16 %v640, %v636
    %v737 = vpack.c.b16 %v645, %v641
    %v738 = vpack.c.b16 %v646, %v642
    %v739 = vpack.c.b16 %v647, %v643
    %v740 = vpack.c.b16 %v648, %v644
    %v741 = vpack.c.b16 %v653, %v649
    %v742 = vpack.c.b16 %v654, %v650
    %v743 = vpack.c.b16 %v655, %v651
    %v744 = vpack.c.b16 %v656, %v652
    %v745 = vpack.c.b16 %v661, %v657
    %v746 = vpack.c.b16 %v662, %v658
    %v747 = vpack.c.b16 %v663, %v659
    %v748 = vpack.c.b16 %v664, %v660
    %v749 = vpack.c.b16 %v669, %v665
    %v750 = vpack.c.b16 %v670, %v666
    %v751 = vpack.c.b16 %v671, %v667
    %v752 = vpack.c.b16 %v672, %v668
    %v753 = vpack.c.b16 %v677, %v673
    %v754 = vpack.c.b16 %v678, %v674
    %v755 = vpack.c.b16 %v679, %v675
    %v756 = vpack.c.b16 %v680, %v676
    %v757 = vpack.c.b16 %v685, %v681
    %v758 = vpack.c.b16 %v686, %v682
    %v759 = vpack.c.b16 %v687, %v683
    %v760 = vpack.c.b16 %v688, %v684
    %v761 = vpack.c.b16 %v693, %v689
    %v762 = vpack.c.b16 %v694, %v690
    %v763 = vpack.c.b16 %v695, %v691
    %v764 = vpack.c.b16 %v696, %v692
    %v765 = vpack.c.b16 %v701, %v697
    %v766 = vpack.c.b16 %v702, %v698
    %v767 = vpack.c.b16 %v703, %v699
    %v768 = vpack.c.b16 %v704, %v700
    %833 = vmatprep.subr.bf16.mxu0 %v706
    %834 = vmatpush1.bf16.msra.mxu0 %v705
    %835 = vmatprep.subr.bf16.mxu0 %v710
    %836 = vmatpush1.bf16.msra.mxu0 %v709
    %837 = vmatprep.subr.bf16.mxu0 %v714
    %838 = vmatpush1.bf16.msra.mxu0 %v713
    %839 = vmatprep.subr.bf16.mxu0 %v718
    %840 = vmatpush1.bf16.msra.mxu0 %v717
    %841 = vmatprep.subr.bf16.mxu0 %v722
    %842 = vmatpush1.bf16.msra.mxu0 %v721
    %843 = vmatprep.subr.bf16.mxu0 %v726
    %844 = vmatpush1.bf16.msra.mxu0 %v725
    %845 = vmatprep.subr.bf16.mxu0 %v730
    %846 = vmatpush1.bf16.msra.mxu0 %v729
    %847 = vmatprep.subr.bf16.mxu0 %v734
    %848 = vmatpush1.bf16.msra.mxu0 %v733
    %849 = vmatprep.subr.bf16.mxu0 %v738
    %850 = vmatpush1.bf16.msra.mxu0 %v737
    %851 = vmatprep.subr.bf16.mxu0 %v742
    %852 = vmatpush1.bf16.msra.mxu0 %v741
    %853 = vmatprep.subr.bf16.mxu0 %v746
    %854 = vmatpush1.bf16.msra.mxu0 %v745
    %855 = vmatprep.subr.bf16.mxu0 %v750
    %856 = vmatpush1.bf16.msra.mxu0 %v749
    %857 = vmatprep.subr.bf16.mxu0 %v754
    %858 = vmatpush1.bf16.msra.mxu0 %v753
    %859 = vmatprep.subr.bf16.mxu0 %v758
    %860 = vmatpush1.bf16.msra.mxu0 %v757
    %861 = vmatprep.subr.bf16.mxu0 %v762
    %862 = vmatpush1.bf16.msra.mxu0 %v761
    %863 = vmatprep.subr.bf16.mxu0 %v766
    %864 = vmatpush1.bf16.msra.mxu0 %v765
    %865 = vmatprep.mubr.bf16.mxu0 %v426
    %866 = vmatmul.mubr.bf16.gmra.mrb[0].mxu0 %v425
    %v867 = vpop.f32.mrb[0].mxu0
    %v868 = vadd.f32 %v496, %v867
    %v869 = vpop.f32.mrb[0].mxu0
    %v870 = vadd.f32 %v500, %v869
    %v871 = vpop.f32.mrb[0].mxu0
    %v872 = vpop.f32.mrb[0].mxu0
    %873 = vdwg.mxu0
    %874 = vmatprep.subr.bf16.mxu0 %v708
    %875 = vmatpush1.bf16.msra.mxu0 %v707
    %876 = vmatprep.subr.bf16.mxu0 %v712
    %877 = vmatpush1.bf16.msra.mxu0 %v711
    %878 = vmatprep.subr.bf16.mxu0 %v716
    %879 = vmatpush1.bf16.msra.mxu0 %v715
    %880 = vmatprep.subr.bf16.mxu0 %v720
    %881 = vmatpush1.bf16.msra.mxu0 %v719
    %882 = vmatprep.subr.bf16.mxu0 %v724
    %883 = vmatpush1.bf16.msra.mxu0 %v723
    %884 = vmatprep.subr.bf16.mxu0 %v728
    %885 = vmatpush1.bf16.msra.mxu0 %v727
    %886 = vmatprep.subr.bf16.mxu0 %v732
    %887 = vmatpush1.bf16.msra.mxu0 %v731
    %888 = vmatprep.subr.bf16.mxu0 %v736
    %889 = vmatpush1.bf16.msra.mxu0 %v735
    %890 = vmatprep.subr.bf16.mxu0 %v740
    %891 = vmatpush1.bf16.msra.mxu0 %v739
    %892 = vmatprep.subr.bf16.mxu0 %v744
    %893 = vmatpush1.bf16.msra.mxu0 %v743
    %894 = vmatprep.subr.bf16.mxu0 %v748
    %895 = vmatpush1.bf16.msra.mxu0 %v747
    %896 = vmatprep.subr.bf16.mxu0 %v752
    %897 = vmatpush1.bf16.msra.mxu0 %v751
    %898 = vmatprep.subr.bf16.mxu0 %v756
    %899 = vmatpush1.bf16.msra.mxu0 %v755
    %900 = vmatprep.subr.bf16.mxu0 %v760
    %901 = vmatpush1.bf16.msra.mxu0 %v759
    %902 = vmatprep.subr.bf16.mxu0 %v764
    %903 = vmatpush1.bf16.msra.mxu0 %v763
    %904 = vmatprep.subr.bf16.mxu0 %v768
    %905 = vmatpush1.bf16.msra.mxu0 %v767
    %906 = vmatprep.mubr.bf16.mxu0 %v426
    %907 = vmatmul.mubr.bf16.gmra.mrb[0].mxu0 %v425
    %v908 = vpop.f32.mrb[0].mxu0
    %v909 = vadd.f32 %v504, %v908
    %v910 = vpop.f32.mrb[0].mxu0
    %v911 = vadd.f32 %v508, %v910
    %v912 = vpop.f32.mrb[0].mxu0
    %v913 = vpop.f32.mrb[0].mxu0
    %914 = vdwg.mxu0
    %v915 = vmul.f32 %v868, 0.1
    %v916 = vmul.f32 %v870, 0.1
    %v917 = vmul.f32 %v909, 0.1
    %v918 = vmul.f32 %v911, 0.1
    %v919 = vmax.f32 %v868, %v915
    %v920 = vmax.f32 %v870, %v916
    %v921 = vmax.f32 %v909, %v917
    %v922 = vmax.f32 %v911, %v918
    %v923 = vpack.c.bf16 %v919, %v919
    %v924 = vpack.c.bf16 %v920, %v920
    %v925 = vpack.c.bf16 %v921, %v921
    %v926 = vpack.c.bf16 %v922, %v922
    %v927 = vld [vmem:[#allocation11] sm:$0xff]
    %v928 = vld [vmem:[#allocation11 + $0x8] sm:$0xff]
    %v929 = vld [vmem:[#allocation11 + $0x10] sm:$0xff]
    %v930 = vld [vmem:[#allocation11 + $0x18] sm:$0xff]
    %v931 = vld [vmem:[#allocation11 + $0x20] sm:$0xff]
    %v932 = vld [vmem:[#allocation11 + $0x28] sm:$0xff]
    %v933 = vld [vmem:[#allocation11 + $0x30] sm:$0xff]
    %v934 = vld [vmem:[#allocation11 + $0x38] sm:$0xff]
    %v935 = vld [vmem:[#allocation11 + $0x40] sm:$0xff]
    %v936 = vld [vmem:[#allocation11 + $0x48] sm:$0xff]
    %v937 = vld [vmem:[#allocation11 + $0x50] sm:$0xff]
    %v938 = vld [vmem:[#allocation11 + $0x58] sm:$0xff]
    %v939 = vld [vmem:[#allocation11 + $0x60] sm:$0xff]
    %v940 = vld [vmem:[#allocation11 + $0x68] sm:$0xff]
    %v941 = vld [vmem:[#allocation11 + $0x70] sm:$0xff]
    %v942 = vld [vmem:[#allocation11 + $0x78] sm:$0xff]
    %v943 = vld [vmem:[#allocation11 + $0x80] sm:$0xff]
    %v944 = vld [vmem:[#allocation11 + $0x88] sm:$0xff]
    %v945 = vld [vmem:[#allocation11 + $0x90] sm:$0xff]
    %v946 = vld [vmem:[#allocation11 + $0x98] sm:$0xff]
    %v947 = vld [vmem:[#allocation11 + $0xa0] sm:$0xff]
    %v948 = vld [vmem:[#allocation11 + $0xa8] sm:$0xff]
    %v949 = vld [vmem:[#allocation11 + $0xb0] sm:$0xff]
    %v950 = vld [vmem:[#allocation11 + $0xb8] sm:$0xff]
    %v951 = vld [vmem:[#allocation11 + $0xc0] sm:$0xff]
    %v952 = vld [vmem:[#allocation11 + $0xc8] sm:$0xff]
    %v953 = vld [vmem:[#allocation11 + $0xd0] sm:$0xff]
    %v954 = vld [vmem:[#allocation11 + $0xd8] sm:$0xff]
    %v955 = vld [vmem:[#allocation11 + $0xe0] sm:$0xff]
    %v956 = vld [vmem:[#allocation11 + $0xe8] sm:$0xff]
    %v957 = vld [vmem:[#allocation11 + $0xf0] sm:$0xff]
    %v958 = vld [vmem:[#allocation11 + $0xf8] sm:$0xff]
    %v959 = vld [vmem:[#allocation11 + $0x100] sm:$0xff]
    %v960 = vld [vmem:[#allocation11 + $0x108] sm:$0xff]
    %v961 = vld [vmem:[#allocation11 + $0x110] sm:$0xff]
    %v962 = vld [vmem:[#allocation11 + $0x118] sm:$0xff]
    %v963 = vld [vmem:[#allocation11 + $0x120] sm:$0xff]
    %v964 = vld [vmem:[#allocation11 + $0x128] sm:$0xff]
    %v965 = vld [vmem:[#allocation11 + $0x130] sm:$0xff]
    %v966 = vld [vmem:[#allocation11 + $0x138] sm:$0xff]
    %v967 = vld [vmem:[#allocation11 + $0x140] sm:$0xff]
    %v968 = vld [vmem:[#allocation11 + $0x148] sm:$0xff]
    %v969 = vld [vmem:[#allocation11 + $0x150] sm:$0xff]
    %v970 = vld [vmem:[#allocation11 + $0x158] sm:$0xff]
    %v971 = vld [vmem:[#allocation11 + $0x160] sm:$0xff]
    %v972 = vld [vmem:[#allocation11 + $0x168] sm:$0xff]
    %v973 = vld [vmem:[#allocation11 + $0x170] sm:$0xff]
    %v974 = vld [vmem:[#allocation11 + $0x178] sm:$0xff]
    %v975 = vld [vmem:[#allocation11 + $0x180] sm:$0xff]
    %v976 = vld [vmem:[#allocation11 + $0x188] sm:$0xff]
    %v977 = vld [vmem:[#allocation11 + $0x190] sm:$0xff]
    %v978 = vld [vmem:[#allocation11 + $0x198] sm:$0xff]
    %v979 = vld [vmem:[#allocation11 + $0x1a0] sm:$0xff]
    %v980 = vld [vmem:[#allocation11 + $0x1a8] sm:$0xff]
    %v981 = vld [vmem:[#allocation11 + $0x1b0] sm:$0xff]
    %v982 = vld [vmem:[#allocation11 + $0x1b8] sm:$0xff]
    %v983 = vld [vmem:[#allocation11 + $0x1c0] sm:$0xff]
    %v984 = vld [vmem:[#allocation11 + $0x1c8] sm:$0xff]
    %v985 = vld [vmem:[#allocation11 + $0x1d0] sm:$0xff]
    %v986 = vld [vmem:[#allocation11 + $0x1d8] sm:$0xff]
    %v987 = vld [vmem:[#allocation11 + $0x1e0] sm:$0xff]
    %v988 = vld [vmem:[#allocation11 + $0x1e8] sm:$0xff]
    %v989 = vld [vmem:[#allocation11 + $0x1f0] sm:$0xff]
    %v990 = vld [vmem:[#allocation11 + $0x1f8] sm:$0xff]
    %v991 = vld [vmem:[#allocation11 + $0x200] sm:$0xff]
    %v992 = vld [vmem:[#allocation11 + $0x208] sm:$0xff]
    %v993 = vld [vmem:[#allocation11 + $0x210] sm:$0xff]
    %v994 = vld [vmem:[#allocation11 + $0x218] sm:$0xff]
    %v995 = vld [vmem:[#allocation11 + $0x220] sm:$0xff]
    %v996 = vld [vmem:[#allocation11 + $0x228] sm:$0xff]
    %v997 = vld [vmem:[#allocation11 + $0x230] sm:$0xff]
    %v998 = vld [vmem:[#allocation11 + $0x238] sm:$0xff]
    %v999 = vld [vmem:[#allocation11 + $0x240] sm:$0xff]
    %v1000 = vld [vmem:[#allocation11 + $0x248] sm:$0xff]
    %v1001 = vld [vmem:[#allocation11 + $0x250] sm:$0xff]
    %v1002 = vld [vmem:[#allocation11 + $0x258] sm:$0xff]
    %v1003 = vld [vmem:[#allocation11 + $0x260] sm:$0xff]
    %v1004 = vld [vmem:[#allocation11 + $0x268] sm:$0xff]
    %v1005 = vld [vmem:[#allocation11 + $0x270] sm:$0xff]
    %v1006 = vld [vmem:[#allocation11 + $0x278] sm:$0xff]
    %v1007 = vld [vmem:[#allocation11 + $0x280] sm:$0xff]
    %v1008 = vld [vmem:[#allocation11 + $0x288] sm:$0xff]
    %v1009 = vld [vmem:[#allocation11 + $0x290] sm:$0xff]
    %v1010 = vld [vmem:[#allocation11 + $0x298] sm:$0xff]
    %v1011 = vld [vmem:[#allocation11 + $0x2a0] sm:$0xff]
    %v1012 = vld [vmem:[#allocation11 + $0x2a8] sm:$0xff]
    %v1013 = vld [vmem:[#allocation11 + $0x2b0] sm:$0xff]
    %v1014 = vld [vmem:[#allocation11 + $0x2b8] sm:$0xff]
    %v1015 = vld [vmem:[#allocation11 + $0x2c0] sm:$0xff]
    %v1016 = vld [vmem:[#allocation11 + $0x2c8] sm:$0xff]
    %v1017 = vld [vmem:[#allocation11 + $0x2d0] sm:$0xff]
    %v1018 = vld [vmem:[#allocation11 + $0x2d8] sm:$0xff]
    %v1019 = vld [vmem:[#allocation11 + $0x2e0] sm:$0xff]
    %v1020 = vld [vmem:[#allocation11 + $0x2e8] sm:$0xff]
    %v1021 = vld [vmem:[#allocation11 + $0x2f0] sm:$0xff]
    %v1022 = vld [vmem:[#allocation11 + $0x2f8] sm:$0xff]
    %v1023 = vld [vmem:[#allocation11 + $0x300] sm:$0xff]
    %v1024 = vld [vmem:[#allocation11 + $0x308] sm:$0xff]
    %v1025 = vld [vmem:[#allocation11 + $0x310] sm:$0xff]
    %v1026 = vld [vmem:[#allocation11 + $0x318] sm:$0xff]
    %v1027 = vld [vmem:[#allocation11 + $0x320] sm:$0xff]
    %v1028 = vld [vmem:[#allocation11 + $0x328] sm:$0xff]
    %v1029 = vld [vmem:[#allocation11 + $0x330] sm:$0xff]
    %v1030 = vld [vmem:[#allocation11 + $0x338] sm:$0xff]
    %v1031 = vld [vmem:[#allocation11 + $0x340] sm:$0xff]
    %v1032 = vld [vmem:[#allocation11 + $0x348] sm:$0xff]
    %v1033 = vld [vmem:[#allocation11 + $0x350] sm:$0xff]
    %v1034 = vld [vmem:[#allocation11 + $0x358] sm:$0xff]
    %v1035 = vld [vmem:[#allocation11 + $0x360] sm:$0xff]
    %v1036 = vld [vmem:[#allocation11 + $0x368] sm:$0xff]
    %v1037 = vld [vmem:[#allocation11 + $0x370] sm:$0xff]
    %v1038 = vld [vmem:[#allocation11 + $0x378] sm:$0xff]
    %v1039 = vld [vmem:[#allocation11 + $0x380] sm:$0xff]
    %v1040 = vld [vmem:[#allocation11 + $0x388] sm:$0xff]
    %v1041 = vld [vmem:[#allocation11 + $0x390] sm:$0xff]
    %v1042 = vld [vmem:[#allocation11 + $0x398] sm:$0xff]
    %v1043 = vld [vmem:[#allocation11 + $0x3a0] sm:$0xff]
    %v1044 = vld [vmem:[#allocation11 + $0x3a8] sm:$0xff]
    %v1045 = vld [vmem:[#allocation11 + $0x3b0] sm:$0xff]
    %v1046 = vld [vmem:[#allocation11 + $0x3b8] sm:$0xff]
    %v1047 = vld [vmem:[#allocation11 + $0x3c0] sm:$0xff]
    %v1048 = vld [vmem:[#allocation11 + $0x3c8] sm:$0xff]
    %v1049 = vld [vmem:[#allocation11 + $0x3d0] sm:$0xff]
    %v1050 = vld [vmem:[#allocation11 + $0x3d8] sm:$0xff]
    %v1051 = vld [vmem:[#allocation11 + $0x3e0] sm:$0xff]
    %v1052 = vld [vmem:[#allocation11 + $0x3e8] sm:$0xff]
    %v1053 = vld [vmem:[#allocation11 + $0x3f0] sm:$0xff]
    %v1054 = vld [vmem:[#allocation11 + $0x3f8] sm:$0xff]
    %v1055 = vld [vmem:[#allocation11 + $0x400] sm:$0xff]
    %v1056 = vld [vmem:[#allocation11 + $0x408] sm:$0xff]
    %v1057 = vld [vmem:[#allocation11 + $0x410] sm:$0xff]
    %v1058 = vld [vmem:[#allocation11 + $0x418] sm:$0xff]
    %v1059 = vld [vmem:[#allocation11 + $0x420] sm:$0xff]
    %v1060 = vld [vmem:[#allocation11 + $0x428] sm:$0xff]
    %v1061 = vld [vmem:[#allocation11 + $0x430] sm:$0xff]
    %v1062 = vld [vmem:[#allocation11 + $0x438] sm:$0xff]
    %v1063 = vld [vmem:[#allocation11 + $0x440] sm:$0xff]
    %v1064 = vld [vmem:[#allocation11 + $0x448] sm:$0xff]
    %v1065 = vld [vmem:[#allocation11 + $0x450] sm:$0xff]
    %v1066 = vld [vmem:[#allocation11 + $0x458] sm:$0xff]
    %v1067 = vld [vmem:[#allocation11 + $0x460] sm:$0xff]
    %v1068 = vld [vmem:[#allocation11 + $0x468] sm:$0xff]
    %v1069 = vld [vmem:[#allocation11 + $0x470] sm:$0xff]
    %v1070 = vld [vmem:[#allocation11 + $0x478] sm:$0xff]
    %v1071 = vld [vmem:[#allocation11 + $0x480] sm:$0xff]
    %v1072 = vld [vmem:[#allocation11 + $0x488] sm:$0xff]
    %v1073 = vld [vmem:[#allocation11 + $0x490] sm:$0xff]
    %v1074 = vld [vmem:[#allocation11 + $0x498] sm:$0xff]
    %v1075 = vld [vmem:[#allocation11 + $0x4a0] sm:$0xff]
    %v1076 = vld [vmem:[#allocation11 + $0x4a8] sm:$0xff]
    %v1077 = vld [vmem:[#allocation11 + $0x4b0] sm:$0xff]
    %v1078 = vld [vmem:[#allocation11 + $0x4b8] sm:$0xff]
    %v1079 = vld [vmem:[#allocation11 + $0x4c0] sm:$0xff]
    %v1080 = vld [vmem:[#allocation11 + $0x4c8] sm:$0xff]
    %v1081 = vld [vmem:[#allocation11 + $0x4d0] sm:$0xff]
    %v1082 = vld [vmem:[#allocation11 + $0x4d8] sm:$0xff]
    %v1083 = vld [vmem:[#allocation11 + $0x4e0] sm:$0xff]
    %v1084 = vld [vmem:[#allocation11 + $0x4e8] sm:$0xff]
    %v1085 = vld [vmem:[#allocation11 + $0x4f0] sm:$0xff]
    %v1086 = vld [vmem:[#allocation11 + $0x4f8] sm:$0xff]
    %v1087 = vld [vmem:[#allocation11 + $0x500] sm:$0xff]
    %v1088 = vld [vmem:[#allocation11 + $0x508] sm:$0xff]
    %v1089 = vld [vmem:[#allocation11 + $0x510] sm:$0xff]
    %v1090 = vld [vmem:[#allocation11 + $0x518] sm:$0xff]
    %v1091 = vld [vmem:[#allocation11 + $0x520] sm:$0xff]
    %v1092 = vld [vmem:[#allocation11 + $0x528] sm:$0xff]
    %v1093 = vld [vmem:[#allocation11 + $0x530] sm:$0xff]
    %v1094 = vld [vmem:[#allocation11 + $0x538] sm:$0xff]
    %v1095 = vld [vmem:[#allocation11 + $0x540] sm:$0xff]
    %v1096 = vld [vmem:[#allocation11 + $0x548] sm:$0xff]
    %v1097 = vld [vmem:[#allocation11 + $0x550] sm:$0xff]
    %v1098 = vld [vmem:[#allocation11 + $0x558] sm:$0xff]
    %v1099 = vld [vmem:[#allocation11 + $0x560] sm:$0xff]
    %v1100 = vld [vmem:[#allocation11 + $0x568] sm:$0xff]
    %v1101 = vld [vmem:[#allocation11 + $0x570] sm:$0xff]
    %v1102 = vld [vmem:[#allocation11 + $0x578] sm:$0xff]
    %v1103 = vld [vmem:[#allocation11 + $0x580] sm:$0xff]
    %v1104 = vld [vmem:[#allocation11 + $0x588] sm:$0xff]
    %v1105 = vld [vmem:[#allocation11 + $0x590] sm:$0xff]
    %v1106 = vld [vmem:[#allocation11 + $0x598] sm:$0xff]
    %v1107 = vld [vmem:[#allocation11 + $0x5a0] sm:$0xff]
    %v1108 = vld [vmem:[#allocation11 + $0x5a8] sm:$0xff]
    %v1109 = vld [vmem:[#allocation11 + $0x5b0] sm:$0xff]
    %v1110 = vld [vmem:[#allocation11 + $0x5b8] sm:$0xff]
    %v1111 = vld [vmem:[#allocation11 + $0x5c0] sm:$0xff]
    %v1112 = vld [vmem:[#allocation11 + $0x5c8] sm:$0xff]
    %v1113 = vld [vmem:[#allocation11 + $0x5d0] sm:$0xff]
    %v1114 = vld [vmem:[#allocation11 + $0x5d8] sm:$0xff]
    %v1115 = vld [vmem:[#allocation11 + $0x5e0] sm:$0xff]
    %v1116 = vld [vmem:[#allocation11 + $0x5e8] sm:$0xff]
    %v1117 = vld [vmem:[#allocation11 + $0x5f0] sm:$0xff]
    %v1118 = vld [vmem:[#allocation11 + $0x5f8] sm:$0xff]
    %v1119 = vld [vmem:[#allocation13] sm:$0x3f]
    %v1121 = vlaneseq
    %v1122 = vshrl.u32 %v1121, 7
    %v1123 = vsub.s32 0, %v1122
    %v1124 = vrot.slane %v1119, %v1123
    %v1125 = vlaneseq
    %v1126 = vshrl.u32 %v1125, 7
    %v1127 = vsub.s32 1, %v1126
    %v1128 = vrot.slane %v1119, %v1127
    %v1129 = vlaneseq
    %v1130 = vshrl.u32 %v1129, 7
    %v1131 = vsub.s32 2, %v1130
    %v1132 = vrot.slane %v1119, %v1131
    %v1133 = vlaneseq
    %v1134 = vshrl.u32 %v1133, 7
    %v1135 = vsub.s32 3, %v1134
    %v1136 = vrot.slane %v1119, %v1135
    %v1137 = vlaneseq
    %v1138 = vshrl.u32 %v1137, 7
    %v1139 = vsub.s32 4, %v1138
    %v1140 = vrot.slane %v1119, %v1139
    %v1141 = vlaneseq
    %v1142 = vshrl.u32 %v1141, 7
    %v1143 = vsub.s32 5, %v1142
    %v1144 = vrot.slane %v1119, %v1143
    %v1343 = vunpack.c.l.b16 %v927
    %v1344 = vunpack.c.h.b16 %v927
    %v1345 = vunpack.c.l.b16 %v928
    %v1346 = vunpack.c.h.b16 %v928
    %v1347 = vunpack.c.l.b16 %v929
    %v1348 = vunpack.c.h.b16 %v929
    %v1349 = vunpack.c.l.b16 %v930
    %v1350 = vunpack.c.h.b16 %v930
    %v1351 = vunpack.c.l.b16 %v931
    %v1352 = vunpack.c.h.b16 %v931
    %v1353 = vunpack.c.l.b16 %v932
    %v1354 = vunpack.c.h.b16 %v932
    %v1355 = vunpack.c.l.b16 %v933
    %v1356 = vunpack.c.h.b16 %v933
    %v1357 = vunpack.c.l.b16 %v934
    %v1358 = vunpack.c.h.b16 %v934
    %v1359 = vunpack.c.l.b16 %v935
    %v1360 = vunpack.c.h.b16 %v935
    %v1361 = vunpack.c.l.b16 %v936
    %v1362 = vunpack.c.h.b16 %v936
    %v1363 = vunpack.c.l.b16 %v937
    %v1364 = vunpack.c.h.b16 %v937
    %v1365 = vunpack.c.l.b16 %v938
    %v1366 = vunpack.c.h.b16 %v938
    %v1367 = vunpack.c.l.b16 %v939
    %v1368 = vunpack.c.h.b16 %v939
    %v1369 = vunpack.c.l.b16 %v940
    %v1370 = vunpack.c.h.b16 %v940
    %v1371 = vunpack.c.l.b16 %v941
    %v1372 = vunpack.c.h.b16 %v941
    %v1373 = vunpack.c.l.b16 %v942
    %v1374 = vunpack.c.h.b16 %v942
    %v1375 = vunpack.c.l.b16 %v943
    %v1376 = vunpack.c.h.b16 %v943
    %v1377 = vunpack.c.l.b16 %v944
    %v1378 = vunpack.c.h.b16 %v944
    %v1379 = vunpack.c.l.b16 %v945
    %v1380 = vunpack.c.h.b16 %v945
    %v1381 = vunpack.c.l.b16 %v946
    %v1382 = vunpack.c.h.b16 %v946
    %v1383 = vunpack.c.l.b16 %v947
    %v1384 = vunpack.c.h.b16 %v947
    %v1385 = vunpack.c.l.b16 %v948
    %v1386 = vunpack.c.h.b16 %v948
    %v1387 = vunpack.c.l.b16 %v949
    %v1388 = vunpack.c.h.b16 %v949
    %v1389 = vunpack.c.l.b16 %v950
    %v1390 = vunpack.c.h.b16 %v950
    %v1391 = vunpack.c.l.b16 %v951
    %v1392 = vunpack.c.h.b16 %v951
    %v1393 = vunpack.c.l.b16 %v952
    %v1394 = vunpack.c.h.b16 %v952
    %v1395 = vunpack.c.l.b16 %v953
    %v1396 = vunpack.c.h.b16 %v953
    %v1397 = vunpack.c.l.b16 %v954
    %v1398 = vunpack.c.h.b16 %v954
    %v1399 = vunpack.c.l.b16 %v955
    %v1400 = vunpack.c.h.b16 %v955
    %v1401 = vunpack.c.l.b16 %v956
    %v1402 = vunpack.c.h.b16 %v956
    %v1403 = vunpack.c.l.b16 %v957
    %v1404 = vunpack.c.h.b16 %v957
    %v1405 = vunpack.c.l.b16 %v958
    %v1406 = vunpack.c.h.b16 %v958
    %v1407 = vunpack.c.l.b16 %v959
    %v1408 = vunpack.c.h.b16 %v959
    %v1409 = vunpack.c.l.b16 %v960
    %v1410 = vunpack.c.h.b16 %v960
    %v1411 = vunpack.c.l.b16 %v961
    %v1412 = vunpack.c.h.b16 %v961
    %v1413 = vunpack.c.l.b16 %v962
    %v1414 = vunpack.c.h.b16 %v962
    %v1415 = vunpack.c.l.b16 %v963
    %v1416 = vunpack.c.h.b16 %v963
    %v1417 = vunpack.c.l.b16 %v964
    %v1418 = vunpack.c.h.b16 %v964
    %v1419 = vunpack.c.l.b16 %v965
    %v1420 = vunpack.c.h.b16 %v965
    %v1421 = vunpack.c.l.b16 %v966
    %v1422 = vunpack.c.h.b16 %v966
    %v1423 = vunpack.c.l.b16 %v967
    %v1424 = vunpack.c.h.b16 %v967
    %v1425 = vunpack.c.l.b16 %v968
    %v1426 = vunpack.c.h.b16 %v968
    %v1427 = vunpack.c.l.b16 %v969
    %v1428 = vunpack.c.h.b16 %v969
    %v1429 = vunpack.c.l.b16 %v970
    %v1430 = vunpack.c.h.b16 %v970
    %v1431 = vunpack.c.l.b16 %v971
    %v1432 = vunpack.c.h.b16 %v971
    %v1433 = vunpack.c.l.b16 %v972
    %v1434 = vunpack.c.h.b16 %v972
    %v1435 = vunpack.c.l.b16 %v973
    %v1436 = vunpack.c.h.b16 %v973
    %v1437 = vunpack.c.l.b16 %v974
    %v1438 = vunpack.c.h.b16 %v974
    %v1439 = vunpack.c.l.b16 %v975
    %v1440 = vunpack.c.h.b16 %v975
    %v1441 = vunpack.c.l.b16 %v976
    %v1442 = vunpack.c.h.b16 %v976
    %v1443 = vunpack.c.l.b16 %v977
    %v1444 = vunpack.c.h.b16 %v977
    %v1445 = vunpack.c.l.b16 %v978
    %v1446 = vunpack.c.h.b16 %v978
    %v1447 = vunpack.c.l.b16 %v979
    %v1448 = vunpack.c.h.b16 %v979
    %v1449 = vunpack.c.l.b16 %v980
    %v1450 = vunpack.c.h.b16 %v980
    %v1451 = vunpack.c.l.b16 %v981
    %v1452 = vunpack.c.h.b16 %v981
    %v1453 = vunpack.c.l.b16 %v982
    %v1454 = vunpack.c.h.b16 %v982
    %v1455 = vunpack.c.l.b16 %v983
    %v1456 = vunpack.c.h.b16 %v983
    %v1457 = vunpack.c.l.b16 %v984
    %v1458 = vunpack.c.h.b16 %v984
    %v1459 = vunpack.c.l.b16 %v985
    %v1460 = vunpack.c.h.b16 %v985
    %v1461 = vunpack.c.l.b16 %v986
    %v1462 = vunpack.c.h.b16 %v986
    %v1463 = vunpack.c.l.b16 %v987
    %v1464 = vunpack.c.h.b16 %v987
    %v1465 = vunpack.c.l.b16 %v988
    %v1466 = vunpack.c.h.b16 %v988
    %v1467 = vunpack.c.l.b16 %v989
    %v1468 = vunpack.c.h.b16 %v989
    %v1469 = vunpack.c.l.b16 %v990
    %v1470 = vunpack.c.h.b16 %v990
    %v1471 = vunpack.c.l.b16 %v991
    %v1472 = vunpack.c.h.b16 %v991
    %v1473 = vunpack.c.l.b16 %v992
    %v1474 = vunpack.c.h.b16 %v992
    %v1475 = vunpack.c.l.b16 %v993
    %v1476 = vunpack.c.h.b16 %v993
    %v1477 = vunpack.c.l.b16 %v994
    %v1478 = vunpack.c.h.b16 %v994
    %v1479 = vunpack.c.l.b16 %v995
    %v1480 = vunpack.c.h.b16 %v995
    %v1481 = vunpack.c.l.b16 %v996
    %v1482 = vunpack.c.h.b16 %v996
    %v1483 = vunpack.c.l.b16 %v997
    %v1484 = vunpack.c.h.b16 %v997
    %v1485 = vunpack.c.l.b16 %v998
    %v1486 = vunpack.c.h.b16 %v998
    %v1487 = vunpack.c.l.b16 %v999
    %v1488 = vunpack.c.h.b16 %v999
    %v1489 = vunpack.c.l.b16 %v1000
    %v1490 = vunpack.c.h.b16 %v1000
    %v1491 = vunpack.c.l.b16 %v1001
    %v1492 = vunpack.c.h.b16 %v1001
    %v1493 = vunpack.c.l.b16 %v1002
    %v1494 = vunpack.c.h.b16 %v1002
    %v1495 = vunpack.c.l.b16 %v1003
    %v1496 = vunpack.c.h.b16 %v1003
    %v1497 = vunpack.c.l.b16 %v1004
    %v1498 = vunpack.c.h.b16 %v1004
    %v1499 = vunpack.c.l.b16 %v1005
    %v1500 = vunpack.c.h.b16 %v1005
    %v1501 = vunpack.c.l.b16 %v1006
    %v1502 = vunpack.c.h.b16 %v1006
    %v1503 = vunpack.c.l.b16 %v1007
    %v1504 = vunpack.c.h.b16 %v1007
    %v1505 = vunpack.c.l.b16 %v1008
    %v1506 = vunpack.c.h.b16 %v1008
    %v1507 = vunpack.c.l.b16 %v1009
    %v1508 = vunpack.c.h.b16 %v1009
    %v1509 = vunpack.c.l.b16 %v1010
    %v1510 = vunpack.c.h.b16 %v1010
    %v1511 = vunpack.c.l.b16 %v1011
    %v1512 = vunpack.c.h.b16 %v1011
    %v1513 = vunpack.c.l.b16 %v1012
    %v1514 = vunpack.c.h.b16 %v1012
    %v1515 = vunpack.c.l.b16 %v1013
    %v1516 = vunpack.c.h.b16 %v1013
    %v1517 = vunpack.c.l.b16 %v1014
    %v1518 = vunpack.c.h.b16 %v1014
    %v1519 = vunpack.c.l.b16 %v1015
    %v1520 = vunpack.c.h.b16 %v1015
    %v1521 = vunpack.c.l.b16 %v1016
    %v1522 = vunpack.c.h.b16 %v1016
    %v1523 = vunpack.c.l.b16 %v1017
    %v1524 = vunpack.c.h.b16 %v1017
    %v1525 = vunpack.c.l.b16 %v1018
    %v1526 = vunpack.c.h.b16 %v1018
    %v1527 = vunpack.c.l.b16 %v1019
    %v1528 = vunpack.c.h.b16 %v1019
    %v1529 = vunpack.c.l.b16 %v1020
    %v1530 = vunpack.c.h.b16 %v1020
    %v1531 = vunpack.c.l.b16 %v1021
    %v1532 = vunpack.c.h.b16 %v1021
    %v1533 = vunpack.c.l.b16 %v1022
    %v1534 = vunpack.c.h.b16 %v1022
    %v1535 = vunpack.c.l.b16 %v1023
    %v1536 = vunpack.c.h.b16 %v1023
    %v1537 = vunpack.c.l.b16 %v1024
    %v1538 = vunpack.c.h.b16 %v1024
    %v1539 = vunpack.c.l.b16 %v1025
    %v1540 = vunpack.c.h.b16 %v1025
    %v1541 = vunpack.c.l.b16 %v1026
    %v1542 = vunpack.c.h.b16 %v1026
    %v1543 = vunpack.c.l.b16 %v1027
    %v1544 = vunpack.c.h.b16 %v1027
    %v1545 = vunpack.c.l.b16 %v1028
    %v1546 = vunpack.c.h.b16 %v1028
    %v1547 = vunpack.c.l.b16 %v1029
    %v1548 = vunpack.c.h.b16 %v1029
    %v1549 = vunpack.c.l.b16 %v1030
    %v1550 = vunpack.c.h.b16 %v1030
    %v1551 = vunpack.c.l.b16 %v1031
    %v1552 = vunpack.c.h.b16 %v1031
    %v1553 = vunpack.c.l.b16 %v1032
    %v1554 = vunpack.c.h.b16 %v1032
    %v1555 = vunpack.c.l.b16 %v1033
    %v1556 = vunpack.c.h.b16 %v1033
    %v1557 = vunpack.c.l.b16 %v1034
    %v1558 = vunpack.c.h.b16 %v1034
    %v1559 = vunpack.c.l.b16 %v1035
    %v1560 = vunpack.c.h.b16 %v1035
    %v1561 = vunpack.c.l.b16 %v1036
    %v1562 = vunpack.c.h.b16 %v1036
    %v1563 = vunpack.c.l.b16 %v1037
    %v1564 = vunpack.c.h.b16 %v1037
    %v1565 = vunpack.c.l.b16 %v1038
    %v1566 = vunpack.c.h.b16 %v1038
    %v1567 = vunpack.c.l.b16 %v1039
    %v1568 = vunpack.c.h.b16 %v1039
    %v1569 = vunpack.c.l.b16 %v1040
    %v1570 = vunpack.c.h.b16 %v1040
    %v1571 = vunpack.c.l.b16 %v1041
    %v1572 = vunpack.c.h.b16 %v1041
    %v1573 = vunpack.c.l.b16 %v1042
    %v1574 = vunpack.c.h.b16 %v1042
    %v1575 = vunpack.c.l.b16 %v1043
    %v1576 = vunpack.c.h.b16 %v1043
    %v1577 = vunpack.c.l.b16 %v1044
    %v1578 = vunpack.c.h.b16 %v1044
    %v1579 = vunpack.c.l.b16 %v1045
    %v1580 = vunpack.c.h.b16 %v1045
    %v1581 = vunpack.c.l.b16 %v1046
    %v1582 = vunpack.c.h.b16 %v1046
    %v1583 = vunpack.c.l.b16 %v1047
    %v1584 = vunpack.c.h.b16 %v1047
    %v1585 = vunpack.c.l.b16 %v1048
    %v1586 = vunpack.c.h.b16 %v1048
    %v1587 = vunpack.c.l.b16 %v1049
    %v1588 = vunpack.c.h.b16 %v1049
    %v1589 = vunpack.c.l.b16 %v1050
    %v1590 = vunpack.c.h.b16 %v1050
    %v1591 = vunpack.c.l.b16 %v1051
    %v1592 = vunpack.c.h.b16 %v1051
    %v1593 = vunpack.c.l.b16 %v1052
    %v1594 = vunpack.c.h.b16 %v1052
    %v1595 = vunpack.c.l.b16 %v1053
    %v1596 = vunpack.c.h.b16 %v1053
    %v1597 = vunpack.c.l.b16 %v1054
    %v1598 = vunpack.c.h.b16 %v1054
    %v1599 = vunpack.c.l.b16 %v1055
    %v1600 = vunpack.c.h.b16 %v1055
    %v1601 = vunpack.c.l.b16 %v1056
    %v1602 = vunpack.c.h.b16 %v1056
    %v1603 = vunpack.c.l.b16 %v1057
    %v1604 = vunpack.c.h.b16 %v1057
    %v1605 = vunpack.c.l.b16 %v1058
    %v1606 = vunpack.c.h.b16 %v1058
    %v1607 = vunpack.c.l.b16 %v1059
    %v1608 = vunpack.c.h.b16 %v1059
    %v1609 = vunpack.c.l.b16 %v1060
    %v1610 = vunpack.c.h.b16 %v1060
    %v1611 = vunpack.c.l.b16 %v1061
    %v1612 = vunpack.c.h.b16 %v1061
    %v1613 = vunpack.c.l.b16 %v1062
    %v1614 = vunpack.c.h.b16 %v1062
    %v1615 = vunpack.c.l.b16 %v1063
    %v1616 = vunpack.c.h.b16 %v1063
    %v1617 = vunpack.c.l.b16 %v1064
    %v1618 = vunpack.c.h.b16 %v1064
    %v1619 = vunpack.c.l.b16 %v1065
    %v1620 = vunpack.c.h.b16 %v1065
    %v1621 = vunpack.c.l.b16 %v1066
    %v1622 = vunpack.c.h.b16 %v1066
    %v1623 = vunpack.c.l.b16 %v1067
    %v1624 = vunpack.c.h.b16 %v1067
    %v1625 = vunpack.c.l.b16 %v1068
    %v1626 = vunpack.c.h.b16 %v1068
    %v1627 = vunpack.c.l.b16 %v1069
    %v1628 = vunpack.c.h.b16 %v1069
    %v1629 = vunpack.c.l.b16 %v1070
    %v1630 = vunpack.c.h.b16 %v1070
    %v1631 = vunpack.c.l.b16 %v1071
    %v1632 = vunpack.c.h.b16 %v1071
    %v1633 = vunpack.c.l.b16 %v1072
    %v1634 = vunpack.c.h.b16 %v1072
    %v1635 = vunpack.c.l.b16 %v1073
    %v1636 = vunpack.c.h.b16 %v1073
    %v1637 = vunpack.c.l.b16 %v1074
    %v1638 = vunpack.c.h.b16 %v1074
    %v1639 = vunpack.c.l.b16 %v1075
    %v1640 = vunpack.c.h.b16 %v1075
    %v1641 = vunpack.c.l.b16 %v1076
    %v1642 = vunpack.c.h.b16 %v1076
    %v1643 = vunpack.c.l.b16 %v1077
    %v1644 = vunpack.c.h.b16 %v1077
    %v1645 = vunpack.c.l.b16 %v1078
    %v1646 = vunpack.c.h.b16 %v1078
    %v1647 = vunpack.c.l.b16 %v1079
    %v1648 = vunpack.c.h.b16 %v1079
    %v1649 = vunpack.c.l.b16 %v1080
    %v1650 = vunpack.c.h.b16 %v1080
    %v1651 = vunpack.c.l.b16 %v1081
    %v1652 = vunpack.c.h.b16 %v1081
    %v1653 = vunpack.c.l.b16 %v1082
    %v1654 = vunpack.c.h.b16 %v1082
    %v1655 = vunpack.c.l.b16 %v1083
    %v1656 = vunpack.c.h.b16 %v1083
    %v1657 = vunpack.c.l.b16 %v1084
    %v1658 = vunpack.c.h.b16 %v1084
    %v1659 = vunpack.c.l.b16 %v1085
    %v1660 = vunpack.c.h.b16 %v1085
    %v1661 = vunpack.c.l.b16 %v1086
    %v1662 = vunpack.c.h.b16 %v1086
    %v1663 = vunpack.c.l.b16 %v1087
    %v1664 = vunpack.c.h.b16 %v1087
    %v1665 = vunpack.c.l.b16 %v1088
    %v1666 = vunpack.c.h.b16 %v1088
    %v1667 = vunpack.c.l.b16 %v1089
    %v1668 = vunpack.c.h.b16 %v1089
    %v1669 = vunpack.c.l.b16 %v1090
    %v1670 = vunpack.c.h.b16 %v1090
    %v1671 = vunpack.c.l.b16 %v1091
    %v1672 = vunpack.c.h.b16 %v1091
    %v1673 = vunpack.c.l.b16 %v1092
    %v1674 = vunpack.c.h.b16 %v1092
    %v1675 = vunpack.c.l.b16 %v1093
    %v1676 = vunpack.c.h.b16 %v1093
    %v1677 = vunpack.c.l.b16 %v1094
    %v1678 = vunpack.c.h.b16 %v1094
    %v1679 = vunpack.c.l.b16 %v1095
    %v1680 = vunpack.c.h.b16 %v1095
    %v1681 = vunpack.c.l.b16 %v1096
    %v1682 = vunpack.c.h.b16 %v1096
    %v1683 = vunpack.c.l.b16 %v1097
    %v1684 = vunpack.c.h.b16 %v1097
    %v1685 = vunpack.c.l.b16 %v1098
    %v1686 = vunpack.c.h.b16 %v1098
    %v1687 = vunpack.c.l.b16 %v1099
    %v1688 = vunpack.c.h.b16 %v1099
    %v1689 = vunpack.c.l.b16 %v1100
    %v1690 = vunpack.c.h.b16 %v1100
    %v1691 = vunpack.c.l.b16 %v1101
    %v1692 = vunpack.c.h.b16 %v1101
    %v1693 = vunpack.c.l.b16 %v1102
    %v1694 = vunpack.c.h.b16 %v1102
    %v1695 = vunpack.c.l.b16 %v1103
    %v1696 = vunpack.c.h.b16 %v1103
    %v1697 = vunpack.c.l.b16 %v1104
    %v1698 = vunpack.c.h.b16 %v1104
    %v1699 = vunpack.c.l.b16 %v1105
    %v1700 = vunpack.c.h.b16 %v1105
    %v1701 = vunpack.c.l.b16 %v1106
    %v1702 = vunpack.c.h.b16 %v1106
    %v1703 = vunpack.c.l.b16 %v1107
    %v1704 = vunpack.c.h.b16 %v1107
    %v1705 = vunpack.c.l.b16 %v1108
    %v1706 = vunpack.c.h.b16 %v1108
    %v1707 = vunpack.c.l.b16 %v1109
    %v1708 = vunpack.c.h.b16 %v1109
    %v1709 = vunpack.c.l.b16 %v1110
    %v1710 = vunpack.c.h.b16 %v1110
    %v1711 = vunpack.c.l.b16 %v1111
    %v1712 = vunpack.c.h.b16 %v1111
    %v1713 = vunpack.c.l.b16 %v1112
    %v1714 = vunpack.c.h.b16 %v1112
    %v1715 = vunpack.c.l.b16 %v1113
    %v1716 = vunpack.c.h.b16 %v1113
    %v1717 = vunpack.c.l.b16 %v1114
    %v1718 = vunpack.c.h.b16 %v1114
    %v1719 = vunpack.c.l.b16 %v1115
    %v1720 = vunpack.c.h.b16 %v1115
    %v1721 = vunpack.c.l.b16 %v1116
    %v1722 = vunpack.c.h.b16 %v1116
    %v1723 = vunpack.c.l.b16 %v1117
    %v1724 = vunpack.c.h.b16 %v1117
    %v1725 = vunpack.c.l.b16 %v1118
    %v1726 = vunpack.c.h.b16 %v1118
    %v1727 = vpack.c.b16 %v1349, %v1343
    %v1728 = vpack.c.b16 %v1350, %v1344
    %v1729 = vpack.c.b16 %v1351, %v1345
    %v1730 = vpack.c.b16 %v1352, %v1346
    %v1731 = vpack.c.b16 %v1353, %v1347
    %v1732 = vpack.c.b16 %v1354, %v1348
    %v1733 = vpack.c.b16 %v1361, %v1355
    %v1734 = vpack.c.b16 %v1362, %v1356
    %v1735 = vpack.c.b16 %v1363, %v1357
    %v1736 = vpack.c.b16 %v1364, %v1358
    %v1737 = vpack.c.b16 %v1365, %v1359
    %v1738 = vpack.c.b16 %v1366, %v1360
    %v1739 = vpack.c.b16 %v1373, %v1367
    %v1740 = vpack.c.b16 %v1374, %v1368
    %v1741 = vpack.c.b16 %v1375, %v1369
    %v1742 = vpack.c.b16 %v1376, %v1370
    %v1743 = vpack.c.b16 %v1377, %v1371
    %v1744 = vpack.c.b16 %v1378, %v1372
    %v1745 = vpack.c.b16 %v1385, %v1379
    %v1746 = vpack.c.b16 %v1386, %v1380
    %v1747 = vpack.c.b16 %v1387, %v1381
    %v1748 = vpack.c.b16 %v1388, %v1382
    %v1749 = vpack.c.b16 %v1389, %v1383
    %v1750 = vpack.c.b16 %v1390, %v1384
    %v1751 = vpack.c.b16 %v1397, %v1391
    %v1752 = vpack.c.b16 %v1398, %v1392
    %v1753 = vpack.c.b16 %v1399, %v1393
    %v1754 = vpack.c.b16 %v1400, %v1394
    %v1755 = vpack.c.b16 %v1401, %v1395
    %v1756 = vpack.c.b16 %v1402, %v1396
    %v1757 = vpack.c.b16 %v1409, %v1403
    %v1758 = vpack.c.b16 %v1410, %v1404
    %v1759 = vpack.c.b16 %v1411, %v1405
    %v1760 = vpack.c.b16 %v1412, %v1406
    %v1761 = vpack.c.b16 %v1413, %v1407
    %v1762 = vpack.c.b16 %v1414, %v1408
    %v1763 = vpack.c.b16 %v1421, %v1415
    %v1764 = vpack.c.b16 %v1422, %v1416
    %v1765 = vpack.c.b16 %v1423, %v1417
    %v1766 = vpack.c.b16 %v1424, %v1418
    %v1767 = vpack.c.b16 %v1425, %v1419
    %v1768 = vpack.c.b16 %v1426, %v1420
    %v1769 = vpack.c.b16 %v1433, %v1427
    %v1770 = vpack.c.b16 %v1434, %v1428
    %v1771 = vpack.c.b16 %v1435, %v1429
    %v1772 = vpack.c.b16 %v1436, %v1430
    %v1773 = vpack.c.b16 %v1437, %v1431
    %v1774 = vpack.c.b16 %v1438, %v1432
    %v1775 = vpack.c.b16 %v1445, %v1439
    %v1776 = vpack.c.b16 %v1446, %v1440
    %v1777 = vpack.c.b16 %v1447, %v1441
    %v1778 = vpack.c.b16 %v1448, %v1442
    %v1779 = vpack.c.b16 %v1449, %v1443
    %v1780 = vpack.c.b16 %v1450, %v1444
    %v1781 = vpack.c.b16 %v1457, %v1451
    %v1782 = vpack.c.b16 %v1458, %v1452
    %v1783 = vpack.c.b16 %v1459, %v1453
    %v1784 = vpack.c.b16 %v1460, %v1454
    %v1785 = vpack.c.b16 %v1461, %v1455
    %v1786 = vpack.c.b16 %v1462, %v1456
    %v1787 = vpack.c.b16 %v1469, %v1463
    %v1788 = vpack.c.b16 %v1470, %v1464
    %v1789 = vpack.c.b16 %v1471, %v1465
    %v1790 = vpack.c.b16 %v1472, %v1466
    %v1791 = vpack.c.b16 %v1473, %v1467
    %v1792 = vpack.c.b16 %v1474, %v1468
    %v1793 = vpack.c.b16 %v1481, %v1475
    %v1794 = vpack.c.b16 %v1482, %v1476
    %v1795 = vpack.c.b16 %v1483, %v1477
    %v1796 = vpack.c.b16 %v1484, %v1478
    %v1797 = vpack.c.b16 %v1485, %v1479
    %v1798 = vpack.c.b16 %v1486, %v1480
    %v1799 = vpack.c.b16 %v1493, %v1487
    %v1800 = vpack.c.b16 %v1494, %v1488
    %v1801 = vpack.c.b16 %v1495, %v1489
    %v1802 = vpack.c.b16 %v1496, %v1490
    %v1803 = vpack.c.b16 %v1497, %v1491
    %v1804 = vpack.c.b16 %v1498, %v1492
    %v1805 = vpack.c.b16 %v1505, %v1499
    %v1806 = vpack.c.b16 %v1506, %v1500
    %v1807 = vpack.c.b16 %v1507, %v1501
    %v1808 = vpack.c.b16 %v1508, %v1502
    %v1809 = vpack.c.b16 %v1509, %v1503
    %v1810 = vpack.c.b16 %v1510, %v1504
    %v1811 = vpack.c.b16 %v1517, %v1511
    %v1812 = vpack.c.b16 %v1518, %v1512
    %v1813 = vpack.c.b16 %v1519, %v1513
    %v1814 = vpack.c.b16 %v1520, %v1514
    %v1815 = vpack.c.b16 %v1521, %v1515
    %v1816 = vpack.c.b16 %v1522, %v1516
    %v1817 = vpack.c.b16 %v1529, %v1523
    %v1818 = vpack.c.b16 %v1530, %v1524
    %v1819 = vpack.c.b16 %v1531, %v1525
    %v1820 = vpack.c.b16 %v1532, %v1526
    %v1821 = vpack.c.b16 %v1533, %v1527
    %v1822 = vpack.c.b16 %v1534, %v1528
    %v1823 = vpack.c.b16 %v1541, %v1535
    %v1824 = vpack.c.b16 %v1542, %v1536
    %v1825 = vpack.c.b16 %v1543, %v1537
    %v1826 = vpack.c.b16 %v1544, %v1538
    %v1827 = vpack.c.b16 %v1545, %v1539
    %v1828 = vpack.c.b16 %v1546, %v1540
    %v1829 = vpack.c.b16 %v1553, %v1547
    %v1830 = vpack.c.b16 %v1554, %v1548
    %v1831 = vpack.c.b16 %v1555, %v1549
    %v1832 = vpack.c.b16 %v1556, %v1550
    %v1833 = vpack.c.b16 %v1557, %v1551
    %v1834 = vpack.c.b16 %v1558, %v1552
    %v1835 = vpack.c.b16 %v1565, %v1559
    %v1836 = vpack.c.b16 %v1566, %v1560
    %v1837 = vpack.c.b16 %v1567, %v1561
    %v1838 = vpack.c.b16 %v1568, %v1562
    %v1839 = vpack.c.b16 %v1569, %v1563
    %v1840 = vpack.c.b16 %v1570, %v1564
    %v1841 = vpack.c.b16 %v1577, %v1571
    %v1842 = vpack.c.b16 %v1578, %v1572
    %v1843 = vpack.c.b16 %v1579, %v1573
    %v1844 = vpack.c.b16 %v1580, %v1574
    %v1845 = vpack.c.b16 %v1581, %v1575
    %v1846 = vpack.c.b16 %v1582, %v1576
    %v1847 = vpack.c.b16 %v1589, %v1583
    %v1848 = vpack.c.b16 %v1590, %v1584
    %v1849 = vpack.c.b16 %v1591, %v1585
    %v1850 = vpack.c.b16 %v1592, %v1586
    %v1851 = vpack.c.b16 %v1593, %v1587
    %v1852 = vpack.c.b16 %v1594, %v1588
    %v1853 = vpack.c.b16 %v1601, %v1595
    %v1854 = vpack.c.b16 %v1602, %v1596
    %v1855 = vpack.c.b16 %v1603, %v1597
    %v1856 = vpack.c.b16 %v1604, %v1598
    %v1857 = vpack.c.b16 %v1605, %v1599
    %v1858 = vpack.c.b16 %v1606, %v1600
    %v1859 = vpack.c.b16 %v1613, %v1607
    %v1860 = vpack.c.b16 %v1614, %v1608
    %v1861 = vpack.c.b16 %v1615, %v1609
    %v1862 = vpack.c.b16 %v1616, %v1610
    %v1863 = vpack.c.b16 %v1617, %v1611
    %v1864 = vpack.c.b16 %v1618, %v1612
    %v1865 = vpack.c.b16 %v1625, %v1619
    %v1866 = vpack.c.b16 %v1626, %v1620
    %v1867 = vpack.c.b16 %v1627, %v1621
    %v1868 = vpack.c.b16 %v1628, %v1622
    %v1869 = vpack.c.b16 %v1629, %v1623
    %v1870 = vpack.c.b16 %v1630, %v1624
    %v1871 = vpack.c.b16 %v1637, %v1631
    %v1872 = vpack.c.b16 %v1638, %v1632
    %v1873 = vpack.c.b16 %v1639, %v1633
    %v1874 = vpack.c.b16 %v1640, %v1634
    %v1875 = vpack.c.b16 %v1641, %v1635
    %v1876 = vpack.c.b16 %v1642, %v1636
    %v1877 = vpack.c.b16 %v1649, %v1643
    %v1878 = vpack.c.b16 %v1650, %v1644
    %v1879 = vpack.c.b16 %v1651, %v1645
    %v1880 = vpack.c.b16 %v1652, %v1646
    %v1881 = vpack.c.b16 %v1653, %v1647
    %v1882 = vpack.c.b16 %v1654, %v1648
    %v1883 = vpack.c.b16 %v1661, %v1655
    %v1884 = vpack.c.b16 %v1662, %v1656
    %v1885 = vpack.c.b16 %v1663, %v1657
    %v1886 = vpack.c.b16 %v1664, %v1658
    %v1887 = vpack.c.b16 %v1665, %v1659
    %v1888 = vpack.c.b16 %v1666, %v1660
    %v1889 = vpack.c.b16 %v1673, %v1667
    %v1890 = vpack.c.b16 %v1674, %v1668
    %v1891 = vpack.c.b16 %v1675, %v1669
    %v1892 = vpack.c.b16 %v1676, %v1670
    %v1893 = vpack.c.b16 %v1677, %v1671
    %v1894 = vpack.c.b16 %v1678, %v1672
    %v1895 = vpack.c.b16 %v1685, %v1679
    %v1896 = vpack.c.b16 %v1686, %v1680
    %v1897 = vpack.c.b16 %v1687, %v1681
    %v1898 = vpack.c.b16 %v1688, %v1682
    %v1899 = vpack.c.b16 %v1689, %v1683
    %v1900 = vpack.c.b16 %v1690, %v1684
    %v1901 = vpack.c.b16 %v1697, %v1691
    %v1902 = vpack.c.b16 %v1698, %v1692
    %v1903 = vpack.c.b16 %v1699, %v1693
    %v1904 = vpack.c.b16 %v1700, %v1694
    %v1905 = vpack.c.b16 %v1701, %v1695
    %v1906 = vpack.c.b16 %v1702, %v1696
    %v1907 = vpack.c.b16 %v1709, %v1703
    %v1908 = vpack.c.b16 %v1710, %v1704
    %v1909 = vpack.c.b16 %v1711, %v1705
    %v1910 = vpack.c.b16 %v1712, %v1706
    %v1911 = vpack.c.b16 %v1713, %v1707
    %v1912 = vpack.c.b16 %v1714, %v1708
    %v1913 = vpack.c.b16 %v1721, %v1715
    %v1914 = vpack.c.b16 %v1722, %v1716
    %v1915 = vpack.c.b16 %v1723, %v1717
    %v1916 = vpack.c.b16 %v1724, %v1718
    %v1917 = vpack.c.b16 %v1725, %v1719
    %v1918 = vpack.c.b16 %v1726, %v1720
    %2111 = vmatprep.subr.bf16.mxu0 %v1728
    %2112 = vmatpush1.bf16.msra.mxu0 %v1727
    %2113 = vmatprep.subr.bf16.mxu0 %v1734
    %2114 = vmatpush1.bf16.msra.mxu0 %v1733
    %2115 = vmatprep.subr.bf16.mxu0 %v1740
    %2116 = vmatpush1.bf16.msra.mxu0 %v1739
    %2117 = vmatprep.subr.bf16.mxu0 %v1746
    %2118 = vmatpush1.bf16.msra.mxu0 %v1745
    %2119 = vmatprep.subr.bf16.mxu0 %v1752
    %2120 = vmatpush1.bf16.msra.mxu0 %v1751
    %2121 = vmatprep.subr.bf16.mxu0 %v1758
    %2122 = vmatpush1.bf16.msra.mxu0 %v1757
    %2123 = vmatprep.subr.bf16.mxu0 %v1764
    %2124 = vmatpush1.bf16.msra.mxu0 %v1763
    %2125 = vmatprep.subr.bf16.mxu0 %v1770
    %2126 = vmatpush1.bf16.msra.mxu0 %v1769
    %2127 = vmatprep.subr.bf16.mxu0 %v1776
    %2128 = vmatpush1.bf16.msra.mxu0 %v1775
    %2129 = vmatprep.subr.bf16.mxu0 %v1782
    %2130 = vmatpush1.bf16.msra.mxu0 %v1781
    %2131 = vmatprep.subr.bf16.mxu0 %v1788
    %2132 = vmatpush1.bf16.msra.mxu0 %v1787
    %2133 = vmatprep.subr.bf16.mxu0 %v1794
    %2134 = vmatpush1.bf16.msra.mxu0 %v1793
    %2135 = vmatprep.subr.bf16.mxu0 %v1800
    %2136 = vmatpush1.bf16.msra.mxu0 %v1799
    %2137 = vmatprep.subr.bf16.mxu0 %v1806
    %2138 = vmatpush1.bf16.msra.mxu0 %v1805
    %2139 = vmatprep.subr.bf16.mxu0 %v1812
    %2140 = vmatpush1.bf16.msra.mxu0 %v1811
    %2141 = vmatprep.subr.bf16.mxu0 %v1818
    %2142 = vmatpush1.bf16.msra.mxu0 %v1817
    %2143 = vmatprep.mubr.bf16.mxu0 %v924
    %2144 = vmatmul.mubr.bf16.gmra.mrb[0].mxu0 %v923
    %v2145 = vpop.f32.mrb[0].mxu0
    %v2146 = vadd.f32 %v1124, %v2145
    %v2147 = vpop.f32.mrb[0].mxu0
    %v2148 = vadd.f32 %v1128, %v2147
    %v2149 = vpop.f32.mrb[0].mxu0
    %v2150 = vpop.f32.mrb[0].mxu0
    %2151 = vdwg.mxu0
    %2152 = vmatprep.subr.bf16.mxu0 %v1824
    %2153 = vmatpush1.bf16.msra.mxu0 %v1823
    %2154 = vmatprep.subr.bf16.mxu0 %v1830
    %2155 = vmatpush1.bf16.msra.mxu0 %v1829
    %2156 = vmatprep.subr.bf16.mxu0 %v1836
    %2157 = vmatpush1.bf16.msra.mxu0 %v1835
    %2158 = vmatprep.subr.bf16.mxu0 %v1842
    %2159 = vmatpush1.bf16.msra.mxu0 %v1841
    %2160 = vmatprep.subr.bf16.mxu0 %v1848
    %2161 = vmatpush1.bf16.msra.mxu0 %v1847
    %2162 = vmatprep.subr.bf16.mxu0 %v1854
    %2163 = vmatpush1.bf16.msra.mxu0 %v1853
    %2164 = vmatprep.subr.bf16.mxu0 %v1860
    %2165 = vmatpush1.bf16.msra.mxu0 %v1859
    %2166 = vmatprep.subr.bf16.mxu0 %v1866
    %2167 = vmatpush1.bf16.msra.mxu0 %v1865
    %2168 = vmatprep.subr.bf16.mxu0 %v1872
    %2169 = vmatpush1.bf16.msra.mxu0 %v1871
    %2170 = vmatprep.subr.bf16.mxu0 %v1878
    %2171 = vmatpush1.bf16.msra.mxu0 %v1877
    %2172 = vmatprep.subr.bf16.mxu0 %v1884
    %2173 = vmatpush1.bf16.msra.mxu0 %v1883
    %2174 = vmatprep.subr.bf16.mxu0 %v1890
    %2175 = vmatpush1.bf16.msra.mxu0 %v1889
    %2176 = vmatprep.subr.bf16.mxu0 %v1896
    %2177 = vmatpush1.bf16.msra.mxu0 %v1895
    %2178 = vmatprep.subr.bf16.mxu0 %v1902
    %2179 = vmatpush1.bf16.msra.mxu0 %v1901
    %2180 = vmatprep.subr.bf16.mxu0 %v1908
    %2181 = vmatpush1.bf16.msra.mxu0 %v1907
    %2182 = vmatprep.subr.bf16.mxu0 %v1914
    %2183 = vmatpush1.bf16.msra.mxu0 %v1913
    %2184 = vmatprep.mubr.bf16.mxu0 %v926
    %2185 = vmatmul.mubr.bf16.gmra.mrb[0].mxu0 %v925
    %v2186 = vpop.f32.mrb[0].mxu0
    %v2187 = vadd.f32 %v2146, %v2186
    %v2188 = vpop.f32.mrb[0].mxu0
    %v2189 = vadd.f32 %v2148, %v2188
    %v2190 = vpop.f32.mrb[0].mxu0
    %v2191 = vpop.f32.mrb[0].mxu0
    %2192 = vdwg.mxu0
    %2193 = vmatprep.subr.bf16.mxu0 %v1730
    %2194 = vmatpush1.bf16.msra.mxu0 %v1729
    %2195 = vmatprep.subr.bf16.mxu0 %v1736
    %2196 = vmatpush1.bf16.msra.mxu0 %v1735
    %2197 = vmatprep.subr.bf16.mxu0 %v1742
    %2198 = vmatpush1.bf16.msra.mxu0 %v1741
    %2199 = vmatprep.subr.bf16.mxu0 %v1748
    %2200 = vmatpush1.bf16.msra.mxu0 %v1747
    %2201 = vmatprep.subr.bf16.mxu0 %v1754
    %2202 = vmatpush1.bf16.msra.mxu0 %v1753
    %2203 = vmatprep.subr.bf16.mxu0 %v1760
    %2204 = vmatpush1.bf16.msra.mxu0 %v1759
    %2205 = vmatprep.subr.bf16.mxu0 %v1766
    %2206 = vmatpush1.bf16.msra.mxu0 %v1765
    %2207 = vmatprep.subr.bf16.mxu0 %v1772
    %2208 = vmatpush1.bf16.msra.mxu0 %v1771
    %2209 = vmatprep.subr.bf16.mxu0 %v1778
    %2210 = vmatpush1.bf16.msra.mxu0 %v1777
    %2211 = vmatprep.subr.bf16.mxu0 %v1784
    %2212 = vmatpush1.bf16.msra.mxu0 %v1783
    %2213 = vmatprep.subr.bf16.mxu0 %v1790
    %2214 = vmatpush1.bf16.msra.mxu0 %v1789
    %2215 = vmatprep.subr.bf16.mxu0 %v1796
    %2216 = vmatpush1.bf16.msra.mxu0 %v1795
    %2217 = vmatprep.subr.bf16.mxu0 %v1802
    %2218 = vmatpush1.bf16.msra.mxu0 %v1801
    %2219 = vmatprep.subr.bf16.mxu0 %v1808
    %2220 = vmatpush1.bf16.msra.mxu0 %v1807
    %2221 = vmatprep.subr.bf16.mxu0 %v1814
    %2222 = vmatpush1.bf16.msra.mxu0 %v1813
    %2223 = vmatprep.subr.bf16.mxu0 %v1820
    %2224 = vmatpush1.bf16.msra.mxu0 %v1819
    %2225 = vmatprep.mubr.bf16.mxu0 %v924
    %2226 = vmatmul.mubr.bf16.gmra.mrb[0].mxu0 %v923
    %v2227 = vpop.f32.mrb[0].mxu0
    %v2228 = vadd.f32 %v1132, %v2227
    %v2229 = vpop.f32.mrb[0].mxu0
    %v2230 = vadd.f32 %v1136, %v2229
    %v2231 = vpop.f32.mrb[0].mxu0
    %v2232 = vpop.f32.mrb[0].mxu0
    %2233 = vdwg.mxu0
    %2234 = vmatprep.subr.bf16.mxu0 %v1826
    %2235 = vmatpush1.bf16.msra.mxu0 %v1825
    %2236 = vmatprep.subr.bf16.mxu0 %v1832
    %2237 = vmatpush1.bf16.msra.mxu0 %v1831
    %2238 = vmatprep.subr.bf16.mxu0 %v1838
    %2239 = vmatpush1.bf16.msra.mxu0 %v1837
    %2240 = vmatprep.subr.bf16.mxu0 %v1844
    %2241 = vmatpush1.bf16.msra.mxu0 %v1843
    %2242 = vmatprep.subr.bf16.mxu0 %v1850
    %2243 = vmatpush1.bf16.msra.mxu0 %v1849
    %2244 = vmatprep.subr.bf16.mxu0 %v1856
    %2245 = vmatpush1.bf16.msra.mxu0 %v1855
    %2246 = vmatprep.subr.bf16.mxu0 %v1862
    %2247 = vmatpush1.bf16.msra.mxu0 %v1861
    %2248 = vmatprep.subr.bf16.mxu0 %v1868
    %2249 = vmatpush1.bf16.msra.mxu0 %v1867
    %2250 = vmatprep.subr.bf16.mxu0 %v1874
    %2251 = vmatpush1.bf16.msra.mxu0 %v1873
    %2252 = vmatprep.subr.bf16.mxu0 %v1880
    %2253 = vmatpush1.bf16.msra.mxu0 %v1879
    %2254 = vmatprep.subr.bf16.mxu0 %v1886
    %2255 = vmatpush1.bf16.msra.mxu0 %v1885
    %2256 = vmatprep.subr.bf16.mxu0 %v1892
    %2257 = vmatpush1.bf16.msra.mxu0 %v1891
    %2258 = vmatprep.subr.bf16.mxu0 %v1898
    %2259 = vmatpush1.bf16.msra.mxu0 %v1897
    %2260 = vmatprep.subr.bf16.mxu0 %v1904
    %2261 = vmatpush1.bf16.msra.mxu0 %v1903
    %2262 = vmatprep.subr.bf16.mxu0 %v1910
    %2263 = vmatpush1.bf16.msra.mxu0 %v1909
    %2264 = vmatprep.subr.bf16.mxu0 %v1916
    %2265 = vmatpush1.bf16.msra.mxu0 %v1915
    %2266 = vmatprep.mubr.bf16.mxu0 %v926
    %2267 = vmatmul.mubr.bf16.gmra.mrb[0].mxu0 %v925
    %v2268 = vpop.f32.mrb[0].mxu0
    %v2269 = vadd.f32 %v2228, %v2268
    %v2270 = vpop.f32.mrb[0].mxu0
    %v2271 = vadd.f32 %v2230, %v2270
    %v2272 = vpop.f32.mrb[0].mxu0
    %v2273 = vpop.f32.mrb[0].mxu0
    %2274 = vdwg.mxu0
    %2275 = vmatprep.subr.bf16.mxu0 %v1732
    %2276 = vmatpush1.bf16.msra.mxu0 %v1731
    %2277 = vmatprep.subr.bf16.mxu0 %v1738
    %2278 = vmatpush1.bf16.msra.mxu0 %v1737
    %2279 = vmatprep.subr.bf16.mxu0 %v1744
    %2280 = vmatpush1.bf16.msra.mxu0 %v1743
    %2281 = vmatprep.subr.bf16.mxu0 %v1750
    %2282 = vmatpush1.bf16.msra.mxu0 %v1749
    %2283 = vmatprep.subr.bf16.mxu0 %v1756
    %2284 = vmatpush1.bf16.msra.mxu0 %v1755
    %2285 = vmatprep.subr.bf16.mxu0 %v1762
    %2286 = vmatpush1.bf16.msra.mxu0 %v1761
    %2287 = vmatprep.subr.bf16.mxu0 %v1768
    %2288 = vmatpush1.bf16.msra.mxu0 %v1767
    %2289 = vmatprep.subr.bf16.mxu0 %v1774
    %2290 = vmatpush1.bf16.msra.mxu0 %v1773
    %2291 = vmatprep.subr.bf16.mxu0 %v1780
    %2292 = vmatpush1.bf16.msra.mxu0 %v1779
    %2293 = vmatprep.subr.bf16.mxu0 %v1786
    %2294 = vmatpush1.bf16.msra.mxu0 %v1785
    %2295 = vmatprep.subr.bf16.mxu0 %v1792
    %2296 = vmatpush1.bf16.msra.mxu0 %v1791
    %2297 = vmatprep.subr.bf16.mxu0 %v1798
    %2298 = vmatpush1.bf16.msra.mxu0 %v1797
    %2299 = vmatprep.subr.bf16.mxu0 %v1804
    %2300 = vmatpush1.bf16.msra.mxu0 %v1803
    %2301 = vmatprep.subr.bf16.mxu0 %v1810
    %2302 = vmatpush1.bf16.msra.mxu0 %v1809
    %2303 = vmatprep.subr.bf16.mxu0 %v1816
    %2304 = vmatpush1.bf16.msra.mxu0 %v1815
    %2305 = vmatprep.subr.bf16.mxu0 %v1822
    %2306 = vmatpush1.bf16.msra.mxu0 %v1821
    %2307 = vmatprep.mubr.bf16.mxu0 %v924
    %2308 = vmatmul.mubr.bf16.gmra.mrb[0].mxu0 %v923
    %v2309 = vpop.f32.mrb[0].mxu0
    %v2310 = vadd.f32 %v1140, %v2309
    %v2311 = vpop.f32.mrb[0].mxu0
    %v2312 = vadd.f32 %v1144, %v2311
    %v2313 = vpop.f32.mrb[0].mxu0
    %v2314 = vpop.f32.mrb[0].mxu0
    %2315 = vdwg.mxu0
    %2316 = vmatprep.subr.bf16.mxu0 %v1828
    %2317 = vmatpush1.bf16.msra.mxu0 %v1827
    %2318 = vmatprep.subr.bf16.mxu0 %v1834
    %2319 = vmatpush1.bf16.msra.mxu0 %v1833
    %2320 = vmatprep.subr.bf16.mxu0 %v1840
    %2321 = vmatpush1.bf16.msra.mxu0 %v1839
    %2322 = vmatprep.subr.bf16.mxu0 %v1846
    %2323 = vmatpush1.bf16.msra.mxu0 %v1845
    %2324 = vmatprep.subr.bf16.mxu0 %v1852
    %2325 = vmatpush1.bf16.msra.mxu0 %v1851
    %2326 = vmatprep.subr.bf16.mxu0 %v1858
    %2327 = vmatpush1.bf16.msra.mxu0 %v1857
    %2328 = vmatprep.subr.bf16.mxu0 %v1864
    %2329 = vmatpush1.bf16.msra.mxu0 %v1863
    %2330 = vmatprep.subr.bf16.mxu0 %v1870
    %2331 = vmatpush1.bf16.msra.mxu0 %v1869
    %2332 = vmatprep.subr.bf16.mxu0 %v1876
    %2333 = vmatpush1.bf16.msra.mxu0 %v1875
    %2334 = vmatprep.subr.bf16.mxu0 %v1882
    %2335 = vmatpush1.bf16.msra.mxu0 %v1881
    %2336 = vmatprep.subr.bf16.mxu0 %v1888
    %2337 = vmatpush1.bf16.msra.mxu0 %v1887
    %2338 = vmatprep.subr.bf16.mxu0 %v1894
    %2339 = vmatpush1.bf16.msra.mxu0 %v1893
    %2340 = vmatprep.subr.bf16.mxu0 %v1900
    %2341 = vmatpush1.bf16.msra.mxu0 %v1899
    %2342 = vmatprep.subr.bf16.mxu0 %v1906
    %2343 = vmatpush1.bf16.msra.mxu0 %v1905
    %2344 = vmatprep.subr.bf16.mxu0 %v1912
    %2345 = vmatpush1.bf16.msra.mxu0 %v1911
    %2346 = vmatprep.subr.bf16.mxu0 %v1918
    %2347 = vmatpush1.bf16.msra.mxu0 %v1917
    %2348 = vmatprep.mubr.bf16.mxu0 %v926
    %2349 = vmatmul.mubr.bf16.gmra.mrb[0].mxu0 %v925
    %v2350 = vpop.f32.mrb[0].mxu0
    %v2351 = vadd.f32 %v2310, %v2350
    %v2352 = vpop.f32.mrb[0].mxu0
    %v2353 = vadd.f32 %v2312, %v2352
    %v2354 = vpop.f32.mrb[0].mxu0
    %v2355 = vpop.f32.mrb[0].mxu0
    %2356 = vdwg.mxu0
    %v2357 = vmul.f32 %v2187, 0.1
    %v2358 = vmul.f32 %v2189, 0.1
    %v2359 = vmul.f32 %v2269, 0.1
    %v2360 = vmul.f32 %v2271, 0.1
    %v2361 = vmul.f32 %v2351, 0.1
    %v2362 = vmul.f32 %v2353, 0.1
    %v2363 = vmax.f32 %v2187, %v2357
    %v2364 = vmax.f32 %v2189, %v2358
    %v2365 = vmax.f32 %v2269, %v2359
    %v2366 = vmax.f32 %v2271, %v2360
    %v2367 = vmax.f32 %v2351, %v2361
    %v2368 = vmax.f32 %v2353, %v2362
    %v2369 = vpack.c.bf16 %v2363, %v2363
    %v2370 = vpack.c.bf16 %v2364, %v2364
    %v2371 = vpack.c.bf16 %v2365, %v2365
    %v2372 = vpack.c.bf16 %v2366, %v2366
    %v2373 = vpack.c.bf16 %v2367, %v2367
    %v2374 = vpack.c.bf16 %v2368, %v2368
    %v2375 = vld [vmem:[#allocation14] sm:$0xff]
    %v2376 = vld [vmem:[#allocation14 + $0x8] sm:$0xff]
    %v2377 = vld [vmem:[#allocation14 + $0x10] sm:$0xff]
    %v2378 = vld [vmem:[#allocation14 + $0x18] sm:$0xff]
    %v2379 = vld [vmem:[#allocation14 + $0x20] sm:$0xff]
    %v2380 = vld [vmem:[#allocation14 + $0x28] sm:$0xff]
    %v2381 = vld [vmem:[#allocation14 + $0x30] sm:$0xff]
    %v2382 = vld [vmem:[#allocation14 + $0x38] sm:$0xff]
    %v2383 = vld [vmem:[#allocation14 + $0x40] sm:$0xff]
    %v2384 = vld [vmem:[#allocation14 + $0x48] sm:$0xff]
    %v2385 = vld [vmem:[#allocation14 + $0x50] sm:$0xff]
    %v2386 = vld [vmem:[#allocation14 + $0x58] sm:$0xff]
    %v2387 = vld [vmem:[#allocation14 + $0x60] sm:$0xff]
    %v2388 = vld [vmem:[#allocation14 + $0x68] sm:$0xff]
    %v2389 = vld [vmem:[#allocation14 + $0x70] sm:$0xff]
    %v2390 = vld [vmem:[#allocation14 + $0x78] sm:$0xff]
    %v2391 = vld [vmem:[#allocation14 + $0x80] sm:$0xff]
    %v2392 = vld [vmem:[#allocation14 + $0x88] sm:$0xff]
    %v2393 = vld [vmem:[#allocation14 + $0x90] sm:$0xff]
    %v2394 = vld [vmem:[#allocation14 + $0x98] sm:$0xff]
    %v2395 = vld [vmem:[#allocation14 + $0xa0] sm:$0xff]
    %v2396 = vld [vmem:[#allocation14 + $0xa8] sm:$0xff]
    %v2397 = vld [vmem:[#allocation14 + $0xb0] sm:$0xff]
    %v2398 = vld [vmem:[#allocation14 + $0xb8] sm:$0xff]
    %v2399 = vld [vmem:[#allocation14 + $0xc0] sm:$0xff]
    %v2400 = vld [vmem:[#allocation14 + $0xc8] sm:$0xff]
    %v2401 = vld [vmem:[#allocation14 + $0xd0] sm:$0xff]
    %v2402 = vld [vmem:[#allocation14 + $0xd8] sm:$0xff]
    %v2403 = vld [vmem:[#allocation14 + $0xe0] sm:$0xff]
    %v2404 = vld [vmem:[#allocation14 + $0xe8] sm:$0xff]
    %v2405 = vld [vmem:[#allocation14 + $0xf0] sm:$0xff]
    %v2406 = vld [vmem:[#allocation14 + $0xf8] sm:$0xff]
    %v2407 = vld [vmem:[#allocation14 + $0x100] sm:$0xff]
    %v2408 = vld [vmem:[#allocation14 + $0x108] sm:$0xff]
    %v2409 = vld [vmem:[#allocation14 + $0x110] sm:$0xff]
    %v2410 = vld [vmem:[#allocation14 + $0x118] sm:$0xff]
    %v2411 = vld [vmem:[#allocation14 + $0x120] sm:$0xff]
    %v2412 = vld [vmem:[#allocation14 + $0x128] sm:$0xff]
    %v2413 = vld [vmem:[#allocation14 + $0x130] sm:$0xff]
    %v2414 = vld [vmem:[#allocation14 + $0x138] sm:$0xff]
    %v2415 = vld [vmem:[#allocation14 + $0x140] sm:$0xff]
    %v2416 = vld [vmem:[#allocation14 + $0x148] sm:$0xff]
    %v2417 = vld [vmem:[#allocation14 + $0x150] sm:$0xff]
    %v2418 = vld [vmem:[#allocation14 + $0x158] sm:$0xff]
    %v2419 = vld [vmem:[#allocation14 + $0x160] sm:$0xff]
    %v2420 = vld [vmem:[#allocation14 + $0x168] sm:$0xff]
    %v2421 = vld [vmem:[#allocation14 + $0x170] sm:$0xff]
    %v2422 = vld [vmem:[#allocation14 + $0x178] sm:$0xff]
    %v2423 = vld [vmem:[#allocation14 + $0x180] sm:$0xff]
    %v2424 = vld [vmem:[#allocation14 + $0x188] sm:$0xff]
    %v2425 = vld [vmem:[#allocation14 + $0x190] sm:$0xff]
    %v2426 = vld [vmem:[#allocation14 + $0x198] sm:$0xff]
    %v2427 = vld [vmem:[#allocation14 + $0x1a0] sm:$0xff]
    %v2428 = vld [vmem:[#allocation14 + $0x1a8] sm:$0xff]
    %v2429 = vld [vmem:[#allocation14 + $0x1b0] sm:$0xff]
    %v2430 = vld [vmem:[#allocation14 + $0x1b8] sm:$0xff]
    %v2431 = vld [vmem:[#allocation14 + $0x1c0] sm:$0xff]
    %v2432 = vld [vmem:[#allocation14 + $0x1c8] sm:$0xff]
    %v2433 = vld [vmem:[#allocation14 + $0x1d0] sm:$0xff]
    %v2434 = vld [vmem:[#allocation14 + $0x1d8] sm:$0xff]
    %v2435 = vld [vmem:[#allocation14 + $0x1e0] sm:$0xff]
    %v2436 = vld [vmem:[#allocation14 + $0x1e8] sm:$0xff]
    %v2437 = vld [vmem:[#allocation14 + $0x1f0] sm:$0xff]
    %v2438 = vld [vmem:[#allocation14 + $0x1f8] sm:$0xff]
    %v2439 = vld [vmem:[#allocation14 + $0x200] sm:$0xff]
    %v2440 = vld [vmem:[#allocation14 + $0x208] sm:$0xff]
    %v2441 = vld [vmem:[#allocation14 + $0x210] sm:$0xff]
    %v2442 = vld [vmem:[#allocation14 + $0x218] sm:$0xff]
    %v2443 = vld [vmem:[#allocation14 + $0x220] sm:$0xff]
    %v2444 = vld [vmem:[#allocation14 + $0x228] sm:$0xff]
    %v2445 = vld [vmem:[#allocation14 + $0x230] sm:$0xff]
    %v2446 = vld [vmem:[#allocation14 + $0x238] sm:$0xff]
    %v2447 = vld [vmem:[#allocation14 + $0x240] sm:$0xff]
    %v2448 = vld [vmem:[#allocation14 + $0x248] sm:$0xff]
    %v2449 = vld [vmem:[#allocation14 + $0x250] sm:$0xff]
    %v2450 = vld [vmem:[#allocation14 + $0x258] sm:$0xff]
    %v2451 = vld [vmem:[#allocation14 + $0x260] sm:$0xff]
    %v2452 = vld [vmem:[#allocation14 + $0x268] sm:$0xff]
    %v2453 = vld [vmem:[#allocation14 + $0x270] sm:$0xff]
    %v2454 = vld [vmem:[#allocation14 + $0x278] sm:$0xff]
    %v2455 = vld [vmem:[#allocation14 + $0x280] sm:$0xff]
    %v2456 = vld [vmem:[#allocation14 + $0x288] sm:$0xff]
    %v2457 = vld [vmem:[#allocation14 + $0x290] sm:$0xff]
    %v2458 = vld [vmem:[#allocation14 + $0x298] sm:$0xff]
    %v2459 = vld [vmem:[#allocation14 + $0x2a0] sm:$0xff]
    %v2460 = vld [vmem:[#allocation14 + $0x2a8] sm:$0xff]
    %v2461 = vld [vmem:[#allocation14 + $0x2b0] sm:$0xff]
    %v2462 = vld [vmem:[#allocation14 + $0x2b8] sm:$0xff]
    %v2463 = vld [vmem:[#allocation14 + $0x2c0] sm:$0xff]
    %v2464 = vld [vmem:[#allocation14 + $0x2c8] sm:$0xff]
    %v2465 = vld [vmem:[#allocation14 + $0x2d0] sm:$0xff]
    %v2466 = vld [vmem:[#allocation14 + $0x2d8] sm:$0xff]
    %v2467 = vld [vmem:[#allocation14 + $0x2e0] sm:$0xff]
    %v2468 = vld [vmem:[#allocation14 + $0x2e8] sm:$0xff]
    %v2469 = vld [vmem:[#allocation14 + $0x2f0] sm:$0xff]
    %v2470 = vld [vmem:[#allocation14 + $0x2f8] sm:$0xff]
    %v2471 = vld [vmem:[#allocation14 + $0x300] sm:$0xff]
    %v2472 = vld [vmem:[#allocation14 + $0x308] sm:$0xff]
    %v2473 = vld [vmem:[#allocation14 + $0x310] sm:$0xff]
    %v2474 = vld [vmem:[#allocation14 + $0x318] sm:$0xff]
    %v2475 = vld [vmem:[#allocation14 + $0x320] sm:$0xff]
    %v2476 = vld [vmem:[#allocation14 + $0x328] sm:$0xff]
    %v2477 = vld [vmem:[#allocation14 + $0x330] sm:$0xff]
    %v2478 = vld [vmem:[#allocation14 + $0x338] sm:$0xff]
    %v2479 = vld [vmem:[#allocation14 + $0x340] sm:$0xff]
    %v2480 = vld [vmem:[#allocation14 + $0x348] sm:$0xff]
    %v2481 = vld [vmem:[#allocation14 + $0x350] sm:$0xff]
    %v2482 = vld [vmem:[#allocation14 + $0x358] sm:$0xff]
    %v2483 = vld [vmem:[#allocation14 + $0x360] sm:$0xff]
    %v2484 = vld [vmem:[#allocation14 + $0x368] sm:$0xff]
    %v2485 = vld [vmem:[#allocation14 + $0x370] sm:$0xff]
    %v2486 = vld [vmem:[#allocation14 + $0x378] sm:$0xff]
    %v2487 = vld [vmem:[#allocation14 + $0x380] sm:$0xff]
    %v2488 = vld [vmem:[#allocation14 + $0x388] sm:$0xff]
    %v2489 = vld [vmem:[#allocation14 + $0x390] sm:$0xff]
    %v2490 = vld [vmem:[#allocation14 + $0x398] sm:$0xff]
    %v2491 = vld [vmem:[#allocation14 + $0x3a0] sm:$0xff]
    %v2492 = vld [vmem:[#allocation14 + $0x3a8] sm:$0xff]
    %v2493 = vld [vmem:[#allocation14 + $0x3b0] sm:$0xff]
    %v2494 = vld [vmem:[#allocation14 + $0x3b8] sm:$0xff]
    %v2495 = vld [vmem:[#allocation14 + $0x3c0] sm:$0xff]
    %v2496 = vld [vmem:[#allocation14 + $0x3c8] sm:$0xff]
    %v2497 = vld [vmem:[#allocation14 + $0x3d0] sm:$0xff]
    %v2498 = vld [vmem:[#allocation14 + $0x3d8] sm:$0xff]
    %v2499 = vld [vmem:[#allocation14 + $0x3e0] sm:$0xff]
    %v2500 = vld [vmem:[#allocation14 + $0x3e8] sm:$0xff]
    %v2501 = vld [vmem:[#allocation14 + $0x3f0] sm:$0xff]
    %v2502 = vld [vmem:[#allocation14 + $0x3f8] sm:$0xff]
    %v2503 = vld [vmem:[#allocation14 + $0x400] sm:$0xff]
    %v2504 = vld [vmem:[#allocation14 + $0x408] sm:$0xff]
    %v2505 = vld [vmem:[#allocation14 + $0x410] sm:$0xff]
    %v2506 = vld [vmem:[#allocation14 + $0x418] sm:$0xff]
    %v2507 = vld [vmem:[#allocation14 + $0x420] sm:$0xff]
    %v2508 = vld [vmem:[#allocation14 + $0x428] sm:$0xff]
    %v2509 = vld [vmem:[#allocation14 + $0x430] sm:$0xff]
    %v2510 = vld [vmem:[#allocation14 + $0x438] sm:$0xff]
    %v2511 = vld [vmem:[#allocation14 + $0x440] sm:$0xff]
    %v2512 = vld [vmem:[#allocation14 + $0x448] sm:$0xff]
    %v2513 = vld [vmem:[#allocation14 + $0x450] sm:$0xff]
    %v2514 = vld [vmem:[#allocation14 + $0x458] sm:$0xff]
    %v2515 = vld [vmem:[#allocation14 + $0x460] sm:$0xff]
    %v2516 = vld [vmem:[#allocation14 + $0x468] sm:$0xff]
    %v2517 = vld [vmem:[#allocation14 + $0x470] sm:$0xff]
    %v2518 = vld [vmem:[#allocation14 + $0x478] sm:$0xff]
    %v2519 = vld [vmem:[#allocation14 + $0x480] sm:$0xff]
    %v2520 = vld [vmem:[#allocation14 + $0x488] sm:$0xff]
    %v2521 = vld [vmem:[#allocation14 + $0x490] sm:$0xff]
    %v2522 = vld [vmem:[#allocation14 + $0x498] sm:$0xff]
    %v2523 = vld [vmem:[#allocation14 + $0x4a0] sm:$0xff]
    %v2524 = vld [vmem:[#allocation14 + $0x4a8] sm:$0xff]
    %v2525 = vld [vmem:[#allocation14 + $0x4b0] sm:$0xff]
    %v2526 = vld [vmem:[#allocation14 + $0x4b8] sm:$0xff]
    %v2527 = vld [vmem:[#allocation14 + $0x4c0] sm:$0xff]
    %v2528 = vld [vmem:[#allocation14 + $0x4c8] sm:$0xff]
    %v2529 = vld [vmem:[#allocation14 + $0x4d0] sm:$0xff]
    %v2530 = vld [vmem:[#allocation14 + $0x4d8] sm:$0xff]
    %v2531 = vld [vmem:[#allocation14 + $0x4e0] sm:$0xff]
    %v2532 = vld [vmem:[#allocation14 + $0x4e8] sm:$0xff]
    %v2533 = vld [vmem:[#allocation14 + $0x4f0] sm:$0xff]
    %v2534 = vld [vmem:[#allocation14 + $0x4f8] sm:$0xff]
    %v2535 = vld [vmem:[#allocation14 + $0x500] sm:$0xff]
    %v2536 = vld [vmem:[#allocation14 + $0x508] sm:$0xff]
    %v2537 = vld [vmem:[#allocation14 + $0x510] sm:$0xff]
    %v2538 = vld [vmem:[#allocation14 + $0x518] sm:$0xff]
    %v2539 = vld [vmem:[#allocation14 + $0x520] sm:$0xff]
    %v2540 = vld [vmem:[#allocation14 + $0x528] sm:$0xff]
    %v2541 = vld [vmem:[#allocation14 + $0x530] sm:$0xff]
    %v2542 = vld [vmem:[#allocation14 + $0x538] sm:$0xff]
    %v2543 = vld [vmem:[#allocation14 + $0x540] sm:$0xff]
    %v2544 = vld [vmem:[#allocation14 + $0x548] sm:$0xff]
    %v2545 = vld [vmem:[#allocation14 + $0x550] sm:$0xff]
    %v2546 = vld [vmem:[#allocation14 + $0x558] sm:$0xff]
    %v2547 = vld [vmem:[#allocation14 + $0x560] sm:$0xff]
    %v2548 = vld [vmem:[#allocation14 + $0x568] sm:$0xff]
    %v2549 = vld [vmem:[#allocation14 + $0x570] sm:$0xff]
    %v2550 = vld [vmem:[#allocation14 + $0x578] sm:$0xff]
    %v2551 = vld [vmem:[#allocation14 + $0x580] sm:$0xff]
    %v2552 = vld [vmem:[#allocation14 + $0x588] sm:$0xff]
    %v2553 = vld [vmem:[#allocation14 + $0x590] sm:$0xff]
    %v2554 = vld [vmem:[#allocation14 + $0x598] sm:$0xff]
    %v2555 = vld [vmem:[#allocation14 + $0x5a0] sm:$0xff]
    %v2556 = vld [vmem:[#allocation14 + $0x5a8] sm:$0xff]
    %v2557 = vld [vmem:[#allocation14 + $0x5b0] sm:$0xff]
    %v2558 = vld [vmem:[#allocation14 + $0x5b8] sm:$0xff]
    %v2559 = vld [vmem:[#allocation14 + $0x5c0] sm:$0xff]
    %v2560 = vld [vmem:[#allocation14 + $0x5c8] sm:$0xff]
    %v2561 = vld [vmem:[#allocation14 + $0x5d0] sm:$0xff]
    %v2562 = vld [vmem:[#allocation14 + $0x5d8] sm:$0xff]
    %v2563 = vld [vmem:[#allocation14 + $0x5e0] sm:$0xff]
    %v2564 = vld [vmem:[#allocation14 + $0x5e8] sm:$0xff]
    %v2565 = vld [vmem:[#allocation14 + $0x5f0] sm:$0xff]
    %v2566 = vld [vmem:[#allocation14 + $0x5f8] sm:$0xff]
    %v2567 = vld [vmem:[#allocation16] sm:$0xf]
    %v2569 = vlaneseq
    %v2570 = vshrl.u32 %v2569, 7
    %v2571 = vsub.s32 0, %v2570
    %v2572 = vrot.slane %v2567, %v2571
    %v2573 = vlaneseq
    %v2574 = vshrl.u32 %v2573, 7
    %v2575 = vsub.s32 1, %v2574
    %v2576 = vrot.slane %v2567, %v2575
    %v2577 = vlaneseq
    %v2578 = vshrl.u32 %v2577, 7
    %v2579 = vsub.s32 2, %v2578
    %v2580 = vrot.slane %v2567, %v2579
    %v2581 = vlaneseq
    %v2582 = vshrl.u32 %v2581, 7
    %v2583 = vsub.s32 3, %v2582
    %v2584 = vrot.slane %v2567, %v2583
    %v2781 = vunpack.c.l.b16 %v2375
    %v2782 = vunpack.c.h.b16 %v2375
    %v2783 = vunpack.c.l.b16 %v2376
    %v2784 = vunpack.c.h.b16 %v2376
    %v2785 = vunpack.c.l.b16 %v2377
    %v2786 = vunpack.c.h.b16 %v2377
    %v2787 = vunpack.c.l.b16 %v2378
    %v2788 = vunpack.c.h.b16 %v2378
    %v2789 = vunpack.c.l.b16 %v2379
    %v2790 = vunpack.c.h.b16 %v2379
    %v2791 = vunpack.c.l.b16 %v2380
    %v2792 = vunpack.c.h.b16 %v2380
    %v2793 = vunpack.c.l.b16 %v2381
    %v2794 = vunpack.c.h.b16 %v2381
    %v2795 = vunpack.c.l.b16 %v2382
    %v2796 = vunpack.c.h.b16 %v2382
    %v2797 = vunpack.c.l.b16 %v2383
    %v2798 = vunpack.c.h.b16 %v2383
    %v2799 = vunpack.c.l.b16 %v2384
    %v2800 = vunpack.c.h.b16 %v2384
    %v2801 = vunpack.c.l.b16 %v2385
    %v2802 = vunpack.c.h.b16 %v2385
    %v2803 = vunpack.c.l.b16 %v2386
    %v2804 = vunpack.c.h.b16 %v2386
    %v2805 = vunpack.c.l.b16 %v2387
    %v2806 = vunpack.c.h.b16 %v2387
    %v2807 = vunpack.c.l.b16 %v2388
    %v2808 = vunpack.c.h.b16 %v2388
    %v2809 = vunpack.c.l.b16 %v2389
    %v2810 = vunpack.c.h.b16 %v2389
    %v2811 = vunpack.c.l.b16 %v2390
    %v2812 = vunpack.c.h.b16 %v2390
    %v2813 = vunpack.c.l.b16 %v2391
    %v2814 = vunpack.c.h.b16 %v2391
    %v2815 = vunpack.c.l.b16 %v2392
    %v2816 = vunpack.c.h.b16 %v2392
    %v2817 = vunpack.c.l.b16 %v2393
    %v2818 = vunpack.c.h.b16 %v2393
    %v2819 = vunpack.c.l.b16 %v2394
    %v2820 = vunpack.c.h.b16 %v2394
    %v2821 = vunpack.c.l.b16 %v2395
    %v2822 = vunpack.c.h.b16 %v2395
    %v2823 = vunpack.c.l.b16 %v2396
    %v2824 = vunpack.c.h.b16 %v2396
    %v2825 = vunpack.c.l.b16 %v2397
    %v2826 = vunpack.c.h.b16 %v2397
    %v2827 = vunpack.c.l.b16 %v2398
    %v2828 = vunpack.c.h.b16 %v2398
    %v2829 = vunpack.c.l.b16 %v2399
    %v2830 = vunpack.c.h.b16 %v2399
    %v2831 = vunpack.c.l.b16 %v2400
    %v2832 = vunpack.c.h.b16 %v2400
    %v2833 = vunpack.c.l.b16 %v2401
    %v2834 = vunpack.c.h.b16 %v2401
    %v2835 = vunpack.c.l.b16 %v2402
    %v2836 = vunpack.c.h.b16 %v2402
    %v2837 = vunpack.c.l.b16 %v2403
    %v2838 = vunpack.c.h.b16 %v2403
    %v2839 = vunpack.c.l.b16 %v2404
    %v2840 = vunpack.c.h.b16 %v2404
    %v2841 = vunpack.c.l.b16 %v2405
    %v2842 = vunpack.c.h.b16 %v2405
    %v2843 = vunpack.c.l.b16 %v2406
    %v2844 = vunpack.c.h.b16 %v2406
    %v2845 = vunpack.c.l.b16 %v2407
    %v2846 = vunpack.c.h.b16 %v2407
    %v2847 = vunpack.c.l.b16 %v2408
    %v2848 = vunpack.c.h.b16 %v2408
    %v2849 = vunpack.c.l.b16 %v2409
    %v2850 = vunpack.c.h.b16 %v2409
    %v2851 = vunpack.c.l.b16 %v2410
    %v2852 = vunpack.c.h.b16 %v2410
    %v2853 = vunpack.c.l.b16 %v2411
    %v2854 = vunpack.c.h.b16 %v2411
    %v2855 = vunpack.c.l.b16 %v2412
    %v2856 = vunpack.c.h.b16 %v2412
    %v2857 = vunpack.c.l.b16 %v2413
    %v2858 = vunpack.c.h.b16 %v2413
    %v2859 = vunpack.c.l.b16 %v2414
    %v2860 = vunpack.c.h.b16 %v2414
    %v2861 = vunpack.c.l.b16 %v2415
    %v2862 = vunpack.c.h.b16 %v2415
    %v2863 = vunpack.c.l.b16 %v2416
    %v2864 = vunpack.c.h.b16 %v2416
    %v2865 = vunpack.c.l.b16 %v2417
    %v2866 = vunpack.c.h.b16 %v2417
    %v2867 = vunpack.c.l.b16 %v2418
    %v2868 = vunpack.c.h.b16 %v2418
    %v2869 = vunpack.c.l.b16 %v2419
    %v2870 = vunpack.c.h.b16 %v2419
    %v2871 = vunpack.c.l.b16 %v2420
    %v2872 = vunpack.c.h.b16 %v2420
    %v2873 = vunpack.c.l.b16 %v2421
    %v2874 = vunpack.c.h.b16 %v2421
    %v2875 = vunpack.c.l.b16 %v2422
    %v2876 = vunpack.c.h.b16 %v2422
    %v2877 = vunpack.c.l.b16 %v2423
    %v2878 = vunpack.c.h.b16 %v2423
    %v2879 = vunpack.c.l.b16 %v2424
    %v2880 = vunpack.c.h.b16 %v2424
    %v2881 = vunpack.c.l.b16 %v2425
    %v2882 = vunpack.c.h.b16 %v2425
    %v2883 = vunpack.c.l.b16 %v2426
    %v2884 = vunpack.c.h.b16 %v2426
    %v2885 = vunpack.c.l.b16 %v2427
    %v2886 = vunpack.c.h.b16 %v2427
    %v2887 = vunpack.c.l.b16 %v2428
    %v2888 = vunpack.c.h.b16 %v2428
    %v2889 = vunpack.c.l.b16 %v2429
    %v2890 = vunpack.c.h.b16 %v2429
    %v2891 = vunpack.c.l.b16 %v2430
    %v2892 = vunpack.c.h.b16 %v2430
    %v2893 = vunpack.c.l.b16 %v2431
    %v2894 = vunpack.c.h.b16 %v2431
    %v2895 = vunpack.c.l.b16 %v2432
    %v2896 = vunpack.c.h.b16 %v2432
    %v2897 = vunpack.c.l.b16 %v2433
    %v2898 = vunpack.c.h.b16 %v2433
    %v2899 = vunpack.c.l.b16 %v2434
    %v2900 = vunpack.c.h.b16 %v2434
    %v2901 = vunpack.c.l.b16 %v2435
    %v2902 = vunpack.c.h.b16 %v2435
    %v2903 = vunpack.c.l.b16 %v2436
    %v2904 = vunpack.c.h.b16 %v2436
    %v2905 = vunpack.c.l.b16 %v2437
    %v2906 = vunpack.c.h.b16 %v2437
    %v2907 = vunpack.c.l.b16 %v2438
    %v2908 = vunpack.c.h.b16 %v2438
    %v2909 = vunpack.c.l.b16 %v2439
    %v2910 = vunpack.c.h.b16 %v2439
    %v2911 = vunpack.c.l.b16 %v2440
    %v2912 = vunpack.c.h.b16 %v2440
    %v2913 = vunpack.c.l.b16 %v2441
    %v2914 = vunpack.c.h.b16 %v2441
    %v2915 = vunpack.c.l.b16 %v2442
    %v2916 = vunpack.c.h.b16 %v2442
    %v2917 = vunpack.c.l.b16 %v2443
    %v2918 = vunpack.c.h.b16 %v2443
    %v2919 = vunpack.c.l.b16 %v2444
    %v2920 = vunpack.c.h.b16 %v2444
    %v2921 = vunpack.c.l.b16 %v2445
    %v2922 = vunpack.c.h.b16 %v2445
    %v2923 = vunpack.c.l.b16 %v2446
    %v2924 = vunpack.c.h.b16 %v2446
    %v2925 = vunpack.c.l.b16 %v2447
    %v2926 = vunpack.c.h.b16 %v2447
    %v2927 = vunpack.c.l.b16 %v2448
    %v2928 = vunpack.c.h.b16 %v2448
    %v2929 = vunpack.c.l.b16 %v2449
    %v2930 = vunpack.c.h.b16 %v2449
    %v2931 = vunpack.c.l.b16 %v2450
    %v2932 = vunpack.c.h.b16 %v2450
    %v2933 = vunpack.c.l.b16 %v2451
    %v2934 = vunpack.c.h.b16 %v2451
    %v2935 = vunpack.c.l.b16 %v2452
    %v2936 = vunpack.c.h.b16 %v2452
    %v2937 = vunpack.c.l.b16 %v2453
    %v2938 = vunpack.c.h.b16 %v2453
    %v2939 = vunpack.c.l.b16 %v2454
    %v2940 = vunpack.c.h.b16 %v2454
    %v2941 = vunpack.c.l.b16 %v2455
    %v2942 = vunpack.c.h.b16 %v2455
    %v2943 = vunpack.c.l.b16 %v2456
    %v2944 = vunpack.c.h.b16 %v2456
    %v2945 = vunpack.c.l.b16 %v2457
    %v2946 = vunpack.c.h.b16 %v2457
    %v2947 = vunpack.c.l.b16 %v2458
    %v2948 = vunpack.c.h.b16 %v2458
    %v2949 = vunpack.c.l.b16 %v2459
    %v2950 = vunpack.c.h.b16 %v2459
    %v2951 = vunpack.c.l.b16 %v2460
    %v2952 = vunpack.c.h.b16 %v2460
    %v2953 = vunpack.c.l.b16 %v2461
    %v2954 = vunpack.c.h.b16 %v2461
    %v2955 = vunpack.c.l.b16 %v2462
    %v2956 = vunpack.c.h.b16 %v2462
    %v2957 = vunpack.c.l.b16 %v2463
    %v2958 = vunpack.c.h.b16 %v2463
    %v2959 = vunpack.c.l.b16 %v2464
    %v2960 = vunpack.c.h.b16 %v2464
    %v2961 = vunpack.c.l.b16 %v2465
    %v2962 = vunpack.c.h.b16 %v2465
    %v2963 = vunpack.c.l.b16 %v2466
    %v2964 = vunpack.c.h.b16 %v2466
    %v2965 = vunpack.c.l.b16 %v2467
    %v2966 = vunpack.c.h.b16 %v2467
    %v2967 = vunpack.c.l.b16 %v2468
    %v2968 = vunpack.c.h.b16 %v2468
    %v2969 = vunpack.c.l.b16 %v2469
    %v2970 = vunpack.c.h.b16 %v2469
    %v2971 = vunpack.c.l.b16 %v2470
    %v2972 = vunpack.c.h.b16 %v2470
    %v2973 = vunpack.c.l.b16 %v2471
    %v2974 = vunpack.c.h.b16 %v2471
    %v2975 = vunpack.c.l.b16 %v2472
    %v2976 = vunpack.c.h.b16 %v2472
    %v2977 = vunpack.c.l.b16 %v2473
    %v2978 = vunpack.c.h.b16 %v2473
    %v2979 = vunpack.c.l.b16 %v2474
    %v2980 = vunpack.c.h.b16 %v2474
    %v2981 = vunpack.c.l.b16 %v2475
    %v2982 = vunpack.c.h.b16 %v2475
    %v2983 = vunpack.c.l.b16 %v2476
    %v2984 = vunpack.c.h.b16 %v2476
    %v2985 = vunpack.c.l.b16 %v2477
    %v2986 = vunpack.c.h.b16 %v2477
    %v2987 = vunpack.c.l.b16 %v2478
    %v2988 = vunpack.c.h.b16 %v2478
    %v2989 = vunpack.c.l.b16 %v2479
    %v2990 = vunpack.c.h.b16 %v2479
    %v2991 = vunpack.c.l.b16 %v2480
    %v2992 = vunpack.c.h.b16 %v2480
    %v2993 = vunpack.c.l.b16 %v2481
    %v2994 = vunpack.c.h.b16 %v2481
    %v2995 = vunpack.c.l.b16 %v2482
    %v2996 = vunpack.c.h.b16 %v2482
    %v2997 = vunpack.c.l.b16 %v2483
    %v2998 = vunpack.c.h.b16 %v2483
    %v2999 = vunpack.c.l.b16 %v2484
    %v3000 = vunpack.c.h.b16 %v2484
    %v3001 = vunpack.c.l.b16 %v2485
    %v3002 = vunpack.c.h.b16 %v2485
    %v3003 = vunpack.c.l.b16 %v2486
    %v3004 = vunpack.c.h.b16 %v2486
    %v3005 = vunpack.c.l.b16 %v2487
    %v3006 = vunpack.c.h.b16 %v2487
    %v3007 = vunpack.c.l.b16 %v2488
    %v3008 = vunpack.c.h.b16 %v2488
    %v3009 = vunpack.c.l.b16 %v2489
    %v3010 = vunpack.c.h.b16 %v2489
    %v3011 = vunpack.c.l.b16 %v2490
    %v3012 = vunpack.c.h.b16 %v2490
    %v3013 = vunpack.c.l.b16 %v2491
    %v3014 = vunpack.c.h.b16 %v2491
    %v3015 = vunpack.c.l.b16 %v2492
    %v3016 = vunpack.c.h.b16 %v2492
    %v3017 = vunpack.c.l.b16 %v2493
    %v3018 = vunpack.c.h.b16 %v2493
    %v3019 = vunpack.c.l.b16 %v2494
    %v3020 = vunpack.c.h.b16 %v2494
    %v3021 = vunpack.c.l.b16 %v2495
    %v3022 = vunpack.c.h.b16 %v2495
    %v3023 = vunpack.c.l.b16 %v2496
    %v3024 = vunpack.c.h.b16 %v2496
    %v3025 = vunpack.c.l.b16 %v2497
    %v3026 = vunpack.c.h.b16 %v2497
    %v3027 = vunpack.c.l.b16 %v2498
    %v3028 = vunpack.c.h.b16 %v2498
    %v3029 = vunpack.c.l.b16 %v2499
    %v3030 = vunpack.c.h.b16 %v2499
    %v3031 = vunpack.c.l.b16 %v2500
    %v3032 = vunpack.c.h.b16 %v2500
    %v3033 = vunpack.c.l.b16 %v2501
    %v3034 = vunpack.c.h.b16 %v2501
    %v3035 = vunpack.c.l.b16 %v2502
    %v3036 = vunpack.c.h.b16 %v2502
    %v3037 = vunpack.c.l.b16 %v2503
    %v3038 = vunpack.c.h.b16 %v2503
    %v3039 = vunpack.c.l.b16 %v2504
    %v3040 = vunpack.c.h.b16 %v2504
    %v3041 = vunpack.c.l.b16 %v2505
    %v3042 = vunpack.c.h.b16 %v2505
    %v3043 = vunpack.c.l.b16 %v2506
    %v3044 = vunpack.c.h.b16 %v2506
    %v3045 = vunpack.c.l.b16 %v2507
    %v3046 = vunpack.c.h.b16 %v2507
    %v3047 = vunpack.c.l.b16 %v2508
    %v3048 = vunpack.c.h.b16 %v2508
    %v3049 = vunpack.c.l.b16 %v2509
    %v3050 = vunpack.c.h.b16 %v2509
    %v3051 = vunpack.c.l.b16 %v2510
    %v3052 = vunpack.c.h.b16 %v2510
    %v3053 = vunpack.c.l.b16 %v2511
    %v3054 = vunpack.c.h.b16 %v2511
    %v3055 = vunpack.c.l.b16 %v2512
    %v3056 = vunpack.c.h.b16 %v2512
    %v3057 = vunpack.c.l.b16 %v2513
    %v3058 = vunpack.c.h.b16 %v2513
    %v3059 = vunpack.c.l.b16 %v2514
    %v3060 = vunpack.c.h.b16 %v2514
    %v3061 = vunpack.c.l.b16 %v2515
    %v3062 = vunpack.c.h.b16 %v2515
    %v3063 = vunpack.c.l.b16 %v2516
    %v3064 = vunpack.c.h.b16 %v2516
    %v3065 = vunpack.c.l.b16 %v2517
    %v3066 = vunpack.c.h.b16 %v2517
    %v3067 = vunpack.c.l.b16 %v2518
    %v3068 = vunpack.c.h.b16 %v2518
    %v3069 = vunpack.c.l.b16 %v2519
    %v3070 = vunpack.c.h.b16 %v2519
    %v3071 = vunpack.c.l.b16 %v2520
    %v3072 = vunpack.c.h.b16 %v2520
    %v3073 = vunpack.c.l.b16 %v2521
    %v3074 = vunpack.c.h.b16 %v2521
    %v3075 = vunpack.c.l.b16 %v2522
    %v3076 = vunpack.c.h.b16 %v2522
    %v3077 = vunpack.c.l.b16 %v2523
    %v3078 = vunpack.c.h.b16 %v2523
    %v3079 = vunpack.c.l.b16 %v2524
    %v3080 = vunpack.c.h.b16 %v2524
    %v3081 = vunpack.c.l.b16 %v2525
    %v3082 = vunpack.c.h.b16 %v2525
    %v3083 = vunpack.c.l.b16 %v2526
    %v3084 = vunpack.c.h.b16 %v2526
    %v3085 = vunpack.c.l.b16 %v2527
    %v3086 = vunpack.c.h.b16 %v2527
    %v3087 = vunpack.c.l.b16 %v2528
    %v3088 = vunpack.c.h.b16 %v2528
    %v3089 = vunpack.c.l.b16 %v2529
    %v3090 = vunpack.c.h.b16 %v2529
    %v3091 = vunpack.c.l.b16 %v2530
    %v3092 = vunpack.c.h.b16 %v2530
    %v3093 = vunpack.c.l.b16 %v2531
    %v3094 = vunpack.c.h.b16 %v2531
    %v3095 = vunpack.c.l.b16 %v2532
    %v3096 = vunpack.c.h.b16 %v2532
    %v3097 = vunpack.c.l.b16 %v2533
    %v3098 = vunpack.c.h.b16 %v2533
    %v3099 = vunpack.c.l.b16 %v2534
    %v3100 = vunpack.c.h.b16 %v2534
    %v3101 = vunpack.c.l.b16 %v2535
    %v3102 = vunpack.c.h.b16 %v2535
    %v3103 = vunpack.c.l.b16 %v2536
    %v3104 = vunpack.c.h.b16 %v2536
    %v3105 = vunpack.c.l.b16 %v2537
    %v3106 = vunpack.c.h.b16 %v2537
    %v3107 = vunpack.c.l.b16 %v2538
    %v3108 = vunpack.c.h.b16 %v2538
    %v3109 = vunpack.c.l.b16 %v2539
    %v3110 = vunpack.c.h.b16 %v2539
    %v3111 = vunpack.c.l.b16 %v2540
    %v3112 = vunpack.c.h.b16 %v2540
    %v3113 = vunpack.c.l.b16 %v2541
    %v3114 = vunpack.c.h.b16 %v2541
    %v3115 = vunpack.c.l.b16 %v2542
    %v3116 = vunpack.c.h.b16 %v2542
    %v3117 = vunpack.c.l.b16 %v2543
    %v3118 = vunpack.c.h.b16 %v2543
    %v3119 = vunpack.c.l.b16 %v2544
    %v3120 = vunpack.c.h.b16 %v2544
    %v3121 = vunpack.c.l.b16 %v2545
    %v3122 = vunpack.c.h.b16 %v2545
    %v3123 = vunpack.c.l.b16 %v2546
    %v3124 = vunpack.c.h.b16 %v2546
    %v3125 = vunpack.c.l.b16 %v2547
    %v3126 = vunpack.c.h.b16 %v2547
    %v3127 = vunpack.c.l.b16 %v2548
    %v3128 = vunpack.c.h.b16 %v2548
    %v3129 = vunpack.c.l.b16 %v2549
    %v3130 = vunpack.c.h.b16 %v2549
    %v3131 = vunpack.c.l.b16 %v2550
    %v3132 = vunpack.c.h.b16 %v2550
    %v3133 = vunpack.c.l.b16 %v2551
    %v3134 = vunpack.c.h.b16 %v2551
    %v3135 = vunpack.c.l.b16 %v2552
    %v3136 = vunpack.c.h.b16 %v2552
    %v3137 = vunpack.c.l.b16 %v2553
    %v3138 = vunpack.c.h.b16 %v2553
    %v3139 = vunpack.c.l.b16 %v2554
    %v3140 = vunpack.c.h.b16 %v2554
    %v3141 = vunpack.c.l.b16 %v2555
    %v3142 = vunpack.c.h.b16 %v2555
    %v3143 = vunpack.c.l.b16 %v2556
    %v3144 = vunpack.c.h.b16 %v2556
    %v3145 = vunpack.c.l.b16 %v2557
    %v3146 = vunpack.c.h.b16 %v2557
    %v3147 = vunpack.c.l.b16 %v2558
    %v3148 = vunpack.c.h.b16 %v2558
    %v3149 = vunpack.c.l.b16 %v2559
    %v3150 = vunpack.c.h.b16 %v2559
    %v3151 = vunpack.c.l.b16 %v2560
    %v3152 = vunpack.c.h.b16 %v2560
    %v3153 = vunpack.c.l.b16 %v2561
    %v3154 = vunpack.c.h.b16 %v2561
    %v3155 = vunpack.c.l.b16 %v2562
    %v3156 = vunpack.c.h.b16 %v2562
    %v3157 = vunpack.c.l.b16 %v2563
    %v3158 = vunpack.c.h.b16 %v2563
    %v3159 = vunpack.c.l.b16 %v2564
    %v3160 = vunpack.c.h.b16 %v2564
    %v3161 = vunpack.c.l.b16 %v2565
    %v3162 = vunpack.c.h.b16 %v2565
    %v3163 = vunpack.c.l.b16 %v2566
    %v3164 = vunpack.c.h.b16 %v2566
    %v3165 = vpack.c.b16 %v2785, %v2781
    %v3166 = vpack.c.b16 %v2786, %v2782
    %v3167 = vpack.c.b16 %v2787, %v2783
    %v3168 = vpack.c.b16 %v2788, %v2784
    %v3169 = vpack.c.b16 %v2793, %v2789
    %v3170 = vpack.c.b16 %v2794, %v2790
    %v3171 = vpack.c.b16 %v2795, %v2791
    %v3172 = vpack.c.b16 %v2796, %v2792
    %v3173 = vpack.c.b16 %v2801, %v2797
    %v3174 = vpack.c.b16 %v2802, %v2798
    %v3175 = vpack.c.b16 %v2803, %v2799
    %v3176 = vpack.c.b16 %v2804, %v2800
    %v3177 = vpack.c.b16 %v2809, %v2805
    %v3178 = vpack.c.b16 %v2810, %v2806
    %v3179 = vpack.c.b16 %v2811, %v2807
    %v3180 = vpack.c.b16 %v2812, %v2808
    %v3181 = vpack.c.b16 %v2817, %v2813
    %v3182 = vpack.c.b16 %v2818, %v2814
    %v3183 = vpack.c.b16 %v2819, %v2815
    %v3184 = vpack.c.b16 %v2820, %v2816
    %v3185 = vpack.c.b16 %v2825, %v2821
    %v3186 = vpack.c.b16 %v2826, %v2822
    %v3187 = vpack.c.b16 %v2827, %v2823
    %v3188 = vpack.c.b16 %v2828, %v2824
    %v3189 = vpack.c.b16 %v2833, %v2829
    %v3190 = vpack.c.b16 %v2834, %v2830
    %v3191 = vpack.c.b16 %v2835, %v2831
    %v3192 = vpack.c.b16 %v2836, %v2832
    %v3193 = vpack.c.b16 %v2841, %v2837
    %v3194 = vpack.c.b16 %v2842, %v2838
    %v3195 = vpack.c.b16 %v2843, %v2839
    %v3196 = vpack.c.b16 %v2844, %v2840
    %v3197 = vpack.c.b16 %v2849, %v2845
    %v3198 = vpack.c.b16 %v2850, %v2846
    %v3199 = vpack.c.b16 %v2851, %v2847
    %v3200 = vpack.c.b16 %v2852, %v2848
    %v3201 = vpack.c.b16 %v2857, %v2853
    %v3202 = vpack.c.b16 %v2858, %v2854
    %v3203 = vpack.c.b16 %v2859, %v2855
    %v3204 = vpack.c.b16 %v2860, %v2856
    %v3205 = vpack.c.b16 %v2865, %v2861
    %v3206 = vpack.c.b16 %v2866, %v2862
    %v3207 = vpack.c.b16 %v2867, %v2863
    %v3208 = vpack.c.b16 %v2868, %v2864
    %v3209 = vpack.c.b16 %v2873, %v2869
    %v3210 = vpack.c.b16 %v2874, %v2870
    %v3211 = vpack.c.b16 %v2875, %v2871
    %v3212 = vpack.c.b16 %v2876, %v2872
    %v3213 = vpack.c.b16 %v2881, %v2877
    %v3214 = vpack.c.b16 %v2882, %v2878
    %v3215 = vpack.c.b16 %v2883, %v2879
    %v3216 = vpack.c.b16 %v2884, %v2880
    %v3217 = vpack.c.b16 %v2889, %v2885
    %v3218 = vpack.c.b16 %v2890, %v2886
    %v3219 = vpack.c.b16 %v2891, %v2887
    %v3220 = vpack.c.b16 %v2892, %v2888
    %v3221 = vpack.c.b16 %v2897, %v2893
    %v3222 = vpack.c.b16 %v2898, %v2894
    %v3223 = vpack.c.b16 %v2899, %v2895
    %v3224 = vpack.c.b16 %v2900, %v2896
    %v3225 = vpack.c.b16 %v2905, %v2901
    %v3226 = vpack.c.b16 %v2906, %v2902
    %v3227 = vpack.c.b16 %v2907, %v2903
    %v3228 = vpack.c.b16 %v2908, %v2904
    %v3229 = vpack.c.b16 %v2913, %v2909
    %v3230 = vpack.c.b16 %v2914, %v2910
    %v3231 = vpack.c.b16 %v2915, %v2911
    %v3232 = vpack.c.b16 %v2916, %v2912
    %v3233 = vpack.c.b16 %v2921, %v2917
    %v3234 = vpack.c.b16 %v2922, %v2918
    %v3235 = vpack.c.b16 %v2923, %v2919
    %v3236 = vpack.c.b16 %v2924, %v2920
    %v3237 = vpack.c.b16 %v2929, %v2925
    %v3238 = vpack.c.b16 %v2930, %v2926
    %v3239 = vpack.c.b16 %v2931, %v2927
    %v3240 = vpack.c.b16 %v2932, %v2928
    %v3241 = vpack.c.b16 %v2937, %v2933
    %v3242 = vpack.c.b16 %v2938, %v2934
    %v3243 = vpack.c.b16 %v2939, %v2935
    %v3244 = vpack.c.b16 %v2940, %v2936
    %v3245 = vpack.c.b16 %v2945, %v2941
    %v3246 = vpack.c.b16 %v2946, %v2942
    %v3247 = vpack.c.b16 %v2947, %v2943
    %v3248 = vpack.c.b16 %v2948, %v2944
    %v3249 = vpack.c.b16 %v2953, %v2949
    %v3250 = vpack.c.b16 %v2954, %v2950
    %v3251 = vpack.c.b16 %v2955, %v2951
    %v3252 = vpack.c.b16 %v2956, %v2952
    %v3253 = vpack.c.b16 %v2961, %v2957
    %v3254 = vpack.c.b16 %v2962, %v2958
    %v3255 = vpack.c.b16 %v2963, %v2959
    %v3256 = vpack.c.b16 %v2964, %v2960
    %v3257 = vpack.c.b16 %v2969, %v2965
    %v3258 = vpack.c.b16 %v2970, %v2966
    %v3259 = vpack.c.b16 %v2971, %v2967
    %v3260 = vpack.c.b16 %v2972, %v2968
    %v3261 = vpack.c.b16 %v2977, %v2973
    %v3262 = vpack.c.b16 %v2978, %v2974
    %v3263 = vpack.c.b16 %v2979, %v2975
    %v3264 = vpack.c.b16 %v2980, %v2976
    %v3265 = vpack.c.b16 %v2985, %v2981
    %v3266 = vpack.c.b16 %v2986, %v2982
    %v3267 = vpack.c.b16 %v2987, %v2983
    %v3268 = vpack.c.b16 %v2988, %v2984
    %v3269 = vpack.c.b16 %v2993, %v2989
    %v3270 = vpack.c.b16 %v2994, %v2990
    %v3271 = vpack.c.b16 %v2995, %v2991
    %v3272 = vpack.c.b16 %v2996, %v2992
    %v3273 = vpack.c.b16 %v3001, %v2997
    %v3274 = vpack.c.b16 %v3002, %v2998
    %v3275 = vpack.c.b16 %v3003, %v2999
    %v3276 = vpack.c.b16 %v3004, %v3000
    %v3277 = vpack.c.b16 %v3009, %v3005
    %v3278 = vpack.c.b16 %v3010, %v3006
    %v3279 = vpack.c.b16 %v3011, %v3007
    %v3280 = vpack.c.b16 %v3012, %v3008
    %v3281 = vpack.c.b16 %v3017, %v3013
    %v3282 = vpack.c.b16 %v3018, %v3014
    %v3283 = vpack.c.b16 %v3019, %v3015
    %v3284 = vpack.c.b16 %v3020, %v3016
    %v3285 = vpack.c.b16 %v3025, %v3021
    %v3286 = vpack.c.b16 %v3026, %v3022
    %v3287 = vpack.c.b16 %v3027, %v3023
    %v3288 = vpack.c.b16 %v3028, %v3024
    %v3289 = vpack.c.b16 %v3033, %v3029
    %v3290 = vpack.c.b16 %v3034, %v3030
    %v3291 = vpack.c.b16 %v3035, %v3031
    %v3292 = vpack.c.b16 %v3036, %v3032
    %v3293 = vpack.c.b16 %v3041, %v3037
    %v3294 = vpack.c.b16 %v3042, %v3038
    %v3295 = vpack.c.b16 %v3043, %v3039
    %v3296 = vpack.c.b16 %v3044, %v3040
    %v3297 = vpack.c.b16 %v3049, %v3045
    %v3298 = vpack.c.b16 %v3050, %v3046
    %v3299 = vpack.c.b16 %v3051, %v3047
    %v3300 = vpack.c.b16 %v3052, %v3048
    %v3301 = vpack.c.b16 %v3057, %v3053
    %v3302 = vpack.c.b16 %v3058, %v3054
    %v3303 = vpack.c.b16 %v3059, %v3055
    %v3304 = vpack.c.b16 %v3060, %v3056
    %v3305 = vpack.c.b16 %v3065, %v3061
    %v3306 = vpack.c.b16 %v3066, %v3062
    %v3307 = vpack.c.b16 %v3067, %v3063
    %v3308 = vpack.c.b16 %v3068, %v3064
    %v3309 = vpack.c.b16 %v3073, %v3069
    %v3310 = vpack.c.b16 %v3074, %v3070
    %v3311 = vpack.c.b16 %v3075, %v3071
    %v3312 = vpack.c.b16 %v3076, %v3072
    %v3313 = vpack.c.b16 %v3081, %v3077
    %v3314 = vpack.c.b16 %v3082, %v3078
    %v3315 = vpack.c.b16 %v3083, %v3079
    %v3316 = vpack.c.b16 %v3084, %v3080
    %v3317 = vpack.c.b16 %v3089, %v3085
    %v3318 = vpack.c.b16 %v3090, %v3086
    %v3319 = vpack.c.b16 %v3091, %v3087
    %v3320 = vpack.c.b16 %v3092, %v3088
    %v3321 = vpack.c.b16 %v3097, %v3093
    %v3322 = vpack.c.b16 %v3098, %v3094
    %v3323 = vpack.c.b16 %v3099, %v3095
    %v3324 = vpack.c.b16 %v3100, %v3096
    %v3325 = vpack.c.b16 %v3105, %v3101
    %v3326 = vpack.c.b16 %v3106, %v3102
    %v3327 = vpack.c.b16 %v3107, %v3103
    %v3328 = vpack.c.b16 %v3108, %v3104
    %v3329 = vpack.c.b16 %v3113, %v3109
    %v3330 = vpack.c.b16 %v3114, %v3110
    %v3331 = vpack.c.b16 %v3115, %v3111
    %v3332 = vpack.c.b16 %v3116, %v3112
    %v3333 = vpack.c.b16 %v3121, %v3117
    %v3334 = vpack.c.b16 %v3122, %v3118
    %v3335 = vpack.c.b16 %v3123, %v3119
    %v3336 = vpack.c.b16 %v3124, %v3120
    %v3337 = vpack.c.b16 %v3129, %v3125
    %v3338 = vpack.c.b16 %v3130, %v3126
    %v3339 = vpack.c.b16 %v3131, %v3127
    %v3340 = vpack.c.b16 %v3132, %v3128
    %v3341 = vpack.c.b16 %v3137, %v3133
    %v3342 = vpack.c.b16 %v3138, %v3134
    %v3343 = vpack.c.b16 %v3139, %v3135
    %v3344 = vpack.c.b16 %v3140, %v3136
    %v3345 = vpack.c.b16 %v3145, %v3141
    %v3346 = vpack.c.b16 %v3146, %v3142
    %v3347 = vpack.c.b16 %v3147, %v3143
    %v3348 = vpack.c.b16 %v3148, %v3144
    %v3349 = vpack.c.b16 %v3153, %v3149
    %v3350 = vpack.c.b16 %v3154, %v3150
    %v3351 = vpack.c.b16 %v3155, %v3151
    %v3352 = vpack.c.b16 %v3156, %v3152
    %v3353 = vpack.c.b16 %v3161, %v3157
    %v3354 = vpack.c.b16 %v3162, %v3158
    %v3355 = vpack.c.b16 %v3163, %v3159
    %v3356 = vpack.c.b16 %v3164, %v3160
    %3549 = vmatprep.subr.bf16.mxu0 %v3166
    %3550 = vmatpush1.bf16.msra.mxu0 %v3165
    %3551 = vmatprep.subr.bf16.mxu0 %v3170
    %3552 = vmatpush1.bf16.msra.mxu0 %v3169
    %3553 = vmatprep.subr.bf16.mxu0 %v3174
    %3554 = vmatpush1.bf16.msra.mxu0 %v3173
    %3555 = vmatprep.subr.bf16.mxu0 %v3178
    %3556 = vmatpush1.bf16.msra.mxu0 %v3177
    %3557 = vmatprep.subr.bf16.mxu0 %v3182
    %3558 = vmatpush1.bf16.msra.mxu0 %v3181
    %3559 = vmatprep.subr.bf16.mxu0 %v3186
    %3560 = vmatpush1.bf16.msra.mxu0 %v3185
    %3561 = vmatprep.subr.bf16.mxu0 %v3190
    %3562 = vmatpush1.bf16.msra.mxu0 %v3189
    %3563 = vmatprep.subr.bf16.mxu0 %v3194
    %3564 = vmatpush1.bf16.msra.mxu0 %v3193
    %3565 = vmatprep.subr.bf16.mxu0 %v3198
    %3566 = vmatpush1.bf16.msra.mxu0 %v3197
    %3567 = vmatprep.subr.bf16.mxu0 %v3202
    %3568 = vmatpush1.bf16.msra.mxu0 %v3201
    %3569 = vmatprep.subr.bf16.mxu0 %v3206
    %3570 = vmatpush1.bf16.msra.mxu0 %v3205
    %3571 = vmatprep.subr.bf16.mxu0 %v3210
    %3572 = vmatpush1.bf16.msra.mxu0 %v3209
    %3573 = vmatprep.subr.bf16.mxu0 %v3214
    %3574 = vmatpush1.bf16.msra.mxu0 %v3213
    %3575 = vmatprep.subr.bf16.mxu0 %v3218
    %3576 = vmatpush1.bf16.msra.mxu0 %v3217
    %3577 = vmatprep.subr.bf16.mxu0 %v3222
    %3578 = vmatpush1.bf16.msra.mxu0 %v3221
    %3579 = vmatprep.subr.bf16.mxu0 %v3226
    %3580 = vmatpush1.bf16.msra.mxu0 %v3225
    %3581 = vmatprep.mubr.bf16.mxu0 %v2370
    %3582 = vmatmul.mubr.bf16.gmra.mrb[0].mxu0 %v2369
    %v3583 = vpop.f32.mrb[0].mxu0
    %v3584 = vadd.f32 %v2572, %v3583
    %v3585 = vpop.f32.mrb[0].mxu0
    %v3586 = vadd.f32 %v2576, %v3585
    %v3587 = vpop.f32.mrb[0].mxu0
    %v3588 = vpop.f32.mrb[0].mxu0
    %3589 = vdwg.mxu0
    %3590 = vmatprep.subr.bf16.mxu0 %v3230
    %3591 = vmatpush1.bf16.msra.mxu0 %v3229
    %3592 = vmatprep.subr.bf16.mxu0 %v3234
    %3593 = vmatpush1.bf16.msra.mxu0 %v3233
    %3594 = vmatprep.subr.bf16.mxu0 %v3238
    %3595 = vmatpush1.bf16.msra.mxu0 %v3237
    %3596 = vmatprep.subr.bf16.mxu0 %v3242
    %3597 = vmatpush1.bf16.msra.mxu0 %v3241
    %3598 = vmatprep.subr.bf16.mxu0 %v3246
    %3599 = vmatpush1.bf16.msra.mxu0 %v3245
    %3600 = vmatprep.subr.bf16.mxu0 %v3250
    %3601 = vmatpush1.bf16.msra.mxu0 %v3249
    %3602 = vmatprep.subr.bf16.mxu0 %v3254
    %3603 = vmatpush1.bf16.msra.mxu0 %v3253
    %3604 = vmatprep.subr.bf16.mxu0 %v3258
    %3605 = vmatpush1.bf16.msra.mxu0 %v3257
    %3606 = vmatprep.subr.bf16.mxu0 %v3262
    %3607 = vmatpush1.bf16.msra.mxu0 %v3261
    %3608 = vmatprep.subr.bf16.mxu0 %v3266
    %3609 = vmatpush1.bf16.msra.mxu0 %v3265
    %3610 = vmatprep.subr.bf16.mxu0 %v3270
    %3611 = vmatpush1.bf16.msra.mxu0 %v3269
    %3612 = vmatprep.subr.bf16.mxu0 %v3274
    %3613 = vmatpush1.bf16.msra.mxu0 %v3273
    %3614 = vmatprep.subr.bf16.mxu0 %v3278
    %3615 = vmatpush1.bf16.msra.mxu0 %v3277
    %3616 = vmatprep.subr.bf16.mxu0 %v3282
    %3617 = vmatpush1.bf16.msra.mxu0 %v3281
    %3618 = vmatprep.subr.bf16.mxu0 %v3286
    %3619 = vmatpush1.bf16.msra.mxu0 %v3285
    %3620 = vmatprep.subr.bf16.mxu0 %v3290
    %3621 = vmatpush1.bf16.msra.mxu0 %v3289
    %3622 = vmatprep.mubr.bf16.mxu0 %v2372
    %3623 = vmatmul.mubr.bf16.gmra.mrb[0].mxu0 %v2371
    %v3624 = vpop.f32.mrb[0].mxu0
    %v3625 = vadd.f32 %v3584, %v3624
    %v3626 = vpop.f32.mrb[0].mxu0
    %v3627 = vadd.f32 %v3586, %v3626
    %v3628 = vpop.f32.mrb[0].mxu0
    %v3629 = vpop.f32.mrb[0].mxu0
    %3630 = vdwg.mxu0
    %3631 = vmatprep.subr.bf16.mxu0 %v3294
    %3632 = vmatpush1.bf16.msra.mxu0 %v3293
    %3633 = vmatprep.subr.bf16.mxu0 %v3298
    %3634 = vmatpush1.bf16.msra.mxu0 %v3297
    %3635 = vmatprep.subr.bf16.mxu0 %v3302
    %3636 = vmatpush1.bf16.msra.mxu0 %v3301
    %3637 = vmatprep.subr.bf16.mxu0 %v3306
    %3638 = vmatpush1.bf16.msra.mxu0 %v3305
    %3639 = vmatprep.subr.bf16.mxu0 %v3310
    %3640 = vmatpush1.bf16.msra.mxu0 %v3309
    %3641 = vmatprep.subr.bf16.mxu0 %v3314
    %3642 = vmatpush1.bf16.msra.mxu0 %v3313
    %3643 = vmatprep.subr.bf16.mxu0 %v3318
    %3644 = vmatpush1.bf16.msra.mxu0 %v3317
    %3645 = vmatprep.subr.bf16.mxu0 %v3322
    %3646 = vmatpush1.bf16.msra.mxu0 %v3321
    %3647 = vmatprep.subr.bf16.mxu0 %v3326
    %3648 = vmatpush1.bf16.msra.mxu0 %v3325
    %3649 = vmatprep.subr.bf16.mxu0 %v3330
    %3650 = vmatpush1.bf16.msra.mxu0 %v3329
    %3651 = vmatprep.subr.bf16.mxu0 %v3334
    %3652 = vmatpush1.bf16.msra.mxu0 %v3333
    %3653 = vmatprep.subr.bf16.mxu0 %v3338
    %3654 = vmatpush1.bf16.msra.mxu0 %v3337
    %3655 = vmatprep.subr.bf16.mxu0 %v3342
    %3656 = vmatpush1.bf16.msra.mxu0 %v3341
    %3657 = vmatprep.subr.bf16.mxu0 %v3346
    %3658 = vmatpush1.bf16.msra.mxu0 %v3345
    %3659 = vmatprep.subr.bf16.mxu0 %v3350
    %3660 = vmatpush1.bf16.msra.mxu0 %v3349
    %3661 = vmatprep.subr.bf16.mxu0 %v3354
    %3662 = vmatpush1.bf16.msra.mxu0 %v3353
    %3663 = vmatprep.mubr.bf16.mxu0 %v2374
    %3664 = vmatmul.mubr.bf16.gmra.mrb[0].mxu0 %v2373
    %v3665 = vpop.f32.mrb[0].mxu0
    %v3666 = vadd.f32 %v3625, %v3665
    %v3667 = vpop.f32.mrb[0].mxu0
    %v3668 = vadd.f32 %v3627, %v3667
    %v3669 = vpop.f32.mrb[0].mxu0
    %v3670 = vpop.f32.mrb[0].mxu0
    %3671 = vdwg.mxu0
    %3672 = vmatprep.subr.bf16.mxu0 %v3168
    %3673 = vmatpush1.bf16.msra.mxu0 %v3167
    %3674 = vmatprep.subr.bf16.mxu0 %v3172
    %3675 = vmatpush1.bf16.msra.mxu0 %v3171
    %3676 = vmatprep.subr.bf16.mxu0 %v3176
    %3677 = vmatpush1.bf16.msra.mxu0 %v3175
    %3678 = vmatprep.subr.bf16.mxu0 %v3180
    %3679 = vmatpush1.bf16.msra.mxu0 %v3179
    %3680 = vmatprep.subr.bf16.mxu0 %v3184
    %3681 = vmatpush1.bf16.msra.mxu0 %v3183
    %3682 = vmatprep.subr.bf16.mxu0 %v3188
    %3683 = vmatpush1.bf16.msra.mxu0 %v3187
    %3684 = vmatprep.subr.bf16.mxu0 %v3192
    %3685 = vmatpush1.bf16.msra.mxu0 %v3191
    %3686 = vmatprep.subr.bf16.mxu0 %v3196
    %3687 = vmatpush1.bf16.msra.mxu0 %v3195
    %3688 = vmatprep.subr.bf16.mxu0 %v3200
    %3689 = vmatpush1.bf16.msra.mxu0 %v3199
    %3690 = vmatprep.subr.bf16.mxu0 %v3204
    %3691 = vmatpush1.bf16.msra.mxu0 %v3203
    %3692 = vmatprep.subr.bf16.mxu0 %v3208
    %3693 = vmatpush1.bf16.msra.mxu0 %v3207
    %3694 = vmatprep.subr.bf16.mxu0 %v3212
    %3695 = vmatpush1.bf16.msra.mxu0 %v3211
    %3696 = vmatprep.subr.bf16.mxu0 %v3216
    %3697 = vmatpush1.bf16.msra.mxu0 %v3215
    %3698 = vmatprep.subr.bf16.mxu0 %v3220
    %3699 = vmatpush1.bf16.msra.mxu0 %v3219
    %3700 = vmatprep.subr.bf16.mxu0 %v3224
    %3701 = vmatpush1.bf16.msra.mxu0 %v3223
    %3702 = vmatprep.subr.bf16.mxu0 %v3228
    %3703 = vmatpush1.bf16.msra.mxu0 %v3227
    %3704 = vmatprep.mubr.bf16.mxu0 %v2370
    %3705 = vmatmul.mubr.bf16.gmra.mrb[0].mxu0 %v2369
    %v3706 = vpop.f32.mrb[0].mxu0
    %v3707 = vadd.f32 %v2580, %v3706
    %v3708 = vpop.f32.mrb[0].mxu0
    %v3709 = vadd.f32 %v2584, %v3708
    %v3710 = vpop.f32.mrb[0].mxu0
    %v3711 = vpop.f32.mrb[0].mxu0
    %3712 = vdwg.mxu0
    %3713 = vmatprep.subr.bf16.mxu0 %v3232
    %3714 = vmatpush1.bf16.msra.mxu0 %v3231
    %3715 = vmatprep.subr.bf16.mxu0 %v3236
    %3716 = vmatpush1.bf16.msra.mxu0 %v3235
    %3717 = vmatprep.subr.bf16.mxu0 %v3240
    %3718 = vmatpush1.bf16.msra.mxu0 %v3239
    %3719 = vmatprep.subr.bf16.mxu0 %v3244
    %3720 = vmatpush1.bf16.msra.mxu0 %v3243
    %3721 = vmatprep.subr.bf16.mxu0 %v3248
    %3722 = vmatpush1.bf16.msra.mxu0 %v3247
    %3723 = vmatprep.subr.bf16.mxu0 %v3252
    %3724 = vmatpush1.bf16.msra.mxu0 %v3251
    %3725 = vmatprep.subr.bf16.mxu0 %v3256
    %3726 = vmatpush1.bf16.msra.mxu0 %v3255
    %3727 = vmatprep.subr.bf16.mxu0 %v3260
    %3728 = vmatpush1.bf16.msra.mxu0 %v3259
    %3729 = vmatprep.subr.bf16.mxu0 %v3264
    %3730 = vmatpush1.bf16.msra.mxu0 %v3263
    %3731 = vmatprep.subr.bf16.mxu0 %v3268
    %3732 = vmatpush1.bf16.msra.mxu0 %v3267
    %3733 = vmatprep.subr.bf16.mxu0 %v3272
    %3734 = vmatpush1.bf16.msra.mxu0 %v3271
    %3735 = vmatprep.subr.bf16.mxu0 %v3276
    %3736 = vmatpush1.bf16.msra.mxu0 %v3275
    %3737 = vmatprep.subr.bf16.mxu0 %v3280
    %3738 = vmatpush1.bf16.msra.mxu0 %v3279
    %3739 = vmatprep.subr.bf16.mxu0 %v3284
    %3740 = vmatpush1.bf16.msra.mxu0 %v3283
    %3741 = vmatprep.subr.bf16.mxu0 %v3288
    %3742 = vmatpush1.bf16.msra.mxu0 %v3287
    %3743 = vmatprep.subr.bf16.mxu0 %v3292
    %3744 = vmatpush1.bf16.msra.mxu0 %v3291
    %3745 = vmatprep.mubr.bf16.mxu0 %v2372
    %3746 = vmatmul.mubr.bf16.gmra.mrb[0].mxu0 %v2371
    %v3747 = vpop.f32.mrb[0].mxu0
    %v3748 = vadd.f32 %v3707, %v3747
    %v3749 = vpop.f32.mrb[0].mxu0
    %v3750 = vadd.f32 %v3709, %v3749
    %v3751 = vpop.f32.mrb[0].mxu0
    %v3752 = vpop.f32.mrb[0].mxu0
    %3753 = vdwg.mxu0
    %3754 = vmatprep.subr.bf16.mxu0 %v3296
    %3755 = vmatpush1.bf16.msra.mxu0 %v3295
    %3756 = vmatprep.subr.bf16.mxu0 %v3300
    %3757 = vmatpush1.bf16.msra.mxu0 %v3299
    %3758 = vmatprep.subr.bf16.mxu0 %v3304
    %3759 = vmatpush1.bf16.msra.mxu0 %v3303
    %3760 = vmatprep.subr.bf16.mxu0 %v3308
    %3761 = vmatpush1.bf16.msra.mxu0 %v3307
    %3762 = vmatprep.subr.bf16.mxu0 %v3312
    %3763 = vmatpush1.bf16.msra.mxu0 %v3311
    %3764 = vmatprep.subr.bf16.mxu0 %v3316
    %3765 = vmatpush1.bf16.msra.mxu0 %v3315
    %3766 = vmatprep.subr.bf16.mxu0 %v3320
    %3767 = vmatpush1.bf16.msra.mxu0 %v3319
    %3768 = vmatprep.subr.bf16.mxu0 %v3324
    %3769 = vmatpush1.bf16.msra.mxu0 %v3323
    %3770 = vmatprep.subr.bf16.mxu0 %v3328
    %3771 = vmatpush1.bf16.msra.mxu0 %v3327
    %3772 = vmatprep.subr.bf16.mxu0 %v3332
    %3773 = vmatpush1.bf16.msra.mxu0 %v3331
    %3774 = vmatprep.subr.bf16.mxu0 %v3336
    %3775 = vmatpush1.bf16.msra.mxu0 %v3335
    %3776 = vmatprep.subr.bf16.mxu0 %v3340
    %3777 = vmatpush1.bf16.msra.mxu0 %v3339
    %3778 = vmatprep.subr.bf16.mxu0 %v3344
    %3779 = vmatpush1.bf16.msra.mxu0 %v3343
    %3780 = vmatprep.subr.bf16.mxu0 %v3348
    %3781 = vmatpush1.bf16.msra.mxu0 %v3347
    %3782 = vmatprep.subr.bf16.mxu0 %v3352
    %3783 = vmatpush1.bf16.msra.mxu0 %v3351
    %3784 = vmatprep.subr.bf16.mxu0 %v3356
    %3785 = vmatpush1.bf16.msra.mxu0 %v3355
    %3786 = vmatprep.mubr.bf16.mxu0 %v2374
    %3787 = vmatmul.mubr.bf16.gmra.mrb[0].mxu0 %v2373
    %v3788 = vpop.f32.mrb[0].mxu0
    %v3789 = vadd.f32 %v3748, %v3788
    %v3790 = vpop.f32.mrb[0].mxu0
    %v3791 = vadd.f32 %v3750, %v3790
    %v3792 = vpop.f32.mrb[0].mxu0
    %v3793 = vpop.f32.mrb[0].mxu0
    %3794 = vdwg.mxu0
    %v3795 = vmul.f32 %v3666, 0.1
    %v3796 = vmul.f32 %v3668, 0.1
    %v3797 = vmul.f32 %v3789, 0.1
    %v3798 = vmul.f32 %v3791, 0.1
    %v3799 = vmax.f32 %v3666, %v3795
    %v3800 = vmax.f32 %v3668, %v3796
    %v3801 = vmax.f32 %v3789, %v3797
    %v3802 = vmax.f32 %v3791, %v3798
    %v3803 = vpack.c.bf16 %v3799, %v3799
    %v3804 = vpack.c.bf16 %v3800, %v3800
    %v3805 = vpack.c.bf16 %v3801, %v3801
    %v3806 = vpack.c.bf16 %v3802, %v3802
    %v3807 = vld [vmem:[#allocation17] sm:$0xff]
    %v3808 = vld [vmem:[#allocation17 + $0x8] sm:$0xff]
    %v3809 = vld [vmem:[#allocation17 + $0x10] sm:$0xff]
    %v3810 = vld [vmem:[#allocation17 + $0x18] sm:$0xff]
    %v3811 = vld [vmem:[#allocation17 + $0x20] sm:$0xff]
    %v3812 = vld [vmem:[#allocation17 + $0x28] sm:$0xff]
    %v3813 = vld [vmem:[#allocation17 + $0x30] sm:$0xff]
    %v3814 = vld [vmem:[#allocation17 + $0x38] sm:$0xff]
    %v3815 = vld [vmem:[#allocation17 + $0x40] sm:$0xff]
    %v3816 = vld [vmem:[#allocation17 + $0x48] sm:$0xff]
    %v3817 = vld [vmem:[#allocation17 + $0x50] sm:$0xff]
    %v3818 = vld [vmem:[#allocation17 + $0x58] sm:$0xff]
    %v3819 = vld [vmem:[#allocation17 + $0x60] sm:$0xff]
    %v3820 = vld [vmem:[#allocation17 + $0x68] sm:$0xff]
    %v3821 = vld [vmem:[#allocation17 + $0x70] sm:$0xff]
    %v3822 = vld [vmem:[#allocation17 + $0x78] sm:$0xff]
    %v3823 = vld [vmem:[#allocation17 + $0x80] sm:$0xff]
    %v3824 = vld [vmem:[#allocation17 + $0x88] sm:$0xff]
    %v3825 = vld [vmem:[#allocation17 + $0x90] sm:$0xff]
    %v3826 = vld [vmem:[#allocation17 + $0x98] sm:$0xff]
    %v3827 = vld [vmem:[#allocation17 + $0xa0] sm:$0xff]
    %v3828 = vld [vmem:[#allocation17 + $0xa8] sm:$0xff]
    %v3829 = vld [vmem:[#allocation17 + $0xb0] sm:$0xff]
    %v3830 = vld [vmem:[#allocation17 + $0xb8] sm:$0xff]
    %v3831 = vld [vmem:[#allocation17 + $0xc0] sm:$0xff]
    %v3832 = vld [vmem:[#allocation17 + $0xc8] sm:$0xff]
    %v3833 = vld [vmem:[#allocation17 + $0xd0] sm:$0xff]
    %v3834 = vld [vmem:[#allocation17 + $0xd8] sm:$0xff]
    %v3835 = vld [vmem:[#allocation17 + $0xe0] sm:$0xff]
    %v3836 = vld [vmem:[#allocation17 + $0xe8] sm:$0xff]
    %v3837 = vld [vmem:[#allocation17 + $0xf0] sm:$0xff]
    %v3838 = vld [vmem:[#allocation17 + $0xf8] sm:$0xff]
    %v3839 = vld [vmem:[#allocation17 + $0x100] sm:$0xff]
    %v3840 = vld [vmem:[#allocation17 + $0x108] sm:$0xff]
    %v3841 = vld [vmem:[#allocation17 + $0x110] sm:$0xff]
    %v3842 = vld [vmem:[#allocation17 + $0x118] sm:$0xff]
    %v3843 = vld [vmem:[#allocation17 + $0x120] sm:$0xff]
    %v3844 = vld [vmem:[#allocation17 + $0x128] sm:$0xff]
    %v3845 = vld [vmem:[#allocation17 + $0x130] sm:$0xff]
    %v3846 = vld [vmem:[#allocation17 + $0x138] sm:$0xff]
    %v3847 = vld [vmem:[#allocation17 + $0x140] sm:$0xff]
    %v3848 = vld [vmem:[#allocation17 + $0x148] sm:$0xff]
    %v3849 = vld [vmem:[#allocation17 + $0x150] sm:$0xff]
    %v3850 = vld [vmem:[#allocation17 + $0x158] sm:$0xff]
    %v3851 = vld [vmem:[#allocation17 + $0x160] sm:$0xff]
    %v3852 = vld [vmem:[#allocation17 + $0x168] sm:$0xff]
    %v3853 = vld [vmem:[#allocation17 + $0x170] sm:$0xff]
    %v3854 = vld [vmem:[#allocation17 + $0x178] sm:$0xff]
    %v3855 = vld [vmem:[#allocation17 + $0x180] sm:$0xff]
    %v3856 = vld [vmem:[#allocation17 + $0x188] sm:$0xff]
    %v3857 = vld [vmem:[#allocation17 + $0x190] sm:$0xff]
    %v3858 = vld [vmem:[#allocation17 + $0x198] sm:$0xff]
    %v3859 = vld [vmem:[#allocation17 + $0x1a0] sm:$0xff]
    %v3860 = vld [vmem:[#allocation17 + $0x1a8] sm:$0xff]
    %v3861 = vld [vmem:[#allocation17 + $0x1b0] sm:$0xff]
    %v3862 = vld [vmem:[#allocation17 + $0x1b8] sm:$0xff]
    %v3863 = vld [vmem:[#allocation17 + $0x1c0] sm:$0xff]
    %v3864 = vld [vmem:[#allocation17 + $0x1c8] sm:$0xff]
    %v3865 = vld [vmem:[#allocation17 + $0x1d0] sm:$0xff]
    %v3866 = vld [vmem:[#allocation17 + $0x1d8] sm:$0xff]
    %v3867 = vld [vmem:[#allocation17 + $0x1e0] sm:$0xff]
    %v3868 = vld [vmem:[#allocation17 + $0x1e8] sm:$0xff]
    %v3869 = vld [vmem:[#allocation17 + $0x1f0] sm:$0xff]
    %v3870 = vld [vmem:[#allocation17 + $0x1f8] sm:$0xff]
    %v3871 = vld [vmem:[#allocation19] sm:$0x3]
    %v3873 = vlaneseq
    %v3874 = vshrl.u32 %v3873, 7
    %v3875 = vsub.s32 0, %v3874
    %v3876 = vrot.slane %v3871, %v3875
    %v3877 = vlaneseq
    %v3878 = vshrl.u32 %v3877, 7
    %v3879 = vsub.s32 1, %v3878
    %v3880 = vrot.slane %v3871, %v3879
    %v3947 = vunpack.c.l.b16 %v3807
    %v3948 = vunpack.c.h.b16 %v3807
    %v3949 = vunpack.c.l.b16 %v3808
    %v3950 = vunpack.c.h.b16 %v3808
    %v3951 = vunpack.c.l.b16 %v3809
    %v3952 = vunpack.c.h.b16 %v3809
    %v3953 = vunpack.c.l.b16 %v3810
    %v3954 = vunpack.c.h.b16 %v3810
    %v3955 = vunpack.c.l.b16 %v3811
    %v3956 = vunpack.c.h.b16 %v3811
    %v3957 = vunpack.c.l.b16 %v3812
    %v3958 = vunpack.c.h.b16 %v3812
    %v3959 = vunpack.c.l.b16 %v3813
    %v3960 = vunpack.c.h.b16 %v3813
    %v3961 = vunpack.c.l.b16 %v3814
    %v3962 = vunpack.c.h.b16 %v3814
    %v3963 = vunpack.c.l.b16 %v3815
    %v3964 = vunpack.c.h.b16 %v3815
    %v3965 = vunpack.c.l.b16 %v3816
    %v3966 = vunpack.c.h.b16 %v3816
    %v3967 = vunpack.c.l.b16 %v3817
    %v3968 = vunpack.c.h.b16 %v3817
    %v3969 = vunpack.c.l.b16 %v3818
    %v3970 = vunpack.c.h.b16 %v3818
    %v3971 = vunpack.c.l.b16 %v3819
    %v3972 = vunpack.c.h.b16 %v3819
    %v3973 = vunpack.c.l.b16 %v3820
    %v3974 = vunpack.c.h.b16 %v3820
    %v3975 = vunpack.c.l.b16 %v3821
    %v3976 = vunpack.c.h.b16 %v3821
    %v3977 = vunpack.c.l.b16 %v3822
    %v3978 = vunpack.c.h.b16 %v3822
    %v3979 = vunpack.c.l.b16 %v3823
    %v3980 = vunpack.c.h.b16 %v3823
    %v3981 = vunpack.c.l.b16 %v3824
    %v3982 = vunpack.c.h.b16 %v3824
    %v3983 = vunpack.c.l.b16 %v3825
    %v3984 = vunpack.c.h.b16 %v3825
    %v3985 = vunpack.c.l.b16 %v3826
    %v3986 = vunpack.c.h.b16 %v3826
    %v3987 = vunpack.c.l.b16 %v3827
    %v3988 = vunpack.c.h.b16 %v3827
    %v3989 = vunpack.c.l.b16 %v3828
    %v3990 = vunpack.c.h.b16 %v3828
    %v3991 = vunpack.c.l.b16 %v3829
    %v3992 = vunpack.c.h.b16 %v3829
    %v3993 = vunpack.c.l.b16 %v3830
    %v3994 = vunpack.c.h.b16 %v3830
    %v3995 = vunpack.c.l.b16 %v3831
    %v3996 = vunpack.c.h.b16 %v3831
    %v3997 = vunpack.c.l.b16 %v3832
    %v3998 = vunpack.c.h.b16 %v3832
    %v3999 = vunpack.c.l.b16 %v3833
    %v4000 = vunpack.c.h.b16 %v3833
    %v4001 = vunpack.c.l.b16 %v3834
    %v4002 = vunpack.c.h.b16 %v3834
    %v4003 = vunpack.c.l.b16 %v3835
    %v4004 = vunpack.c.h.b16 %v3835
    %v4005 = vunpack.c.l.b16 %v3836
    %v4006 = vunpack.c.h.b16 %v3836
    %v4007 = vunpack.c.l.b16 %v3837
    %v4008 = vunpack.c.h.b16 %v3837
    %v4009 = vunpack.c.l.b16 %v3838
    %v4010 = vunpack.c.h.b16 %v3838
    %v4011 = vunpack.c.l.b16 %v3839
    %v4012 = vunpack.c.h.b16 %v3839
    %v4013 = vunpack.c.l.b16 %v3840
    %v4014 = vunpack.c.h.b16 %v3840
    %v4015 = vunpack.c.l.b16 %v3841
    %v4016 = vunpack.c.h.b16 %v3841
    %v4017 = vunpack.c.l.b16 %v3842
    %v4018 = vunpack.c.h.b16 %v3842
    %v4019 = vunpack.c.l.b16 %v3843
    %v4020 = vunpack.c.h.b16 %v3843
    %v4021 = vunpack.c.l.b16 %v3844
    %v4022 = vunpack.c.h.b16 %v3844
    %v4023 = vunpack.c.l.b16 %v3845
    %v4024 = vunpack.c.h.b16 %v3845
    %v4025 = vunpack.c.l.b16 %v3846
    %v4026 = vunpack.c.h.b16 %v3846
    %v4027 = vunpack.c.l.b16 %v3847
    %v4028 = vunpack.c.h.b16 %v3847
    %v4029 = vunpack.c.l.b16 %v3848
    %v4030 = vunpack.c.h.b16 %v3848
    %v4031 = vunpack.c.l.b16 %v3849
    %v4032 = vunpack.c.h.b16 %v3849
    %v4033 = vunpack.c.l.b16 %v3850
    %v4034 = vunpack.c.h.b16 %v3850
    %v4035 = vunpack.c.l.b16 %v3851
    %v4036 = vunpack.c.h.b16 %v3851
    %v4037 = vunpack.c.l.b16 %v3852
    %v4038 = vunpack.c.h.b16 %v3852
    %v4039 = vunpack.c.l.b16 %v3853
    %v4040 = vunpack.c.h.b16 %v3853
    %v4041 = vunpack.c.l.b16 %v3854
    %v4042 = vunpack.c.h.b16 %v3854
    %v4043 = vunpack.c.l.b16 %v3855
    %v4044 = vunpack.c.h.b16 %v3855
    %v4045 = vunpack.c.l.b16 %v3856
    %v4046 = vunpack.c.h.b16 %v3856
    %v4047 = vunpack.c.l.b16 %v3857
    %v4048 = vunpack.c.h.b16 %v3857
    %v4049 = vunpack.c.l.b16 %v3858
    %v4050 = vunpack.c.h.b16 %v3858
    %v4051 = vunpack.c.l.b16 %v3859
    %v4052 = vunpack.c.h.b16 %v3859
    %v4053 = vunpack.c.l.b16 %v3860
    %v4054 = vunpack.c.h.b16 %v3860
    %v4055 = vunpack.c.l.b16 %v3861
    %v4056 = vunpack.c.h.b16 %v3861
    %v4057 = vunpack.c.l.b16 %v3862
    %v4058 = vunpack.c.h.b16 %v3862
    %v4059 = vunpack.c.l.b16 %v3863
    %v4060 = vunpack.c.h.b16 %v3863
    %v4061 = vunpack.c.l.b16 %v3864
    %v4062 = vunpack.c.h.b16 %v3864
    %v4063 = vunpack.c.l.b16 %v3865
    %v4064 = vunpack.c.h.b16 %v3865
    %v4065 = vunpack.c.l.b16 %v3866
    %v4066 = vunpack.c.h.b16 %v3866
    %v4067 = vunpack.c.l.b16 %v3867
    %v4068 = vunpack.c.h.b16 %v3867
    %v4069 = vunpack.c.l.b16 %v3868
    %v4070 = vunpack.c.h.b16 %v3868
    %v4071 = vunpack.c.l.b16 %v3869
    %v4072 = vunpack.c.h.b16 %v3869
    %v4073 = vunpack.c.l.b16 %v3870
    %v4074 = vunpack.c.h.b16 %v3870
    %v4075 = vpack.c.b16 %v3949, %v3947
    %v4076 = vpack.c.b16 %v3950, %v3948
    %v4077 = vpack.c.b16 %v3953, %v3951
    %v4078 = vpack.c.b16 %v3954, %v3952
    %v4079 = vpack.c.b16 %v3957, %v3955
    %v4080 = vpack.c.b16 %v3958, %v3956
    %v4081 = vpack.c.b16 %v3961, %v3959
    %v4082 = vpack.c.b16 %v3962, %v3960
    %v4083 = vpack.c.b16 %v3965, %v3963
    %v4084 = vpack.c.b16 %v3966, %v3964
    %v4085 = vpack.c.b16 %v3969, %v3967
    %v4086 = vpack.c.b16 %v3970, %v3968
    %v4087 = vpack.c.b16 %v3973, %v3971
    %v4088 = vpack.c.b16 %v3974, %v3972
    %v4089 = vpack.c.b16 %v3977, %v3975
    %v4090 = vpack.c.b16 %v3978, %v3976
    %v4091 = vpack.c.b16 %v3981, %v3979
    %v4092 = vpack.c.b16 %v3982, %v3980
    %v4093 = vpack.c.b16 %v3985, %v3983
    %v4094 = vpack.c.b16 %v3986, %v3984
    %v4095 = vpack.c.b16 %v3989, %v3987
    %v4096 = vpack.c.b16 %v3990, %v3988
    %v4097 = vpack.c.b16 %v3993, %v3991
    %v4098 = vpack.c.b16 %v3994, %v3992
    %v4099 = vpack.c.b16 %v3997, %v3995
    %v4100 = vpack.c.b16 %v3998, %v3996
    %v4101 = vpack.c.b16 %v4001, %v3999
    %v4102 = vpack.c.b16 %v4002, %v4000
    %v4103 = vpack.c.b16 %v4005, %v4003
    %v4104 = vpack.c.b16 %v4006, %v4004
    %v4105 = vpack.c.b16 %v4009, %v4007
    %v4106 = vpack.c.b16 %v4010, %v4008
    %v4107 = vpack.c.b16 %v4013, %v4011
    %v4108 = vpack.c.b16 %v4014, %v4012
    %v4109 = vpack.c.b16 %v4017, %v4015
    %v4110 = vpack.c.b16 %v4018, %v4016
    %v4111 = vpack.c.b16 %v4021, %v4019
    %v4112 = vpack.c.b16 %v4022, %v4020
    %v4113 = vpack.c.b16 %v4025, %v4023
    %v4114 = vpack.c.b16 %v4026, %v4024
    %v4115 = vpack.c.b16 %v4029, %v4027
    %v4116 = vpack.c.b16 %v4030, %v4028
    %v4117 = vpack.c.b16 %v4033, %v4031
    %v4118 = vpack.c.b16 %v4034, %v4032
    %v4119 = vpack.c.b16 %v4037, %v4035
    %v4120 = vpack.c.b16 %v4038, %v4036
    %v4121 = vpack.c.b16 %v4041, %v4039
    %v4122 = vpack.c.b16 %v4042, %v4040
    %v4123 = vpack.c.b16 %v4045, %v4043
    %v4124 = vpack.c.b16 %v4046, %v4044
    %v4125 = vpack.c.b16 %v4049, %v4047
    %v4126 = vpack.c.b16 %v4050, %v4048
    %v4127 = vpack.c.b16 %v4053, %v4051
    %v4128 = vpack.c.b16 %v4054, %v4052
    %v4129 = vpack.c.b16 %v4057, %v4055
    %v4130 = vpack.c.b16 %v4058, %v4056
    %v4131 = vpack.c.b16 %v4061, %v4059
    %v4132 = vpack.c.b16 %v4062, %v4060
    %v4133 = vpack.c.b16 %v4065, %v4063
    %v4134 = vpack.c.b16 %v4066, %v4064
    %v4135 = vpack.c.b16 %v4069, %v4067
    %v4136 = vpack.c.b16 %v4070, %v4068
    %v4137 = vpack.c.b16 %v4073, %v4071
    %v4138 = vpack.c.b16 %v4074, %v4072
    %4203 = vmatprep.subr.bf16.mxu0 %v4076
    %4204 = vmatpush1.bf16.msra.mxu0 %v4075
    %4205 = vmatprep.subr.bf16.mxu0 %v4078
    %4206 = vmatpush1.bf16.msra.mxu0 %v4077
    %4207 = vmatprep.subr.bf16.mxu0 %v4080
    %4208 = vmatpush1.bf16.msra.mxu0 %v4079
    %4209 = vmatprep.subr.bf16.mxu0 %v4082
    %4210 = vmatpush1.bf16.msra.mxu0 %v4081
    %4211 = vmatprep.subr.bf16.mxu0 %v4084
    %4212 = vmatpush1.bf16.msra.mxu0 %v4083
    %4213 = vmatprep.subr.bf16.mxu0 %v4086
    %4214 = vmatpush1.bf16.msra.mxu0 %v4085
    %4215 = vmatprep.subr.bf16.mxu0 %v4088
    %4216 = vmatpush1.bf16.msra.mxu0 %v4087
    %4217 = vmatprep.subr.bf16.mxu0 %v4090
    %4218 = vmatpush1.bf16.msra.mxu0 %v4089
    %4219 = vmatprep.subr.bf16.mxu0 %v4092
    %4220 = vmatpush1.bf16.msra.mxu0 %v4091
    %4221 = vmatprep.subr.bf16.mxu0 %v4094
    %4222 = vmatpush1.bf16.msra.mxu0 %v4093
    %4223 = vmatprep.subr.bf16.mxu0 %v4096
    %4224 = vmatpush1.bf16.msra.mxu0 %v4095
    %4225 = vmatprep.subr.bf16.mxu0 %v4098
    %4226 = vmatpush1.bf16.msra.mxu0 %v4097
    %4227 = vmatprep.subr.bf16.mxu0 %v4100
    %4228 = vmatpush1.bf16.msra.mxu0 %v4099
    %4229 = vmatprep.subr.bf16.mxu0 %v4102
    %4230 = vmatpush1.bf16.msra.mxu0 %v4101
    %4231 = vmatprep.subr.bf16.mxu0 %v4104
    %4232 = vmatpush1.bf16.msra.mxu0 %v4103
    %4233 = vmatprep.subr.bf16.mxu0 %v4106
    %4234 = vmatpush1.bf16.msra.mxu0 %v4105
    %4235 = vmatprep.mubr.bf16.mxu0 %v3804
    %4236 = vmatmul.mubr.bf16.gmra.mrb[0].mxu0 %v3803
    %v4237 = vpop.f32.mrb[0].mxu0
    %v4238 = vadd.f32 %v3876, %v4237
    %v4239 = vpop.f32.mrb[0].mxu0
    %v4240 = vadd.f32 %v3880, %v4239
    %v4241 = vpop.f32.mrb[0].mxu0
    %v4242 = vpop.f32.mrb[0].mxu0
    %4243 = vdwg.mxu0
    %4244 = vmatprep.subr.bf16.mxu0 %v4108
    %4245 = vmatpush1.bf16.msra.mxu0 %v4107
    %4246 = vmatprep.subr.bf16.mxu0 %v4110
    %4247 = vmatpush1.bf16.msra.mxu0 %v4109
    %4248 = vmatprep.subr.bf16.mxu0 %v4112
    %4249 = vmatpush1.bf16.msra.mxu0 %v4111
    %4250 = vmatprep.subr.bf16.mxu0 %v4114
    %4251 = vmatpush1.bf16.msra.mxu0 %v4113
    %4252 = vmatprep.subr.bf16.mxu0 %v4116
    %4253 = vmatpush1.bf16.msra.mxu0 %v4115
    %4254 = vmatprep.subr.bf16.mxu0 %v4118
    %4255 = vmatpush1.bf16.msra.mxu0 %v4117
    %4256 = vmatprep.subr.bf16.mxu0 %v4120
    %4257 = vmatpush1.bf16.msra.mxu0 %v4119
    %4258 = vmatprep.subr.bf16.mxu0 %v4122
    %4259 = vmatpush1.bf16.msra.mxu0 %v4121
    %4260 = vmatprep.subr.bf16.mxu0 %v4124
    %4261 = vmatpush1.bf16.msra.mxu0 %v4123
    %4262 = vmatprep.subr.bf16.mxu0 %v4126
    %4263 = vmatpush1.bf16.msra.mxu0 %v4125
    %4264 = vmatprep.subr.bf16.mxu0 %v4128
    %4265 = vmatpush1.bf16.msra.mxu0 %v4127
    %4266 = vmatprep.subr.bf16.mxu0 %v4130
    %4267 = vmatpush1.bf16.msra.mxu0 %v4129
    %4268 = vmatprep.subr.bf16.mxu0 %v4132
    %4269 = vmatpush1.bf16.msra.mxu0 %v4131
    %4270 = vmatprep.subr.bf16.mxu0 %v4134
    %4271 = vmatpush1.bf16.msra.mxu0 %v4133
    %4272 = vmatprep.subr.bf16.mxu0 %v4136
    %4273 = vmatpush1.bf16.msra.mxu0 %v4135
    %4274 = vmatprep.subr.bf16.mxu0 %v4138
    %4275 = vmatpush1.bf16.msra.mxu0 %v4137
    %4276 = vmatprep.mubr.bf16.mxu0 %v3806
    %4277 = vmatmul.mubr.bf16.gmra.mrb[0].mxu0 %v3805
    %v4278 = vpop.f32.mrb[0].mxu0
    %v4279 = vadd.f32 %v4238, %v4278
    %v4280 = vpop.f32.mrb[0].mxu0
    %v4281 = vadd.f32 %v4240, %v4280
    %v4282 = vpop.f32.mrb[0].mxu0
    %v4283 = vpop.f32.mrb[0].mxu0
    %4284 = vdwg.mxu0
    %v4285 = vmul.f32 %v4279, 0.1
    %v4286 = vmul.f32 %v4281, 0.1
    %v4287 = vmax.f32 %v4279, %v4285
    %v4288 = vmax.f32 %v4281, %v4286
    %v4289 = vpack.c.bf16 %v4287, %v4287
    %v4290 = vpack.c.bf16 %v4288, %v4288
    %v4291 = vld [vmem:[#allocation20] sm:$0xf]
    %v4292 = vld [vmem:[#allocation20 + $0x4] sm:$0xf]
    %v4293 = vld [vmem:[#allocation20 + $0x8] sm:$0xf]
    %v4294 = vld [vmem:[#allocation20 + $0xc] sm:$0xf]
    %v4295 = vld [vmem:[#allocation20 + $0x10] sm:$0xf]
    %v4296 = vld [vmem:[#allocation20 + $0x14] sm:$0xf]
    %v4297 = vld [vmem:[#allocation20 + $0x18] sm:$0xf]
    %v4298 = vld [vmem:[#allocation20 + $0x1c] sm:$0xf]
    %v4299 = vld [vmem:[#allocation20 + $0x20] sm:$0xf]
    %v4300 = vld [vmem:[#allocation20 + $0x24] sm:$0xf]
    %v4301 = vld [vmem:[#allocation20 + $0x28] sm:$0xf]
    %v4302 = vld [vmem:[#allocation20 + $0x2c] sm:$0xf]
    %v4303 = vld [vmem:[#allocation20 + $0x30] sm:$0xf]
    %v4304 = vld [vmem:[#allocation20 + $0x34] sm:$0xf]
    %v4305 = vld [vmem:[#allocation20 + $0x38] sm:$0xf]
    %v4306 = vld [vmem:[#allocation20 + $0x3c] sm:$0xf]
    %v4307 = vld [vmem:[#allocation20 + $0x40] sm:$0xf]
    %v4308 = vld [vmem:[#allocation20 + $0x44] sm:$0xf]
    %v4309 = vld [vmem:[#allocation20 + $0x48] sm:$0xf]
    %v4310 = vld [vmem:[#allocation20 + $0x4c] sm:$0xf]
    %v4311 = vld [vmem:[#allocation20 + $0x50] sm:$0xf]
    %v4312 = vld [vmem:[#allocation20 + $0x54] sm:$0xf]
    %v4313 = vld [vmem:[#allocation20 + $0x58] sm:$0xf]
    %v4314 = vld [vmem:[#allocation20 + $0x5c] sm:$0xf]
    %v4315 = vld [vmem:[#allocation20 + $0x60] sm:$0xf]
    %v4316 = vld [vmem:[#allocation20 + $0x64] sm:$0xf]
    %v4317 = vld [vmem:[#allocation20 + $0x68] sm:$0xf]
    %v4318 = vld [vmem:[#allocation20 + $0x6c] sm:$0xf]
    %v4319 = vld [vmem:[#allocation20 + $0x70] sm:$0xf]
    %v4320 = vld [vmem:[#allocation20 + $0x74] sm:$0xf]
    %v4321 = vld [vmem:[#allocation20 + $0x78] sm:$0xf]
    %v4322 = vld [vmem:[#allocation20 + $0x7c] sm:$0xf]
    %v4323 = vld [vmem:[#allocation22] sm:$0x1]
    %v4325 = vlaneseq
    %v4326 = vshrl.u32 %v4325, 7
    %v4327 = vsub.s32 0, %v4326
    %v4328 = vrot.slane %v4323, %v4327
    %v4362 = vunpack.c.l.b16 %v4291
    %v4363 = vunpack.c.l.b16 %v4292
    %v4364 = vunpack.c.l.b16 %v4293
    %v4365 = vunpack.c.l.b16 %v4294
    %v4366 = vunpack.c.l.b16 %v4295
    %v4367 = vunpack.c.l.b16 %v4296
    %v4368 = vunpack.c.l.b16 %v4297
    %v4369 = vunpack.c.l.b16 %v4298
    %v4370 = vunpack.c.l.b16 %v4299
    %v4371 = vunpack.c.l.b16 %v4300
    %v4372 = vunpack.c.l.b16 %v4301
    %v4373 = vunpack.c.l.b16 %v4302
    %v4374 = vunpack.c.l.b16 %v4303
    %v4375 = vunpack.c.l.b16 %v4304
    %v4376 = vunpack.c.l.b16 %v4305
    %v4377 = vunpack.c.l.b16 %v4306
    %v4378 = vunpack.c.l.b16 %v4307
    %v4379 = vunpack.c.l.b16 %v4308
    %v4380 = vunpack.c.l.b16 %v4309
    %v4381 = vunpack.c.l.b16 %v4310
    %v4382 = vunpack.c.l.b16 %v4311
    %v4383 = vunpack.c.l.b16 %v4312
    %v4384 = vunpack.c.l.b16 %v4313
    %v4385 = vunpack.c.l.b16 %v4314
    %v4386 = vunpack.c.l.b16 %v4315
    %v4387 = vunpack.c.l.b16 %v4316
    %v4388 = vunpack.c.l.b16 %v4317
    %v4389 = vunpack.c.l.b16 %v4318
    %v4390 = vunpack.c.l.b16 %v4319
    %v4391 = vunpack.c.l.b16 %v4320
    %v4392 = vunpack.c.l.b16 %v4321
    %v4393 = vunpack.c.l.b16 %v4322
    %v4394 = vpack.c.b16 %v4363, %v4362
    %v4395 = vpack.c.b16 %v4365, %v4364
    %v4396 = vpack.c.b16 %v4367, %v4366
    %v4397 = vpack.c.b16 %v4369, %v4368
    %v4398 = vpack.c.b16 %v4371, %v4370
    %v4399 = vpack.c.b16 %v4373, %v4372
    %v4400 = vpack.c.b16 %v4375, %v4374
    %v4401 = vpack.c.b16 %v4377, %v4376
    %v4402 = vpack.c.b16 %v4379, %v4378
    %v4403 = vpack.c.b16 %v4381, %v4380
    %v4404 = vpack.c.b16 %v4383, %v4382
    %v4405 = vpack.c.b16 %v4385, %v4384
    %v4406 = vpack.c.b16 %v4387, %v4386
    %v4407 = vpack.c.b16 %v4389, %v4388
    %v4408 = vpack.c.b16 %v4391, %v4390
    %v4409 = vpack.c.b16 %v4393, %v4392
    %4426 = vmatprep.subr.bf16.mxu0 0
    %4427 = vmatpush1.bf16.msra.mxu0 %v4394
    %4428 = vmatprep.subr.bf16.mxu0 0
    %4429 = vmatpush1.bf16.msra.mxu0 %v4395
    %4430 = vmatprep.subr.bf16.mxu0 0
    %4431 = vmatpush1.bf16.msra.mxu0 %v4396
    %4432 = vmatprep.subr.bf16.mxu0 0
    %4433 = vmatpush1.bf16.msra.mxu0 %v4397
    %4434 = vmatprep.subr.bf16.mxu0 0
    %4435 = vmatpush1.bf16.msra.mxu0 %v4398
    %4436 = vmatprep.subr.bf16.mxu0 0
    %4437 = vmatpush1.bf16.msra.mxu0 %v4399
    %4438 = vmatprep.subr.bf16.mxu0 0
    %4439 = vmatpush1.bf16.msra.mxu0 %v4400
    %4440 = vmatprep.subr.bf16.mxu0 0
    %4441 = vmatpush1.bf16.msra.mxu0 %v4401
    %4442 = vmatprep.subr.bf16.mxu0 0
    %4443 = vmatpush1.bf16.msra.mxu0 %v4402
    %4444 = vmatprep.subr.bf16.mxu0 0
    %4445 = vmatpush1.bf16.msra.mxu0 %v4403
    %4446 = vmatprep.subr.bf16.mxu0 0
    %4447 = vmatpush1.bf16.msra.mxu0 %v4404
    %4448 = vmatprep.subr.bf16.mxu0 0
    %4449 = vmatpush1.bf16.msra.mxu0 %v4405
    %4450 = vmatprep.subr.bf16.mxu0 0
    %4451 = vmatpush1.bf16.msra.mxu0 %v4406
    %4452 = vmatprep.subr.bf16.mxu0 0
    %4453 = vmatpush1.bf16.msra.mxu0 %v4407
    %4454 = vmatprep.subr.bf16.mxu0 0
    %4455 = vmatpush1.bf16.msra.mxu0 %v4408
    %4456 = vmatprep.subr.bf16.mxu0 0
    %4457 = vmatpush1.bf16.msra.mxu0 %v4409
    %4458 = vmatprep.mubr.bf16.mxu0 %v4290
    %4459 = vmatmul.mubr.bf16.gmra.mrb[0].mxu0 %v4289
    %v4460 = vpop.f32.mrb[0].mxu0
    %v4461 = vadd.f32 %v4328, %v4460
    %v4462 = vpop.f32.mrb[0].mxu0
    %v4463 = vpop.f32.mrb[0].mxu0
    %v4464 = vpop.f32.mrb[0].mxu0
    %4465 = vdwg.mxu0
    %v4466 = vmul.f32 %v4461, 0.1
    %v4467 = vmax.f32 %v4461, %v4466
    %v4468 = vpack.c.bf16 %v4467, %v4467
    %v4469 = vld [vmem:[#allocation23] sm:$0xf]
    %v4470 = vld [vmem:[#allocation23 + $0x4] sm:$0xf]
    %v4471 = vld [vmem:[#allocation23 + $0x8] sm:$0xf]
    %v4472 = vld [vmem:[#allocation23 + $0xc] sm:$0xf]
    %v4473 = vld [vmem:[#allocation23 + $0x10] sm:$0xf]
    %v4474 = vld [vmem:[#allocation23 + $0x14] sm:$0xf]
    %v4475 = vld [vmem:[#allocation23 + $0x18] sm:$0xf]
    %v4476 = vld [vmem:[#allocation23 + $0x1c] sm:$0xf]
    %v4477 = vld [vmem:[#allocation23 + $0x20] sm:$0xf]
    %v4478 = vld [vmem:[#allocation23 + $0x24] sm:$0xf]
    %v4479 = vld [vmem:[#allocation23 + $0x28] sm:$0xf]
    %v4480 = vld [vmem:[#allocation23 + $0x2c] sm:$0xf]
    %v4481 = vld [vmem:[#allocation23 + $0x30] sm:$0xf]
    %v4482 = vld [vmem:[#allocation23 + $0x34] sm:$0xf]
    %v4483 = vld [vmem:[#allocation23 + $0x38] sm:$0xf]
    %v4484 = vld [vmem:[#allocation23 + $0x3c] sm:$0xf]
    %v4485 = vld [vmem:[#allocation25] sm:$0x1]
    %v4487 = vlaneseq
    %v4488 = vshrl.u32 %v4487, 7
    %v4489 = vsub.s32 0, %v4488
    %v4490 = vrot.slane %v4485, %v4489
    %v4508 = vunpack.c.l.b16 %v4469
    %v4509 = vunpack.c.l.b16 %v4470
    %v4510 = vunpack.c.l.b16 %v4471
    %v4511 = vunpack.c.l.b16 %v4472
    %v4512 = vunpack.c.l.b16 %v4473
    %v4513 = vunpack.c.l.b16 %v4474
    %v4514 = vunpack.c.l.b16 %v4475
    %v4515 = vunpack.c.l.b16 %v4476
    %v4516 = vunpack.c.l.b16 %v4477
    %v4517 = vunpack.c.l.b16 %v4478
    %v4518 = vunpack.c.l.b16 %v4479
    %v4519 = vunpack.c.l.b16 %v4480
    %v4520 = vunpack.c.l.b16 %v4481
    %v4521 = vunpack.c.l.b16 %v4482
    %v4522 = vunpack.c.l.b16 %v4483
    %v4523 = vunpack.c.l.b16 %v4484
    %v4524 = vpack.c.b16 %v4509, %v4508
    %v4525 = vpack.c.b16 %v4511, %v4510
    %v4526 = vpack.c.b16 %v4513, %v4512
    %v4527 = vpack.c.b16 %v4515, %v4514
    %v4528 = vpack.c.b16 %v4517, %v4516
    %v4529 = vpack.c.b16 %v4519, %v4518
    %v4530 = vpack.c.b16 %v4521, %v4520
    %v4531 = vpack.c.b16 %v4523, %v4522
    %4540 = vmatprep.subr.bf16.mxu0 0
    %4541 = vmatpush1.bf16.msra.mxu0 %v4524
    %4542 = vmatprep.subr.bf16.mxu0 0
    %4543 = vmatpush1.bf16.msra.mxu0 %v4525
    %4544 = vmatprep.subr.bf16.mxu0 0
    %4545 = vmatpush1.bf16.msra.mxu0 %v4526
    %4546 = vmatprep.subr.bf16.mxu0 0
    %4547 = vmatpush1.bf16.msra.mxu0 %v4527
    %4548 = vmatprep.subr.bf16.mxu0 0
    %4549 = vmatpush1.bf16.msra.mxu0 %v4528
    %4550 = vmatprep.subr.bf16.mxu0 0
    %4551 = vmatpush1.bf16.msra.mxu0 %v4529
    %4552 = vmatprep.subr.bf16.mxu0 0
    %4553 = vmatpush1.bf16.msra.mxu0 %v4530
    %4554 = vmatprep.subr.bf16.mxu0 0
    %4555 = vmatpush1.bf16.msra.mxu0 %v4531
    %4556 = vmatprep.subr.bf16.mxu0 0
    %4557 = vmatpush1.bf16.msra.mxu0 0
    %4558 = vmatprep.subr.bf16.mxu0 0
    %4559 = vmatpush1.bf16.msra.mxu0 0
    %4560 = vmatprep.subr.bf16.mxu0 0
    %4561 = vmatpush1.bf16.msra.mxu0 0
    %4562 = vmatprep.subr.bf16.mxu0 0
    %4563 = vmatpush1.bf16.msra.mxu0 0
    %4564 = vmatprep.subr.bf16.mxu0 0
    %4565 = vmatpush1.bf16.msra.mxu0 0
    %4566 = vmatprep.subr.bf16.mxu0 0
    %4567 = vmatpush1.bf16.msra.mxu0 0
    %4568 = vmatprep.subr.bf16.mxu0 0
    %4569 = vmatpush1.bf16.msra.mxu0 0
    %4570 = vmatprep.subr.bf16.mxu0 0
    %4571 = vmatpush1.bf16.msra.mxu0 0
    %4572 = vmatprep.mubr.bf16.mxu0 0
    %4573 = vmatmul.mubr.bf16.gmra.mrb[0].mxu0 %v4468
    %v4574 = vpop.f32.mrb[0].mxu0
    %v4575 = vadd.f32 %v4490, %v4574
    %v4576 = vpop.f32.mrb[0].mxu0
    %v4577 = vpop.f32.mrb[0].mxu0
    %v4578 = vpop.f32.mrb[0].mxu0
    %4579 = vdwg.mxu0
    %v4580 = vmul.f32 %v4575, 0.1
    %v4581 = vmax.f32 %v4575, %v4580
    %v4582 = vpack.c.bf16 %v4581, %v4581
    %v4583 = vld [vmem:[#allocation26] sm:$0xf]
    %v4584 = vld [vmem:[#allocation26 + $0x4] sm:$0xf]
    %v4585 = vld [vmem:[#allocation26 + $0x8] sm:$0xf]
    %v4586 = vld [vmem:[#allocation26 + $0xc] sm:$0xf]
    %v4587 = vld [vmem:[#allocation26 + $0x10] sm:$0xf]
    %v4588 = vld [vmem:[#allocation26 + $0x14] sm:$0xf]
    %v4589 = vld [vmem:[#allocation26 + $0x18] sm:$0xf]
    %v4590 = vld [vmem:[#allocation26 + $0x1c] sm:$0xf]
    %v4591 = vld [vmem:[#allocation26 + $0x20] sm:$0xf]
    %v4592 = vld [vmem:[#allocation26 + $0x24] sm:$0xf]
    %v4593 = vld [vmem:[#allocation26 + $0x28] sm:$0xf]
    %v4594 = vld [vmem:[#allocation26 + $0x2c] sm:$0xf]
    %v4595 = vld [vmem:[#allocation26 + $0x30] sm:$0xf]
    %v4596 = vld [vmem:[#allocation26 + $0x34] sm:$0xf]
    %v4597 = vld [vmem:[#allocation26 + $0x38] sm:$0xf]
    %v4598 = vld [vmem:[#allocation26 + $0x3c] sm:$0xf]
    %v4599 = vld [vmem:[#allocation28] sm:$0x1]
    %v4601 = vlaneseq
    %v4602 = vshrl.u32 %v4601, 7
    %v4603 = vsub.s32 0, %v4602
    %v4604 = vrot.slane %v4599, %v4603
    %v4622 = vunpack.c.l.b16 %v4583
    %v4623 = vunpack.c.l.b16 %v4584
    %v4624 = vunpack.c.l.b16 %v4585
    %v4625 = vunpack.c.l.b16 %v4586
    %v4626 = vunpack.c.l.b16 %v4587
    %v4627 = vunpack.c.l.b16 %v4588
    %v4628 = vunpack.c.l.b16 %v4589
    %v4629 = vunpack.c.l.b16 %v4590
    %v4630 = vunpack.c.l.b16 %v4591
    %v4631 = vunpack.c.l.b16 %v4592
    %v4632 = vunpack.c.l.b16 %v4593
    %v4633 = vunpack.c.l.b16 %v4594
    %v4634 = vunpack.c.l.b16 %v4595
    %v4635 = vunpack.c.l.b16 %v4596
    %v4636 = vunpack.c.l.b16 %v4597
    %v4637 = vunpack.c.l.b16 %v4598
    %v4638 = vpack.c.b16 %v4623, %v4622
    %v4639 = vpack.c.b16 %v4625, %v4624
    %v4640 = vpack.c.b16 %v4627, %v4626
    %v4641 = vpack.c.b16 %v4629, %v4628
    %v4642 = vpack.c.b16 %v4631, %v4630
    %v4643 = vpack.c.b16 %v4633, %v4632
    %v4644 = vpack.c.b16 %v4635, %v4634
    %v4645 = vpack.c.b16 %v4637, %v4636
    %4654 = vmatprep.subr.bf16.mxu0 0
    %4655 = vmatpush1.bf16.msra.mxu0 %v4638
    %4656 = vmatprep.subr.bf16.mxu0 0
    %4657 = vmatpush1.bf16.msra.mxu0 %v4639
    %4658 = vmatprep.subr.bf16.mxu0 0
    %4659 = vmatpush1.bf16.msra.mxu0 %v4640
    %4660 = vmatprep.subr.bf16.mxu0 0
    %4661 = vmatpush1.bf16.msra.mxu0 %v4641
    %4662 = vmatprep.subr.bf16.mxu0 0
    %4663 = vmatpush1.bf16.msra.mxu0 %v4642
    %4664 = vmatprep.subr.bf16.mxu0 0
    %4665 = vmatpush1.bf16.msra.mxu0 %v4643
    %4666 = vmatprep.subr.bf16.mxu0 0
    %4667 = vmatpush1.bf16.msra.mxu0 %v4644
    %4668 = vmatprep.subr.bf16.mxu0 0
    %4669 = vmatpush1.bf16.msra.mxu0 %v4645
    %4670 = vmatprep.subr.bf16.mxu0 0
    %4671 = vmatpush1.bf16.msra.mxu0 0
    %4672 = vmatprep.subr.bf16.mxu0 0
    %4673 = vmatpush1.bf16.msra.mxu0 0
    %4674 = vmatprep.subr.bf16.mxu0 0
    %4675 = vmatpush1.bf16.msra.mxu0 0
    %4676 = vmatprep.subr.bf16.mxu0 0
    %4677 = vmatpush1.bf16.msra.mxu0 0
    %4678 = vmatprep.subr.bf16.mxu0 0
    %4679 = vmatpush1.bf16.msra.mxu0 0
    %4680 = vmatprep.subr.bf16.mxu0 0
    %4681 = vmatpush1.bf16.msra.mxu0 0
    %4682 = vmatprep.subr.bf16.mxu0 0
    %4683 = vmatpush1.bf16.msra.mxu0 0
    %4684 = vmatprep.subr.bf16.mxu0 0
    %4685 = vmatpush1.bf16.msra.mxu0 0
    %4686 = vmatprep.mubr.bf16.mxu0 0
    %4687 = vmatmul.mubr.bf16.gmra.mrb[0].mxu0 %v4582
    %v4688 = vpop.f32.mrb[0].mxu0
    %v4689 = vadd.f32 %v4604, %v4688
    %v4690 = vpop.f32.mrb[0].mxu0
    %v4691 = vpop.f32.mrb[0].mxu0
    %v4692 = vpop.f32.mrb[0].mxu0
    %4693 = vdwg.mxu0
    %4694 = vst [vmem:[#allocation29] sm:$0xff] %v4689
    // Predicated region
    $region138: #{tpu_custom_call.1} parent=1 // pred_check
      _
    $region139: #{tpu_custom_call.1} parent=1 // pred_check_branch
      %4696 = sbr.rel (0) target = $region141
    $region140: #{tpu_custom_call.1} parent=1 // pred_region
      %s4698 = ssub.s32 128, 128
      %4699 = vsyncadd [#allocation4], %s4698
      %s4701 = sshll.u32 [#allocation29], 4
      %s4702 = int_to_ptr.vmem [resolvable:$true] %s4701
      %4704 = dma.vmem_to_hbm [thread:$0]  %s4702, 128, %s17, [#allocation4]
    $region141: #{tpu_custom_call.1} parent=1 // pred_fallthru
      _
    // Predicated region
    $region142: #{tpu_custom_call.1} parent=1 // pred_check
      _
    $region143: #{tpu_custom_call.1} parent=1 // pred_check_branch
      %4706 = sbr.rel (0) target = $region145
    $region144: #{tpu_custom_call.1} parent=1 // pred_region
      %4707 = dma.done [#allocation4], 128
    $region145: #{tpu_custom_call.1} parent=1 // pred_fallthru
      _
    %4708 = vsyncpa [#allocation3], 1
    %4709 = vsyncpa [#allocation6], 1
    %4710 = vsyncpa [#allocation9], 1
    %4711 = vsyncpa [#allocation12], 1
    %4712 = vsyncpa [#allocation15], 1
    %4713 = vsyncpa [#allocation18], 1
    %4714 = vsyncpa [#allocation21], 1
    %4715 = vsyncpa [#allocation24], 1
    %4716 = vsyncpa [#allocation27], 1
    %4717 = vsyncpa [#allocation4], 1

</llo_original>
